<compile_context>
chip_gen: v7x
topology: tpu7x:2x2x1
jax: 0.10.0
libtpu: 0.0.40
codegen_flags: <defaults>
</compile_context>

<pallas_src>
import functools

import jax
import jax.numpy as jnp
from jax.experimental import pallas as pl
from jax.experimental.pallas import tpu as pltpu

NUM_SPECIAL_TOKENS = 2


# --------------------------- hardware-aware helpers ------------------------ #
def _tensorcores_per_chip():
    """2 TensorCores on v7x (batch tiles feed megacore), 1 on v5e/v6e."""
    try:
        kind = (jax.devices()[0].device_kind or "").lower()
        if "v7" in kind or "7x" in kind:
            return 2
    except Exception:
        pass
    return 1


def _vmem_limit_bytes():
    """Raise the scoped-VMEM limit toward physical capacity (with headroom)."""
    try:
        info = pltpu.get_tpu_info()
        cap = getattr(info, "vmem_capacity_bytes", None)
        if cap:
            return int(min(max(cap - (16 << 20), 32 << 20), 100 << 20))
    except Exception:
        pass
    return None


def _compiler_params(dim_sem):
    kwargs = dict(dimension_semantics=dim_sem)
    limit = _vmem_limit_bytes()
    if limit is not None:
        kwargs["vmem_limit_bytes"] = limit
    return pltpu.CompilerParams(**kwargs)


def _choose_batch_tile(B, n_cores):
    """Whole batch on single-TC chips; exactly two tiles on v7x when legal.
    A batch tile must be a multiple of 8 (sublane) or the full batch."""
    if n_cores >= 2:
        half = B // 2
        if B % 2 == 0 and half >= 8 and half % 8 == 0:
            return half
    return B


def _choose_time_chunk(T, bt, din, hp, budget=8 << 20):
    """Timesteps per grid step: large enough to amortize the ~600-cycle
    grid-step overhead, small enough that the double-buffered bf16 x/out
    blocks stay within a modest VMEM budget."""
    per_t = 2 * 2 * bt * (din + hp)          # bf16, double-buffered, in + out
    return int(max(1, min(T, 32, budget // max(per_t, 1))))


def _round_up(x, m):
    return ((x + m - 1) // m) * m


# ---------------------------- weight packing -------------------------------- #
def _pack_gate_cols(w_t, H, Hp):
    """(Din, 4H) -> (Din, 4*Hp): gate k's columns land at [k*Hp, k*Hp + H).
    Padded gate lanes are zero, so padded hidden units remain exactly zero."""
    din = w_t.shape[0]
    out = jnp.zeros((din, 4 * Hp), w_t.dtype)
    for k in range(4):
        out = out.at[:, k * Hp:k * Hp + H].set(w_t[:, k * H:(k + 1) * H])
    return out


def _pad_rows(w, rows):
    return jnp.pad(w, ((0, rows - w.shape[0]), (0, 0)))


# ------------------------ fused LSTM-layer kernel --------------------------- #
def _lstm_layer_kernel(x_ref, wih_ref, whh_ref, b_ref,
                       out_ref, h_out_ref, c_out_ref,
                       h_sc, c_sc, *, hid_pad, chunk, seq_len):
    """grid = (batch_tiles [parallel], time_chunks [arbitrary]).

    x_ref   : (chunk, bt, Din)  bf16  layer input for this time chunk
    wih_ref : (Din, 4*Hp)       bf16  input->gates weights (gate-padded)
    whh_ref : (Hp, 4*Hp)        bf16  hidden->gates weights (gate-padded)
    b_ref   : (1, 4*Hp)         f32   b_ih + b_hh (gate-padded)
    out_ref : (chunk, bt, Hp)   bf16  per-step hidden output (next layer's x)
    h_out_ref, c_out_ref : (bt, Hp) f32 final states for this batch tile
    h_sc, c_sc           : (bt, Hp) f32 recurrent state carried across chunks
    """
    t = pl.program_id(1)
    Hp = hid_pad

    @pl.when(t == 0)
    def _init():
        h_sc[...] = jnp.zeros_like(h_sc)
        c_sc[...] = jnp.zeros_like(c_sc)

    bias = b_ref[...]                        # (1, 4Hp) f32, hoisted
    ragged = (seq_len % chunk) != 0          # static python bool

    def step(s, carry):
        h, c = carry                         # (bt, Hp) f32
        # Fused input projection + recurrence: both matmuls feed the MXU in
        # bf16 with f32 accumulation; gate math / state stay f32.
        gates = (
            jnp.dot(x_ref[s], wih_ref[...], preferred_element_type=jnp.float32)
            + jnp.dot(h.astype(jnp.bfloat16), whh_ref[...],
                      preferred_element_type=jnp.float32)
            + bias
        )                                    # (bt, 4Hp); slices lane-aligned
        i_g = jax.nn.sigmoid(gates[:, 0 * Hp:1 * Hp])
        f_g = jax.nn.sigmoid(gates[:, 1 * Hp:2 * Hp])
        g_g = jnp.tanh(gates[:, 2 * Hp:3 * Hp])
        o_g = jax.nn.sigmoid(gates[:, 3 * Hp:4 * Hp])
        c_new = f_g * c + i_g * g_g
        h_new = o_g * jnp.tanh(c_new)
        if ragged:                           # only emitted when T % chunk != 0
            valid = (t * chunk + s) < seq_len
            h_new = jnp.where(valid, h_new, h)
            c_new = jnp.where(valid, c_new, c)
        out_ref[s] = h_new.astype(out_ref.dtype)
        return h_new, c_new

    init = (h_sc[...], c_sc[...])
    try:
        h, c = jax.lax.fori_loop(0, chunk, step, init, unroll=min(8, chunk))
    except TypeError:                        # older jax without `unroll=`
        h, c = jax.lax.fori_loop(0, chunk, step, init)

    h_sc[...] = h
    c_sc[...] = c

    @pl.when(t == pl.num_programs(1) - 1)
    def _finish():
        h_out_ref[...] = h
        c_out_ref[...] = c


def lstm_layer_pallas(x_tbd, w_ih_t, w_hh_t, bias, *, seq_len, hid_pad,
                      time_chunk, batch_tile):
    """One fused LSTM layer.

    x_tbd : (Tp, B, Din) bf16 time-major (time already padded to Tp)
    w_ih_t: (Din, 4*Hp) bf16, w_hh_t: (Hp, 4*Hp) bf16, bias: (1, 4*Hp) f32
    returns (outs (Tp,B,Hp) bf16, h_final (B,Hp) f32, c_final (B,Hp) f32)
    """
    Tp, B, Din = x_tbd.shape
    Hp, G = hid_pad, 4 * hid_pad
    tc, bt = time_chunk, batch_tile
    nb, nt = B // bt, Tp // tc

    kernel = functools.partial(_lstm_layer_kernel, hid_pad=Hp, chunk=tc,
                               seq_len=seq_len)

    grid_spec = pltpu.PrefetchScalarGridSpec(
        num_scalar_prefetch=0,
        grid=(nb, nt),
        in_specs=[
            pl.BlockSpec((tc, bt, Din), lambda b, t: (t, b, 0)),
            # TODO(synk): for very large E/H on v7x (64 MiB VMEM), tile the G
            # axis and use pipeline_mode=pl.Buffered(1) on these constant-index
            # weight blocks to halve their VMEM footprint.
            pl.BlockSpec((Din, G), lambda b, t: (0, 0)),
            pl.BlockSpec((Hp, G), lambda b, t: (0, 0)),
            pl.BlockSpec((1, G), lambda b, t: (0, 0)),
        ],
        out_specs=[
            pl.BlockSpec((tc, bt, Hp), lambda b, t: (t, b, 0)),
            pl.BlockSpec((bt, Hp), lambda b, t: (b, 0)),
            pl.BlockSpec((bt, Hp), lambda b, t: (b, 0)),
        ],
        scratch_shapes=[
            pltpu.VMEM((bt, Hp), jnp.float32),
            pltpu.VMEM((bt, Hp), jnp.float32),
        ],
    )

    out_shapes = (
        jax.ShapeDtypeStruct((Tp, B, Hp), jnp.bfloat16),   # feeds next layer
        jax.ShapeDtypeStruct((B, Hp), jnp.float32),
        jax.ShapeDtypeStruct((B, Hp), jnp.float32),
    )
    return pl.pallas_call(
        kernel,
        out_shape=out_shapes,
        grid_spec=grid_spec,
        compiler_params=_compiler_params(("parallel", "arbitrary")),
    )(x_tbd, w_ih_t, w_hh_t, bias)


# -------------------------------- Encoder ---------------------------------- #
class EncoderPallas:
    """Mirrors: nn.Embedding(input_dim + 2, emb_dim);
    nn.LSTM(emb_dim, hid_dim, n_layers, batch_first=True) -> (hidden, cell)."""

    def __init__(self, input_dim, emb_dim, hid_dim, n_layers, key):
        vocab = input_dim + NUM_SPECIAL_TOKENS
        self.emb_dim = emb_dim
        self.hid_dim = hid_dim
        self.n_layers = n_layers
        self.hid_pad = _round_up(max(hid_dim, 1), 128)   # lane-align gates/stores

        keys = jax.random.split(key, 1 + 4 * n_layers)
        self.embedding = jax.random.normal(keys[0], (vocab, emb_dim), jnp.float32)

        bound = float(1.0 / (hid_dim ** 0.5))
        self.layers = []       # PyTorch-layout f32 weights (ground truth / reference)
        self._packed = []      # kernel-layout: bf16, transposed, gate-padded
        H, Hp = hid_dim, self.hid_pad
        for l in range(n_layers):
            in_dim = emb_dim if l == 0 else hid_dim
            kw = keys[1 + 4 * l: 1 + 4 * (l + 1)]
            w_ih = jax.random.uniform(kw[0], (4 * H, in_dim), jnp.float32, -bound, bound)
            w_hh = jax.random.uniform(kw[1], (4 * H, H), jnp.float32, -bound, bound)
            b_ih = jax.random.uniform(kw[2], (4 * H,), jnp.float32, -bound, bound)
            b_hh = jax.random.uniform(kw[3], (4 * H,), jnp.float32, -bound, bound)
            self.layers.append((w_ih, w_hh, b_ih, b_hh))

            # Transpose once; pad gate columns to Hp (each gate slice becomes a
            # multiple of 128 lanes); pad hidden-input rows to Hp for layers > 0
            # (the padded hidden units of the previous layer are exactly zero).
            wih_t = _pack_gate_cols(jnp.transpose(w_ih), H, Hp)
            if l > 0:
                wih_t = _pad_rows(wih_t, Hp)
            whh_t = _pad_rows(_pack_gate_cols(jnp.transpose(w_hh), H, Hp), Hp)
            bias = _pack_gate_cols((b_ih + b_hh)[None, :], H, Hp)     # (1,4Hp) f32
            self._packed.append((wih_t.astype(jnp.bfloat16),
                                 whh_t.astype(jnp.bfloat16),
                                 bias))

    def __call__(self, src):
        # src: (B, T) int32 token ids (batch_first, like the PyTorch input).
        B, T = src.shape
        H, Hp = self.hid_dim, self.hid_pad

        # Gather the embedding directly in TIME-MAJOR order (no (B,T,E)
        # transpose through HBM); bf16 activations feed the MXU.
        x = jnp.take(self.embedding, jnp.transpose(src), axis=0)      # (T, B, E)
        x = x.astype(jnp.bfloat16)

        n_cores = _tensorcores_per_chip()
        bt = _choose_batch_tile(B, n_cores)
        tc = _choose_time_chunk(T, bt, max(self.emb_dim, Hp), Hp)
        Tp = _round_up(T, tc)
        if Tp != T:       # pad time; padded steps are masked inside the kernel
            x = jnp.pad(x, ((0, Tp - T), (0, 0), (0, 0)))

        hiddens, cells = [], []
        for (wih_t, whh_t, bias) in self._packed:
            outs, h, c = lstm_layer_pallas(
                x, wih_t, whh_t, bias,
                seq_len=T, hid_pad=Hp, time_chunk=tc, batch_tile=bt)
            hiddens.append(h[:, :H])
            cells.append(c[:, :H])
            x = outs                              # (Tp, B, Hp) bf16 -> next layer
        hidden = jnp.stack(hiddens, axis=0)       # (n_layers, B, H)
        cell = jnp.stack(cells, axis=0)           # (n_layers, B, H)
        return hidden, cell


# ---------------------------- pure-JAX reference ---------------------------- #
def _reference_encoder(enc, src):
    embedded = jnp.take(enc.embedding, src, axis=0)
    x = jnp.transpose(embedded, (1, 0, 2))        # (T, B, E)
    H = enc.hid_dim
    hiddens, cells = [], []
    for (w_ih, w_hh, b_ih, b_hh) in enc.layers:
        B = x.shape[1]
        h0 = jnp.zeros((B, H), jnp.float32)
        c0 = jnp.zeros((B, H), jnp.float32)

        def step(carry, x_t, w_ih=w_ih, w_hh=w_hh, b_ih=b_ih, b_hh=b_hh):
            h, c = carry
            gates = x_t @ w_ih.T + h @ w_hh.T + b_ih + b_hh
            i = jax.nn.sigmoid(gates[:, 0 * H:1 * H])
            f = jax.nn.sigmoid(gates[:, 1 * H:2 * H])
            g = jnp.tanh(gates[:, 2 * H:3 * H])
            o = jax.nn.sigmoid(gates[:, 3 * H:4 * H])
            c_new = f * c + i * g
            h_new = o * jnp.tanh(c_new)
            return (h_new, c_new), h_new

        (h, c), outs = jax.lax.scan(step, (h0, c0), x)
        hiddens.append(h)
        cells.append(c)
        x = outs
    return jnp.stack(hiddens, 0), jnp.stack(cells, 0)


if __name__ == "__main__":
    # Small shapes: vocab input_dim=10 (+2 special), emb=32, hid=32, 2 layers,
    # batch=2, seq=8.
    key = jax.random.PRNGKey(0)
    k_params, k_src = jax.random.split(key)

    input_dim, emb_dim, hid_dim, n_layers = 10, 32, 32, 2
    B, T = 2, 8

    enc = EncoderPallas(input_dim, emb_dim, hid_dim, n_layers, k_params)
    src = jax.random.randint(k_src, (B, T), 0, input_dim + NUM_SPECIAL_TOKENS,
                             dtype=jnp.int32)

    hidden, cell = enc(src)
    jax.block_until_ready((hidden, cell))

    # sanity-check against the f32 pure-JAX reference (kernel uses bf16 matmul
    # operands, so the tolerance is loosened accordingly).
    h_ref, c_ref = _reference_encoder(enc, src)
    assert hidden.shape == (n_layers, B, hid_dim)
    assert cell.shape == (n_layers, B, hid_dim)
    assert jnp.allclose(hidden, h_ref, atol=5e-2), "hidden mismatch vs reference"
    assert jnp.allclose(cell, c_ref, atol=5e-2), "cell mismatch vs reference"

    print("KERNEL_OK")
</pallas_src>

<mosaic_0001>
module attributes {stable_mosaic.version = 11 : i64} {
  func.func @_lstm_layer_kernel(%arg0: i32, %arg1: i32, %arg2: memref<8x2x32xbf16, #tpu.memory_space<vmem>>, %arg3: memref<32x512xbf16, #tpu.memory_space<vmem>>, %arg4: memref<128x512xbf16, #tpu.memory_space<vmem>>, %arg5: memref<1x512xf32, #tpu.memory_space<vmem>>, %arg6: memref<8x2x128xbf16, #tpu.memory_space<vmem>>, %arg7: memref<2x128xf32, #tpu.memory_space<vmem>>, %arg8: memref<2x128xf32, #tpu.memory_space<vmem>>, %arg9: memref<2x128xf32, #tpu.memory_space<vmem>>, %arg10: memref<2x128xf32, #tpu.memory_space<vmem>>) attributes {dimension_semantics = [#tpu.dimension_semantics<parallel>, #tpu.dimension_semantics<arbitrary>], iteration_bounds = array<i64: 1, 1>, scalar_prefetch = 0 : i64, scratch_operands = 2 : i64, tpu.core_type = #tpu.core_type<tc>, window_params = [{transform_indices = @transform_0, window_bounds = array<i64: 8, 2, 32>}, {pipeline_mode = #tpu.pipeline_mode<synchronous>, transform_indices = @transform_1, window_bounds = array<i64: 32, 512>}, {pipeline_mode = #tpu.pipeline_mode<synchronous>, transform_indices = @transform_2, window_bounds = array<i64: 128, 512>}, {pipeline_mode = #tpu.pipeline_mode<synchronous>, transform_indices = @transform_3, window_bounds = array<i64: 1, 512>}, {transform_indices = @transform_4, window_bounds = array<i64: 8, 2, 128>}, {transform_indices = @transform_5, window_bounds = array<i64: 2, 128>}, {transform_indices = @transform_6, window_bounds = array<i64: 2, 128>}]} {
    %c0_i32 = arith.constant 0 : i32
    %0 = arith.cmpi eq, %arg1, %c0_i32 : i32
    %1 = arith.extui %0 : i1 to i32
    %c0_i32_0 = arith.constant 0 : i32
    %2 = arith.cmpi ne, %1, %c0_i32_0 : i32
    scf.if %2 {
      %cst_116 = arith.constant 0.000000e+00 : f32
      %339 = vector.broadcast %cst_116 : f32 to vector<2x128xf32>
      %c0_117 = arith.constant 0 : index
      %c0_118 = arith.constant 0 : index
      %340 = vector.load %arg9[%c0_117, %c0_118] : memref<2x128xf32, #tpu.memory_space<vmem>>, vector<2x128xf32>
      tpu.vector_store %arg9[%c0_117, %c0_118], %339 {strides = array<i32>} : memref<2x128xf32, #tpu.memory_space<vmem>>, vector<2x128xf32>,
      %cst_119 = arith.constant 0.000000e+00 : f32
      %341 = vector.broadcast %cst_119 : f32 to vector<2x128xf32>
      %c0_120 = arith.constant 0 : index
      %c0_121 = arith.constant 0 : index
      %342 = vector.load %arg10[%c0_120, %c0_121] : memref<2x128xf32, #tpu.memory_space<vmem>>, vector<2x128xf32>
      tpu.vector_store %arg10[%c0_120, %c0_121], %341 {strides = array<i32>} : memref<2x128xf32, #tpu.memory_space<vmem>>, vector<2x128xf32>,
    } else {
    }
    %c0 = arith.constant 0 : index
    %c0_1 = arith.constant 0 : index
    %3 = vector.load %arg5[%c0, %c0_1] : memref<1x512xf32, #tpu.memory_space<vmem>>, vector<1x512xf32>
    %c0_2 = arith.constant 0 : index
    %c0_3 = arith.constant 0 : index
    %4 = vector.load %arg9[%c0_2, %c0_3] : memref<2x128xf32, #tpu.memory_space<vmem>>, vector<2x128xf32>
    %c0_4 = arith.constant 0 : index
    %c0_5 = arith.constant 0 : index
    %5 = vector.load %arg10[%c0_4, %c0_5] : memref<2x128xf32, #tpu.memory_space<vmem>>, vector<2x128xf32>
    %c0_i32_6 = arith.constant 0 : i32
    %6 = arith.index_cast %c0_i32_6 : i32 to index
    %c0_7 = arith.constant 0 : index
    %c0_8 = arith.constant 0 : index
    %7 = vector.load %arg2[%6, %c0_7, %c0_8] : memref<8x2x32xbf16, #tpu.memory_space<vmem>>, vector<1x2x32xbf16>
    %8 = vector.shape_cast %7 : vector<1x2x32xbf16> to vector<2x32xbf16>
    %c0_9 = arith.constant 0 : index
    %c0_10 = arith.constant 0 : index
    %9 = vector.load %arg3[%c0_9, %c0_10] : memref<32x512xbf16, #tpu.memory_space<vmem>>, vector<32x512xbf16>
    %cst = arith.constant dense<0.000000e+00> : vector<2x512xf32>
    %10 = tpu.matmul %8, %9, %cst {dimension_numbers = #tpu.dot_dimension_numbers<[1], [0], [0], [1], [0, 0, 1, 1], [], []>} : vector<2x32xbf16>, vector<32x512xbf16>, vector<2x512xf32> -> vector<2x512xf32>
    %11 = arith.truncf %4 : vector<2x128xf32> to vector<2x128xbf16>
    %c0_11 = arith.constant 0 : index
    %c0_12 = arith.constant 0 : index
    %12 = vector.load %arg4[%c0_11, %c0_12] : memref<128x512xbf16, #tpu.memory_space<vmem>>, vector<128x512xbf16>
    %cst_13 = arith.constant dense<0.000000e+00> : vector<2x512xf32>
    %13 = tpu.matmul %11, %12, %cst_13 {dimension_numbers = #tpu.dot_dimension_numbers<[1], [0], [0], [1], [0, 0, 1, 1], [], []>} : vector<2x128xbf16>, vector<128x512xbf16>, vector<2x512xf32> -> vector<2x512xf32>
    %14 = arith.addf %10, %13 : vector<2x512xf32>
    %15 = vector.broadcast %3 : vector<1x512xf32> to vector<2x512xf32>
    %16 = arith.addf %14, %15 : vector<2x512xf32>
    %17 = vector.extract_strided_slice %16 {offsets = [0, 0], sizes = [2, 128], strides = [1, 1]} : vector<2x512xf32> to vector<2x128xf32>
    %18 = arith.negf %17 : vector<2x128xf32>
    %19 = math.exp %18 : vector<2x128xf32>
    %cst_14 = arith.constant 1.000000e+00 : f32
    %20 = vector.broadcast %cst_14 : f32 to vector<2x128xf32>
    %21 = arith.addf %20, %19 : vector<2x128xf32>
    %22 = arith.divf %20, %21 : vector<2x128xf32>
    %23 = vector.extract_strided_slice %16 {offsets = [0, 128], sizes = [2, 128], strides = [1, 1]} : vector<2x512xf32> to vector<2x128xf32>
    %24 = arith.negf %23 : vector<2x128xf32>
    %25 = math.exp %24 : vector<2x128xf32>
    %cst_15 = arith.constant 1.000000e+00 : f32
    %26 = vector.broadcast %cst_15 : f32 to vector<2x128xf32>
    %27 = arith.addf %26, %25 : vector<2x128xf32>
    %28 = arith.divf %26, %27 : vector<2x128xf32>
    %29 = vector.extract_strided_slice %16 {offsets = [0, 256], sizes = [2, 128], strides = [1, 1]} : vector<2x512xf32> to vector<2x128xf32>
    %30 = math.tanh %29 : vector<2x128xf32>
    %31 = vector.extract_strided_slice %16 {offsets = [0, 384], sizes = [2, 128], strides = [1, 1]} : vector<2x512xf32> to vector<2x128xf32>
    %32 = arith.negf %31 : vector<2x128xf32>
    %33 = math.exp %32 : vector<2x128xf32>
    %cst_16 = arith.constant 1.000000e+00 : f32
    %34 = vector.broadcast %cst_16 : f32 to vector<2x128xf32>
    %35 = arith.addf %34, %33 : vector<2x128xf32>
    %36 = arith.divf %34, %35 : vector<2x128xf32>
    %37 = arith.mulf %28, %5 : vector<2x128xf32>
    %38 = arith.mulf %22, %30 : vector<2x128xf32>
    %39 = arith.addf %37, %38 : vector<2x128xf32>
    %40 = math.tanh %39 : vector<2x128xf32>
    %41 = arith.mulf %36, %40 : vector<2x128xf32>
    %42 = arith.truncf %41 : vector<2x128xf32> to vector<2x128xbf16>
    %43 = arith.index_cast %c0_i32_6 : i32 to index
    %c0_17 = arith.constant 0 : index
    %c0_18 = arith.constant 0 : index
    %44 = vector.load %arg6[%43, %c0_17, %c0_18] : memref<8x2x128xbf16, #tpu.memory_space<vmem>>, vector<1x2x128xbf16>
    %45 = vector.shape_cast %44 : vector<1x2x128xbf16> to vector<2x128xbf16>
    %46 = vector.shape_cast %42 : vector<2x128xbf16> to vector<1x2x128xbf16>
    tpu.vector_store %arg6[%43, %c0_17, %c0_18], %46 {strides = array<i32>} : memref<8x2x128xbf16, #tpu.memory_space<vmem>>, vector<1x2x128xbf16>,
    %c1_i32 = arith.constant 1 : i32
    %47 = arith.index_cast %c1_i32 : i32 to index
    %c0_19 = arith.constant 0 : index
    %c0_20 = arith.constant 0 : index
    %48 = vector.load %arg2[%47, %c0_19, %c0_20] : memref<8x2x32xbf16, #tpu.memory_space<vmem>>, vector<1x2x32xbf16>
    %49 = vector.shape_cast %48 : vector<1x2x32xbf16> to vector<2x32xbf16>
    %c0_21 = arith.constant 0 : index
    %c0_22 = arith.constant 0 : index
    %50 = vector.load %arg3[%c0_21, %c0_22] : memref<32x512xbf16, #tpu.memory_space<vmem>>, vector<32x512xbf16>
    %cst_23 = arith.constant dense<0.000000e+00> : vector<2x512xf32>
    %51 = tpu.matmul %49, %50, %cst_23 {dimension_numbers = #tpu.dot_dimension_numbers<[1], [0], [0], [1], [0, 0, 1, 1], [], []>} : vector<2x32xbf16>, vector<32x512xbf16>, vector<2x512xf32> -> vector<2x512xf32>
    %52 = arith.truncf %41 : vector<2x128xf32> to vector<2x128xbf16>
    %c0_24 = arith.constant 0 : index
    %c0_25 = arith.constant 0 : index
    %53 = vector.load %arg4[%c0_24, %c0_25] : memref<128x512xbf16, #tpu.memory_space<vmem>>, vector<128x512xbf16>
    %cst_26 = arith.constant dense<0.000000e+00> : vector<2x512xf32>
    %54 = tpu.matmul %52, %53, %cst_26 {dimension_numbers = #tpu.dot_dimension_numbers<[1], [0], [0], [1], [0, 0, 1, 1], [], []>} : vector<2x128xbf16>, vector<128x512xbf16>, vector<2x512xf32> -> vector<2x512xf32>
    %55 = arith.addf %51, %54 : vector<2x512xf32>
    %56 = vector.broadcast %3 : vector<1x512xf32> to vector<2x512xf32>
    %57 = arith.addf %55, %56 : vector<2x512xf32>
    %58 = vector.extract_strided_slice %57 {offsets = [0, 0], sizes = [2, 128], strides = [1, 1]} : vector<2x512xf32> to vector<2x128xf32>
    %59 = arith.negf %58 : vector<2x128xf32>
    %60 = math.exp %59 : vector<2x128xf32>
    %cst_27 = arith.constant 1.000000e+00 : f32
    %61 = vector.broadcast %cst_27 : f32 to vector<2x128xf32>
    %62 = arith.addf %61, %60 : vector<2x128xf32>
    %63 = arith.divf %61, %62 : vector<2x128xf32>
    %64 = vector.extract_strided_slice %57 {offsets = [0, 128], sizes = [2, 128], strides = [1, 1]} : vector<2x512xf32> to vector<2x128xf32>
    %65 = arith.negf %64 : vector<2x128xf32>
    %66 = math.exp %65 : vector<2x128xf32>
    %cst_28 = arith.constant 1.000000e+00 : f32
    %67 = vector.broadcast %cst_28 : f32 to vector<2x128xf32>
    %68 = arith.addf %67, %66 : vector<2x128xf32>
    %69 = arith.divf %67, %68 : vector<2x128xf32>
    %70 = vector.extract_strided_slice %57 {offsets = [0, 256], sizes = [2, 128], strides = [1, 1]} : vector<2x512xf32> to vector<2x128xf32>
    %71 = math.tanh %70 : vector<2x128xf32>
    %72 = vector.extract_strided_slice %57 {offsets = [0, 384], sizes = [2, 128], strides = [1, 1]} : vector<2x512xf32> to vector<2x128xf32>
    %73 = arith.negf %72 : vector<2x128xf32>
    %74 = math.exp %73 : vector<2x128xf32>
    %cst_29 = arith.constant 1.000000e+00 : f32
    %75 = vector.broadcast %cst_29 : f32 to vector<2x128xf32>
    %76 = arith.addf %75, %74 : vector<2x128xf32>
    %77 = arith.divf %75, %76 : vector<2x128xf32>
    %78 = arith.mulf %69, %39 : vector<2x128xf32>
    %79 = arith.mulf %63, %71 : vector<2x128xf32>
    %80 = arith.addf %78, %79 : vector<2x128xf32>
    %81 = math.tanh %80 : vector<2x128xf32>
    %82 = arith.mulf %77, %81 : vector<2x128xf32>
    %83 = arith.truncf %82 : vector<2x128xf32> to vector<2x128xbf16>
    %84 = arith.index_cast %c1_i32 : i32 to index
    %c0_30 = arith.constant 0 : index
    %c0_31 = arith.constant 0 : index
    %85 = vector.load %arg6[%84, %c0_30, %c0_31] : memref<8x2x128xbf16, #tpu.memory_space<vmem>>, vector<1x2x128xbf16>
    %86 = vector.shape_cast %85 : vector<1x2x128xbf16> to vector<2x128xbf16>
    %87 = vector.shape_cast %83 : vector<2x128xbf16> to vector<1x2x128xbf16>
    tpu.vector_store %arg6[%84, %c0_30, %c0_31], %87 {strides = array<i32>} : memref<8x2x128xbf16, #tpu.memory_space<vmem>>, vector<1x2x128xbf16>,
    %c2_i32 = arith.constant 2 : i32
    %88 = arith.index_cast %c2_i32 : i32 to index
    %c0_32 = arith.constant 0 : index
    %c0_33 = arith.constant 0 : index
    %89 = vector.load %arg2[%88, %c0_32, %c0_33] : memref<8x2x32xbf16, #tpu.memory_space<vmem>>, vector<1x2x32xbf16>
    %90 = vector.shape_cast %89 : vector<1x2x32xbf16> to vector<2x32xbf16>
    %c0_34 = arith.constant 0 : index
    %c0_35 = arith.constant 0 : index
    %91 = vector.load %arg3[%c0_34, %c0_35] : memref<32x512xbf16, #tpu.memory_space<vmem>>, vector<32x512xbf16>
    %cst_36 = arith.constant dense<0.000000e+00> : vector<2x512xf32>
    %92 = tpu.matmul %90, %91, %cst_36 {dimension_numbers = #tpu.dot_dimension_numbers<[1], [0], [0], [1], [0, 0, 1, 1], [], []>} : vector<2x32xbf16>, vector<32x512xbf16>, vector<2x512xf32> -> vector<2x512xf32>
    %93 = arith.truncf %82 : vector<2x128xf32> to vector<2x128xbf16>
    %c0_37 = arith.constant 0 : index
    %c0_38 = arith.constant 0 : index
    %94 = vector.load %arg4[%c0_37, %c0_38] : memref<128x512xbf16, #tpu.memory_space<vmem>>, vector<128x512xbf16>
    %cst_39 = arith.constant dense<0.000000e+00> : vector<2x512xf32>
    %95 = tpu.matmul %93, %94, %cst_39 {dimension_numbers = #tpu.dot_dimension_numbers<[1], [0], [0], [1], [0, 0, 1, 1], [], []>} : vector<2x128xbf16>, vector<128x512xbf16>, vector<2x512xf32> -> vector<2x512xf32>
    %96 = arith.addf %92, %95 : vector<2x512xf32>
    %97 = vector.broadcast %3 : vector<1x512xf32> to vector<2x512xf32>
    %98 = arith.addf %96, %97 : vector<2x512xf32>
    %99 = vector.extract_strided_slice %98 {offsets = [0, 0], sizes = [2, 128], strides = [1, 1]} : vector<2x512xf32> to vector<2x128xf32>
    %100 = arith.negf %99 : vector<2x128xf32>
    %101 = math.exp %100 : vector<2x128xf32>
    %cst_40 = arith.constant 1.000000e+00 : f32
    %102 = vector.broadcast %cst_40 : f32 to vector<2x128xf32>
    %103 = arith.addf %102, %101 : vector<2x128xf32>
    %104 = arith.divf %102, %103 : vector<2x128xf32>
    %105 = vector.extract_strided_slice %98 {offsets = [0, 128], sizes = [2, 128], strides = [1, 1]} : vector<2x512xf32> to vector<2x128xf32>
    %106 = arith.negf %105 : vector<2x128xf32>
    %107 = math.exp %106 : vector<2x128xf32>
    %cst_41 = arith.constant 1.000000e+00 : f32
    %108 = vector.broadcast %cst_41 : f32 to vector<2x128xf32>
    %109 = arith.addf %108, %107 : vector<2x128xf32>
    %110 = arith.divf %108, %109 : vector<2x128xf32>
    %111 = vector.extract_strided_slice %98 {offsets = [0, 256], sizes = [2, 128], strides = [1, 1]} : vector<2x512xf32> to vector<2x128xf32>
    %112 = math.tanh %111 : vector<2x128xf32>
    %113 = vector.extract_strided_slice %98 {offsets = [0, 384], sizes = [2, 128], strides = [1, 1]} : vector<2x512xf32> to vector<2x128xf32>
    %114 = arith.negf %113 : vector<2x128xf32>
    %115 = math.exp %114 : vector<2x128xf32>
    %cst_42 = arith.constant 1.000000e+00 : f32
    %116 = vector.broadcast %cst_42 : f32 to vector<2x128xf32>
    %117 = arith.addf %116, %115 : vector<2x128xf32>
    %118 = arith.divf %116, %117 : vector<2x128xf32>
    %119 = arith.mulf %110, %80 : vector<2x128xf32>
    %120 = arith.mulf %104, %112 : vector<2x128xf32>
    %121 = arith.addf %119, %120 : vector<2x128xf32>
    %122 = math.tanh %121 : vector<2x128xf32>
    %123 = arith.mulf %118, %122 : vector<2x128xf32>
    %124 = arith.truncf %123 : vector<2x128xf32> to vector<2x128xbf16>
    %125 = arith.index_cast %c2_i32 : i32 to index
    %c0_43 = arith.constant 0 : index
    %c0_44 = arith.constant 0 : index
    %126 = vector.load %arg6[%125, %c0_43, %c0_44] : memref<8x2x128xbf16, #tpu.memory_space<vmem>>, vector<1x2x128xbf16>
    %127 = vector.shape_cast %126 : vector<1x2x128xbf16> to vector<2x128xbf16>
    %128 = vector.shape_cast %124 : vector<2x128xbf16> to vector<1x2x128xbf16>
    tpu.vector_store %arg6[%125, %c0_43, %c0_44], %128 {strides = array<i32>} : memref<8x2x128xbf16, #tpu.memory_space<vmem>>, vector<1x2x128xbf16>,
    %c3_i32 = arith.constant 3 : i32
    %129 = arith.index_cast %c3_i32 : i32 to index
    %c0_45 = arith.constant 0 : index
    %c0_46 = arith.constant 0 : index
    %130 = vector.load %arg2[%129, %c0_45, %c0_46] : memref<8x2x32xbf16, #tpu.memory_space<vmem>>, vector<1x2x32xbf16>
    %131 = vector.shape_cast %130 : vector<1x2x32xbf16> to vector<2x32xbf16>
    %c0_47 = arith.constant 0 : index
    %c0_48 = arith.constant 0 : index
    %132 = vector.load %arg3[%c0_47, %c0_48] : memref<32x512xbf16, #tpu.memory_space<vmem>>, vector<32x512xbf16>
    %cst_49 = arith.constant dense<0.000000e+00> : vector<2x512xf32>
    %133 = tpu.matmul %131, %132, %cst_49 {dimension_numbers = #tpu.dot_dimension_numbers<[1], [0], [0], [1], [0, 0, 1, 1], [], []>} : vector<2x32xbf16>, vector<32x512xbf16>, vector<2x512xf32> -> vector<2x512xf32>
    %134 = arith.truncf %123 : vector<2x128xf32> to vector<2x128xbf16>
    %c0_50 = arith.constant 0 : index
    %c0_51 = arith.constant 0 : index
    %135 = vector.load %arg4[%c0_50, %c0_51] : memref<128x512xbf16, #tpu.memory_space<vmem>>, vector<128x512xbf16>
    %cst_52 = arith.constant dense<0.000000e+00> : vector<2x512xf32>
    %136 = tpu.matmul %134, %135, %cst_52 {dimension_numbers = #tpu.dot_dimension_numbers<[1], [0], [0], [1], [0, 0, 1, 1], [], []>} : vector<2x128xbf16>, vector<128x512xbf16>, vector<2x512xf32> -> vector<2x512xf32>
    %137 = arith.addf %133, %136 : vector<2x512xf32>
    %138 = vector.broadcast %3 : vector<1x512xf32> to vector<2x512xf32>
    %139 = arith.addf %137, %138 : vector<2x512xf32>
    %140 = vector.extract_strided_slice %139 {offsets = [0, 0], sizes = [2, 128], strides = [1, 1]} : vector<2x512xf32> to vector<2x128xf32>
    %141 = arith.negf %140 : vector<2x128xf32>
    %142 = math.exp %141 : vector<2x128xf32>
    %cst_53 = arith.constant 1.000000e+00 : f32
    %143 = vector.broadcast %cst_53 : f32 to vector<2x128xf32>
    %144 = arith.addf %143, %142 : vector<2x128xf32>
    %145 = arith.divf %143, %144 : vector<2x128xf32>
    %146 = vector.extract_strided_slice %139 {offsets = [0, 128], sizes = [2, 128], strides = [1, 1]} : vector<2x512xf32> to vector<2x128xf32>
    %147 = arith.negf %146 : vector<2x128xf32>
    %148 = math.exp %147 : vector<2x128xf32>
    %cst_54 = arith.constant 1.000000e+00 : f32
    %149 = vector.broadcast %cst_54 : f32 to vector<2x128xf32>
    %150 = arith.addf %149, %148 : vector<2x128xf32>
    %151 = arith.divf %149, %150 : vector<2x128xf32>
    %152 = vector.extract_strided_slice %139 {offsets = [0, 256], sizes = [2, 128], strides = [1, 1]} : vector<2x512xf32> to vector<2x128xf32>
    %153 = math.tanh %152 : vector<2x128xf32>
    %154 = vector.extract_strided_slice %139 {offsets = [0, 384], sizes = [2, 128], strides = [1, 1]} : vector<2x512xf32> to vector<2x128xf32>
    %155 = arith.negf %154 : vector<2x128xf32>
    %156 = math.exp %155 : vector<2x128xf32>
    %cst_55 = arith.constant 1.000000e+00 : f32
    %157 = vector.broadcast %cst_55 : f32 to vector<2x128xf32>
    %158 = arith.addf %157, %156 : vector<2x128xf32>
    %159 = arith.divf %157, %158 : vector<2x128xf32>
    %160 = arith.mulf %151, %121 : vector<2x128xf32>
    %161 = arith.mulf %145, %153 : vector<2x128xf32>
    %162 = arith.addf %160, %161 : vector<2x128xf32>
    %163 = math.tanh %162 : vector<2x128xf32>
    %164 = arith.mulf %159, %163 : vector<2x128xf32>
    %165 = arith.truncf %164 : vector<2x128xf32> to vector<2x128xbf16>
    %166 = arith.index_cast %c3_i32 : i32 to index
    %c0_56 = arith.constant 0 : index
    %c0_57 = arith.constant 0 : index
    %167 = vector.load %arg6[%166, %c0_56, %c0_57] : memref<8x2x128xbf16, #tpu.memory_space<vmem>>, vector<1x2x128xbf16>
    %168 = vector.shape_cast %167 : vector<1x2x128xbf16> to vector<2x128xbf16>
    %169 = vector.shape_cast %165 : vector<2x128xbf16> to vector<1x2x128xbf16>
    tpu.vector_store %arg6[%166, %c0_56, %c0_57], %169 {strides = array<i32>} : memref<8x2x128xbf16, #tpu.memory_space<vmem>>, vector<1x2x128xbf16>,
    %c4_i32 = arith.constant 4 : i32
    %170 = arith.index_cast %c4_i32 : i32 to index
    %c0_58 = arith.constant 0 : index
    %c0_59 = arith.constant 0 : index
    %171 = vector.load %arg2[%170, %c0_58, %c0_59] : memref<8x2x32xbf16, #tpu.memory_space<vmem>>, vector<1x2x32xbf16>
    %172 = vector.shape_cast %171 : vector<1x2x32xbf16> to vector<2x32xbf16>
    %c0_60 = arith.constant 0 : index
    %c0_61 = arith.constant 0 : index
    %173 = vector.load %arg3[%c0_60, %c0_61] : memref<32x512xbf16, #tpu.memory_space<vmem>>, vector<32x512xbf16>
    %cst_62 = arith.constant dense<0.000000e+00> : vector<2x512xf32>
    %174 = tpu.matmul %172, %173, %cst_62 {dimension_numbers = #tpu.dot_dimension_numbers<[1], [0], [0], [1], [0, 0, 1, 1], [], []>} : vector<2x32xbf16>, vector<32x512xbf16>, vector<2x512xf32> -> vector<2x512xf32>
    %175 = arith.truncf %164 : vector<2x128xf32> to vector<2x128xbf16>
    %c0_63 = arith.constant 0 : index
    %c0_64 = arith.constant 0 : index
    %176 = vector.load %arg4[%c0_63, %c0_64] : memref<128x512xbf16, #tpu.memory_space<vmem>>, vector<128x512xbf16>
    %cst_65 = arith.constant dense<0.000000e+00> : vector<2x512xf32>
    %177 = tpu.matmul %175, %176, %cst_65 {dimension_numbers = #tpu.dot_dimension_numbers<[1], [0], [0], [1], [0, 0, 1, 1], [], []>} : vector<2x128xbf16>, vector<128x512xbf16>, vector<2x512xf32> -> vector<2x512xf32>
    %178 = arith.addf %174, %177 : vector<2x512xf32>
    %179 = vector.broadcast %3 : vector<1x512xf32> to vector<2x512xf32>
    %180 = arith.addf %178, %179 : vector<2x512xf32>
    %181 = vector.extract_strided_slice %180 {offsets = [0, 0], sizes = [2, 128], strides = [1, 1]} : vector<2x512xf32> to vector<2x128xf32>
    %182 = arith.negf %181 : vector<2x128xf32>
    %183 = math.exp %182 : vector<2x128xf32>
    %cst_66 = arith.constant 1.000000e+00 : f32
    %184 = vector.broadcast %cst_66 : f32 to vector<2x128xf32>
    %185 = arith.addf %184, %183 : vector<2x128xf32>
    %186 = arith.divf %184, %185 : vector<2x128xf32>
    %187 = vector.extract_strided_slice %180 {offsets = [0, 128], sizes = [2, 128], strides = [1, 1]} : vector<2x512xf32> to vector<2x128xf32>
    %188 = arith.negf %187 : vector<2x128xf32>
    %189 = math.exp %188 : vector<2x128xf32>
    %cst_67 = arith.constant 1.000000e+00 : f32
    %190 = vector.broadcast %cst_67 : f32 to vector<2x128xf32>
    %191 = arith.addf %190, %189 : vector<2x128xf32>
    %192 = arith.divf %190, %191 : vector<2x128xf32>
    %193 = vector.extract_strided_slice %180 {offsets = [0, 256], sizes = [2, 128], strides = [1, 1]} : vector<2x512xf32> to vector<2x128xf32>
    %194 = math.tanh %193 : vector<2x128xf32>
    %195 = vector.extract_strided_slice %180 {offsets = [0, 384], sizes = [2, 128], strides = [1, 1]} : vector<2x512xf32> to vector<2x128xf32>
    %196 = arith.negf %195 : vector<2x128xf32>
    %197 = math.exp %196 : vector<2x128xf32>
    %cst_68 = arith.constant 1.000000e+00 : f32
    %198 = vector.broadcast %cst_68 : f32 to vector<2x128xf32>
    %199 = arith.addf %198, %197 : vector<2x128xf32>
    %200 = arith.divf %198, %199 : vector<2x128xf32>
    %201 = arith.mulf %192, %162 : vector<2x128xf32>
    %202 = arith.mulf %186, %194 : vector<2x128xf32>
    %203 = arith.addf %201, %202 : vector<2x128xf32>
    %204 = math.tanh %203 : vector<2x128xf32>
    %205 = arith.mulf %200, %204 : vector<2x128xf32>
    %206 = arith.truncf %205 : vector<2x128xf32> to vector<2x128xbf16>
    %207 = arith.index_cast %c4_i32 : i32 to index
    %c0_69 = arith.constant 0 : index
    %c0_70 = arith.constant 0 : index
    %208 = vector.load %arg6[%207, %c0_69, %c0_70] : memref<8x2x128xbf16, #tpu.memory_space<vmem>>, vector<1x2x128xbf16>
    %209 = vector.shape_cast %208 : vector<1x2x128xbf16> to vector<2x128xbf16>
    %210 = vector.shape_cast %206 : vector<2x128xbf16> to vector<1x2x128xbf16>
    tpu.vector_store %arg6[%207, %c0_69, %c0_70], %210 {strides = array<i32>} : memref<8x2x128xbf16, #tpu.memory_space<vmem>>, vector<1x2x128xbf16>,
    %c5_i32 = arith.constant 5 : i32
    %211 = arith.index_cast %c5_i32 : i32 to index
    %c0_71 = arith.constant 0 : index
    %c0_72 = arith.constant 0 : index
    %212 = vector.load %arg2[%211, %c0_71, %c0_72] : memref<8x2x32xbf16, #tpu.memory_space<vmem>>, vector<1x2x32xbf16>
    %213 = vector.shape_cast %212 : vector<1x2x32xbf16> to vector<2x32xbf16>
    %c0_73 = arith.constant 0 : index
    %c0_74 = arith.constant 0 : index
    %214 = vector.load %arg3[%c0_73, %c0_74] : memref<32x512xbf16, #tpu.memory_space<vmem>>, vector<32x512xbf16>
    %cst_75 = arith.constant dense<0.000000e+00> : vector<2x512xf32>
    %215 = tpu.matmul %213, %214, %cst_75 {dimension_numbers = #tpu.dot_dimension_numbers<[1], [0], [0], [1], [0, 0, 1, 1], [], []>} : vector<2x32xbf16>, vector<32x512xbf16>, vector<2x512xf32> -> vector<2x512xf32>
    %216 = arith.truncf %205 : vector<2x128xf32> to vector<2x128xbf16>
    %c0_76 = arith.constant 0 : index
    %c0_77 = arith.constant 0 : index
    %217 = vector.load %arg4[%c0_76, %c0_77] : memref<128x512xbf16, #tpu.memory_space<vmem>>, vector<128x512xbf16>
    %cst_78 = arith.constant dense<0.000000e+00> : vector<2x512xf32>
    %218 = tpu.matmul %216, %217, %cst_78 {dimension_numbers = #tpu.dot_dimension_numbers<[1], [0], [0], [1], [0, 0, 1, 1], [], []>} : vector<2x128xbf16>, vector<128x512xbf16>, vector<2x512xf32> -> vector<2x512xf32>
    %219 = arith.addf %215, %218 : vector<2x512xf32>
    %220 = vector.broadcast %3 : vector<1x512xf32> to vector<2x512xf32>
    %221 = arith.addf %219, %220 : vector<2x512xf32>
    %222 = vector.extract_strided_slice %221 {offsets = [0, 0], sizes = [2, 128], strides = [1, 1]} : vector<2x512xf32> to vector<2x128xf32>
    %223 = arith.negf %222 : vector<2x128xf32>
    %224 = math.exp %223 : vector<2x128xf32>
    %cst_79 = arith.constant 1.000000e+00 : f32
    %225 = vector.broadcast %cst_79 : f32 to vector<2x128xf32>
    %226 = arith.addf %225, %224 : vector<2x128xf32>
    %227 = arith.divf %225, %226 : vector<2x128xf32>
    %228 = vector.extract_strided_slice %221 {offsets = [0, 128], sizes = [2, 128], strides = [1, 1]} : vector<2x512xf32> to vector<2x128xf32>
    %229 = arith.negf %228 : vector<2x128xf32>
    %230 = math.exp %229 : vector<2x128xf32>
    %cst_80 = arith.constant 1.000000e+00 : f32
    %231 = vector.broadcast %cst_80 : f32 to vector<2x128xf32>
    %232 = arith.addf %231, %230 : vector<2x128xf32>
    %233 = arith.divf %231, %232 : vector<2x128xf32>
    %234 = vector.extract_strided_slice %221 {offsets = [0, 256], sizes = [2, 128], strides = [1, 1]} : vector<2x512xf32> to vector<2x128xf32>
    %235 = math.tanh %234 : vector<2x128xf32>
    %236 = vector.extract_strided_slice %221 {offsets = [0, 384], sizes = [2, 128], strides = [1, 1]} : vector<2x512xf32> to vector<2x128xf32>
    %237 = arith.negf %236 : vector<2x128xf32>
    %238 = math.exp %237 : vector<2x128xf32>
    %cst_81 = arith.constant 1.000000e+00 : f32
    %239 = vector.broadcast %cst_81 : f32 to vector<2x128xf32>
    %240 = arith.addf %239, %238 : vector<2x128xf32>
    %241 = arith.divf %239, %240 : vector<2x128xf32>
    %242 = arith.mulf %233, %203 : vector<2x128xf32>
    %243 = arith.mulf %227, %235 : vector<2x128xf32>
    %244 = arith.addf %242, %243 : vector<2x128xf32>
    %245 = math.tanh %244 : vector<2x128xf32>
    %246 = arith.mulf %241, %245 : vector<2x128xf32>
    %247 = arith.truncf %246 : vector<2x128xf32> to vector<2x128xbf16>
    %248 = arith.index_cast %c5_i32 : i32 to index
    %c0_82 = arith.constant 0 : index
    %c0_83 = arith.constant 0 : index
    %249 = vector.load %arg6[%248, %c0_82, %c0_83] : memref<8x2x128xbf16, #tpu.memory_space<vmem>>, vector<1x2x128xbf16>
    %250 = vector.shape_cast %249 : vector<1x2x128xbf16> to vector<2x128xbf16>
    %251 = vector.shape_cast %247 : vector<2x128xbf16> to vector<1x2x128xbf16>
    tpu.vector_store %arg6[%248, %c0_82, %c0_83], %251 {strides = array<i32>} : memref<8x2x128xbf16, #tpu.memory_space<vmem>>, vector<1x2x128xbf16>,
    %c6_i32 = arith.constant 6 : i32
    %252 = arith.index_cast %c6_i32 : i32 to index
    %c0_84 = arith.constant 0 : index
    %c0_85 = arith.constant 0 : index
    %253 = vector.load %arg2[%252, %c0_84, %c0_85] : memref<8x2x32xbf16, #tpu.memory_space<vmem>>, vector<1x2x32xbf16>
    %254 = vector.shape_cast %253 : vector<1x2x32xbf16> to vector<2x32xbf16>
    %c0_86 = arith.constant 0 : index
    %c0_87 = arith.constant 0 : index
    %255 = vector.load %arg3[%c0_86, %c0_87] : memref<32x512xbf16, #tpu.memory_space<vmem>>, vector<32x512xbf16>
    %cst_88 = arith.constant dense<0.000000e+00> : vector<2x512xf32>
    %256 = tpu.matmul %254, %255, %cst_88 {dimension_numbers = #tpu.dot_dimension_numbers<[1], [0], [0], [1], [0, 0, 1, 1], [], []>} : vector<2x32xbf16>, vector<32x512xbf16>, vector<2x512xf32> -> vector<2x512xf32>
    %257 = arith.truncf %246 : vector<2x128xf32> to vector<2x128xbf16>
    %c0_89 = arith.constant 0 : index
    %c0_90 = arith.constant 0 : index
    %258 = vector.load %arg4[%c0_89, %c0_90] : memref<128x512xbf16, #tpu.memory_space<vmem>>, vector<128x512xbf16>
    %cst_91 = arith.constant dense<0.000000e+00> : vector<2x512xf32>
    %259 = tpu.matmul %257, %258, %cst_91 {dimension_numbers = #tpu.dot_dimension_numbers<[1], [0], [0], [1], [0, 0, 1, 1], [], []>} : vector<2x128xbf16>, vector<128x512xbf16>, vector<2x512xf32> -> vector<2x512xf32>
    %260 = arith.addf %256, %259 : vector<2x512xf32>
    %261 = vector.broadcast %3 : vector<1x512xf32> to vector<2x512xf32>
    %262 = arith.addf %260, %261 : vector<2x512xf32>
    %263 = vector.extract_strided_slice %262 {offsets = [0, 0], sizes = [2, 128], strides = [1, 1]} : vector<2x512xf32> to vector<2x128xf32>
    %264 = arith.negf %263 : vector<2x128xf32>
    %265 = math.exp %264 : vector<2x128xf32>
    %cst_92 = arith.constant 1.000000e+00 : f32
    %266 = vector.broadcast %cst_92 : f32 to vector<2x128xf32>
    %267 = arith.addf %266, %265 : vector<2x128xf32>
    %268 = arith.divf %266, %267 : vector<2x128xf32>
    %269 = vector.extract_strided_slice %262 {offsets = [0, 128], sizes = [2, 128], strides = [1, 1]} : vector<2x512xf32> to vector<2x128xf32>
    %270 = arith.negf %269 : vector<2x128xf32>
    %271 = math.exp %270 : vector<2x128xf32>
    %cst_93 = arith.constant 1.000000e+00 : f32
    %272 = vector.broadcast %cst_93 : f32 to vector<2x128xf32>
    %273 = arith.addf %272, %271 : vector<2x128xf32>
    %274 = arith.divf %272, %273 : vector<2x128xf32>
    %275 = vector.extract_strided_slice %262 {offsets = [0, 256], sizes = [2, 128], strides = [1, 1]} : vector<2x512xf32> to vector<2x128xf32>
    %276 = math.tanh %275 : vector<2x128xf32>
    %277 = vector.extract_strided_slice %262 {offsets = [0, 384], sizes = [2, 128], strides = [1, 1]} : vector<2x512xf32> to vector<2x128xf32>
    %278 = arith.negf %277 : vector<2x128xf32>
    %279 = math.exp %278 : vector<2x128xf32>
    %cst_94 = arith.constant 1.000000e+00 : f32
    %280 = vector.broadcast %cst_94 : f32 to vector<2x128xf32>
    %281 = arith.addf %280, %279 : vector<2x128xf32>
    %282 = arith.divf %280, %281 : vector<2x128xf32>
    %283 = arith.mulf %274, %244 : vector<2x128xf32>
    %284 = arith.mulf %268, %276 : vector<2x128xf32>
    %285 = arith.addf %283, %284 : vector<2x128xf32>
    %286 = math.tanh %285 : vector<2x128xf32>
    %287 = arith.mulf %282, %286 : vector<2x128xf32>
    %288 = arith.truncf %287 : vector<2x128xf32> to vector<2x128xbf16>
    %289 = arith.index_cast %c6_i32 : i32 to index
    %c0_95 = arith.constant 0 : index
    %c0_96 = arith.constant 0 : index
    %290 = vector.load %arg6[%289, %c0_95, %c0_96] : memref<8x2x128xbf16, #tpu.memory_space<vmem>>, vector<1x2x128xbf16>
    %291 = vector.shape_cast %290 : vector<1x2x128xbf16> to vector<2x128xbf16>
    %292 = vector.shape_cast %288 : vector<2x128xbf16> to vector<1x2x128xbf16>
    tpu.vector_store %arg6[%289, %c0_95, %c0_96], %292 {strides = array<i32>} : memref<8x2x128xbf16, #tpu.memory_space<vmem>>, vector<1x2x128xbf16>,
    %c7_i32 = arith.constant 7 : i32
    %293 = arith.index_cast %c7_i32 : i32 to index
    %c0_97 = arith.constant 0 : index
    %c0_98 = arith.constant 0 : index
    %294 = vector.load %arg2[%293, %c0_97, %c0_98] : memref<8x2x32xbf16, #tpu.memory_space<vmem>>, vector<1x2x32xbf16>
    %295 = vector.shape_cast %294 : vector<1x2x32xbf16> to vector<2x32xbf16>
    %c0_99 = arith.constant 0 : index
    %c0_100 = arith.constant 0 : index
    %296 = vector.load %arg3[%c0_99, %c0_100] : memref<32x512xbf16, #tpu.memory_space<vmem>>, vector<32x512xbf16>
    %cst_101 = arith.constant dense<0.000000e+00> : vector<2x512xf32>
    %297 = tpu.matmul %295, %296, %cst_101 {dimension_numbers = #tpu.dot_dimension_numbers<[1], [0], [0], [1], [0, 0, 1, 1], [], []>} : vector<2x32xbf16>, vector<32x512xbf16>, vector<2x512xf32> -> vector<2x512xf32>
    %298 = arith.truncf %287 : vector<2x128xf32> to vector<2x128xbf16>
    %c0_102 = arith.constant 0 : index
    %c0_103 = arith.constant 0 : index
    %299 = vector.load %arg4[%c0_102, %c0_103] : memref<128x512xbf16, #tpu.memory_space<vmem>>, vector<128x512xbf16>
    %cst_104 = arith.constant dense<0.000000e+00> : vector<2x512xf32>
    %300 = tpu.matmul %298, %299, %cst_104 {dimension_numbers = #tpu.dot_dimension_numbers<[1], [0], [0], [1], [0, 0, 1, 1], [], []>} : vector<2x128xbf16>, vector<128x512xbf16>, vector<2x512xf32> -> vector<2x512xf32>
    %301 = arith.addf %297, %300 : vector<2x512xf32>
    %302 = vector.broadcast %3 : vector<1x512xf32> to vector<2x512xf32>
    %303 = arith.addf %301, %302 : vector<2x512xf32>
    %304 = vector.extract_strided_slice %303 {offsets = [0, 0], sizes = [2, 128], strides = [1, 1]} : vector<2x512xf32> to vector<2x128xf32>
    %305 = arith.negf %304 : vector<2x128xf32>
    %306 = math.exp %305 : vector<2x128xf32>
    %cst_105 = arith.constant 1.000000e+00 : f32
    %307 = vector.broadcast %cst_105 : f32 to vector<2x128xf32>
    %308 = arith.addf %307, %306 : vector<2x128xf32>
    %309 = arith.divf %307, %308 : vector<2x128xf32>
    %310 = vector.extract_strided_slice %303 {offsets = [0, 128], sizes = [2, 128], strides = [1, 1]} : vector<2x512xf32> to vector<2x128xf32>
    %311 = arith.negf %310 : vector<2x128xf32>
    %312 = math.exp %311 : vector<2x128xf32>
    %cst_106 = arith.constant 1.000000e+00 : f32
    %313 = vector.broadcast %cst_106 : f32 to vector<2x128xf32>
    %314 = arith.addf %313, %312 : vector<2x128xf32>
    %315 = arith.divf %313, %314 : vector<2x128xf32>
    %316 = vector.extract_strided_slice %303 {offsets = [0, 256], sizes = [2, 128], strides = [1, 1]} : vector<2x512xf32> to vector<2x128xf32>
    %317 = math.tanh %316 : vector<2x128xf32>
    %318 = vector.extract_strided_slice %303 {offsets = [0, 384], sizes = [2, 128], strides = [1, 1]} : vector<2x512xf32> to vector<2x128xf32>
    %319 = arith.negf %318 : vector<2x128xf32>
    %320 = math.exp %319 : vector<2x128xf32>
    %cst_107 = arith.constant 1.000000e+00 : f32
    %321 = vector.broadcast %cst_107 : f32 to vector<2x128xf32>
    %322 = arith.addf %321, %320 : vector<2x128xf32>
    %323 = arith.divf %321, %322 : vector<2x128xf32>
    %324 = arith.mulf %315, %285 : vector<2x128xf32>
    %325 = arith.mulf %309, %317 : vector<2x128xf32>
    %326 = arith.addf %324, %325 : vector<2x128xf32>
    %327 = math.tanh %326 : vector<2x128xf32>
    %328 = arith.mulf %323, %327 : vector<2x128xf32>
    %329 = arith.truncf %328 : vector<2x128xf32> to vector<2x128xbf16>
    %330 = arith.index_cast %c7_i32 : i32 to index
    %c0_108 = arith.constant 0 : index
    %c0_109 = arith.constant 0 : index
    %331 = vector.load %arg6[%330, %c0_108, %c0_109] : memref<8x2x128xbf16, #tpu.memory_space<vmem>>, vector<1x2x128xbf16>
    %332 = vector.shape_cast %331 : vector<1x2x128xbf16> to vector<2x128xbf16>
    %333 = vector.shape_cast %329 : vector<2x128xbf16> to vector<1x2x128xbf16>
    tpu.vector_store %arg6[%330, %c0_108, %c0_109], %333 {strides = array<i32>} : memref<8x2x128xbf16, #tpu.memory_space<vmem>>, vector<1x2x128xbf16>,
    %c8_i32 = arith.constant 8 : i32
    %c0_110 = arith.constant 0 : index
    %c0_111 = arith.constant 0 : index
    %334 = vector.load %arg9[%c0_110, %c0_111] : memref<2x128xf32, #tpu.memory_space<vmem>>, vector<2x128xf32>
    tpu.vector_store %arg9[%c0_110, %c0_111], %328 {strides = array<i32>} : memref<2x128xf32, #tpu.memory_space<vmem>>, vector<2x128xf32>,
    %c0_112 = arith.constant 0 : index
    %c0_113 = arith.constant 0 : index
    %335 = vector.load %arg10[%c0_112, %c0_113] : memref<2x128xf32, #tpu.memory_space<vmem>>, vector<2x128xf32>
    tpu.vector_store %arg10[%c0_112, %c0_113], %326 {strides = array<i32>} : memref<2x128xf32, #tpu.memory_space<vmem>>, vector<2x128xf32>,
    %c0_i32_114 = arith.constant 0 : i32
    %336 = arith.cmpi eq, %arg1, %c0_i32_114 : i32
    %337 = arith.extui %336 : i1 to i32
    %c0_i32_115 = arith.constant 0 : i32
    %338 = arith.cmpi ne, %337, %c0_i32_115 : i32
    scf.if %338 {
      %c0_116 = arith.constant 0 : index
      %c0_117 = arith.constant 0 : index
      %339 = vector.load %arg7[%c0_116, %c0_117] : memref<2x128xf32, #tpu.memory_space<vmem>>, vector<2x128xf32>
      tpu.vector_store %arg7[%c0_116, %c0_117], %328 {strides = array<i32>} : memref<2x128xf32, #tpu.memory_space<vmem>>, vector<2x128xf32>,
      %c0_118 = arith.constant 0 : index
      %c0_119 = arith.constant 0 : index
      %340 = vector.load %arg8[%c0_118, %c0_119] : memref<2x128xf32, #tpu.memory_space<vmem>>, vector<2x128xf32>
      tpu.vector_store %arg8[%c0_118, %c0_119], %326 {strides = array<i32>} : memref<2x128xf32, #tpu.memory_space<vmem>>, vector<2x128xf32>,
    } else {
    }
    return
  }
  func.func @transform_0(%arg0: i32, %arg1: i32) -> (i32, i32, i32) {
    %c0_i32 = arith.constant 0 : i32
    %c0_i32_0 = arith.constant 0 : i32
    return %arg1, %arg0, %c0_i32 : i32, i32, i32
  }
  func.func @transform_1(%arg0: i32, %arg1: i32) -> (i32, i32) {
    %c0_i32 = arith.constant 0 : i32
    %c0_i32_0 = arith.constant 0 : i32
    %c0_i32_1 = arith.constant 0 : i32
    return %c0_i32, %c0_i32_0 : i32, i32
  }
  func.func @transform_2(%arg0: i32, %arg1: i32) -> (i32, i32) {
    %c0_i32 = arith.constant 0 : i32
    %c0_i32_0 = arith.constant 0 : i32
    %c0_i32_1 = arith.constant 0 : i32
    return %c0_i32, %c0_i32_0 : i32, i32
  }
  func.func @transform_3(%arg0: i32, %arg1: i32) -> (i32, i32) {
    %c0_i32 = arith.constant 0 : i32
    %c0_i32_0 = arith.constant 0 : i32
    %c0_i32_1 = arith.constant 0 : i32
    return %c0_i32, %c0_i32_0 : i32, i32
  }
  func.func @transform_4(%arg0: i32, %arg1: i32) -> (i32, i32, i32) {
    %c0_i32 = arith.constant 0 : i32
    %c0_i32_0 = arith.constant 0 : i32
    return %arg1, %arg0, %c0_i32 : i32, i32, i32
  }
  func.func @transform_5(%arg0: i32, %arg1: i32) -> (i32, i32) {
    %c0_i32 = arith.constant 0 : i32
    %c0_i32_0 = arith.constant 0 : i32
    return %arg0, %c0_i32 : i32, i32
  }
  func.func @transform_6(%arg0: i32, %arg1: i32) -> (i32, i32) {
    %c0_i32 = arith.constant 0 : i32
    %c0_i32_0 = arith.constant 0 : i32
    return %arg0, %c0_i32 : i32, i32
  }
}

</mosaic_0001>

<llo_original>
// kernel: tpu_custom_call.1
$region0: #{tpu_custom_call.1}
  #allocation0 [shape = 'u32[]', space=smem, size = 0x4, offset = 0x4, fixed_abs, tag = 'smem constant byte address 0x4 - core index']
  #allocation1 [shape = 'u32[144,128]{1,0:T(1,128)}', space=vmem, size = 0x12000, scoped, tag = 'internal scratch']
  #allocation2 [shape = 'f32[2,128]{1,0:T(2,128)}', space=vmem, size = 0x400, scoped, tag = 'scratch operand']
  #allocation3 [shape = 'f32[2,128]{1,0:T(2,128)}', space=vmem, size = 0x400, scoped, tag = 'scratch operand']
  %s0 = inlined_call_operand.hbm [shape: bf16[8,2,32], index: 0, kind: input, shape index: {}]
  %s1 = inlined_call_operand.hbm [shape: bf16[32,512], index: 1, kind: input, shape index: {}]
  %s2 = inlined_call_operand.hbm [shape: bf16[128,512], index: 2, kind: input, shape index: {}]
  %s3 = inlined_call_operand.vmem [shape: f32[1,512], index: 3, kind: input, shape index: {}]
  %s4 = inlined_call_operand.hbm [shape: bf16[8,2,128], index: 4, kind: output, shape index: {0}]
  %s5 = inlined_call_operand.hbm [shape: f32[2,128], index: 5, kind: output, shape index: {1}]
  %s6 = inlined_call_operand.hbm [shape: f32[2,128], index: 6, kind: output, shape index: {2}]
  %7 = xla_tuple %s4, %s5, %s6
  %s8 = sld [smem:[#allocation0]]
  $region62: #{tpu_custom_call.1} parent=0
    _
  %s10 = ssub.s32 1, %s8
  %s11 = scalar_select 0, %s10, %s8
  $region1: #{tpu_custom_call.1} parent=0
    #allocation4 [shape = 'u8[4096]{0}', space=vmem, size = 0x1000, scoped, tag = 'input window, operand 0, single buffered']
    #allocation5 [shape = 's32[1]{0}', space=sflag, size = 0x4, scoped, tag = 'scoped memory for tpu_custom_call.1']
    #allocation6 [shape = 's32[1]{0}', space=sflag, size = 0x4, scoped, tag = 'scoped memory for tpu_custom_call.1']
    #allocation7 [shape = 'u8[32768]{0}', space=vmem, size = 0x8000, scoped, tag = 'input window, operand 1, single buffered']
    #allocation8 [shape = 's32[1]{0}', space=sflag, size = 0x4, scoped, tag = 'scoped memory for tpu_custom_call.1']
    #allocation9 [shape = 'u8[131072]{0}', space=vmem, size = 0x20000, scoped, tag = 'input window, operand 2, single buffered']
    #allocation10 [shape = 'u8[4096]{0}', space=vmem, size = 0x1000, scoped, tag = 'output window, operand 0, single buffered']
    #allocation11 [shape = 'u8[1024]{0}', space=vmem, size = 0x400, scoped, tag = 'output window, operand 1, single buffered']
    #allocation12 [shape = 's32[1]{0}', space=sflag, size = 0x4, scoped, tag = 'scoped memory for tpu_custom_call.1']
    #allocation13 [shape = 'u8[1024]{0}', space=vmem, size = 0x400, scoped, tag = 'output window, operand 2, single buffered']
    %12 = vsyncpa [#allocation5], 0
    %13 = vsyncpa [#allocation8], 0
    %14 = vsyncpa [#allocation6], 0
    %15 = vsyncpa [#allocation12], 0
    // Predicated region
    $region2: #{tpu_custom_call.1} parent=1 // pred_check
      _
    $region3: #{tpu_custom_call.1} parent=1 // pred_check_branch
      %17 = sbr.rel (0) target = $region5
    $region4: #{tpu_custom_call.1} parent=1 // pred_region
      %s19 = ssub.s32 128, 128
      %20 = vsyncadd [#allocation5], %s19
      %s21 = sshll.u32 [#allocation4], 4
      %s22 = int_to_ptr.vmem [resolvable:$true] %s21
      %27 = dma.hbm_to_vmem [thread:$0]  %s0, 128, %s22, [#allocation5], 16, 16, 1
    $region5: #{tpu_custom_call.1} parent=1 // pred_fallthru
      _
    // Predicated region
    $region6: #{tpu_custom_call.1} parent=1 // pred_check
      _
    $region7: #{tpu_custom_call.1} parent=1 // pred_check_branch
      %29 = sbr.rel (0) target = $region9
    $region8: #{tpu_custom_call.1} parent=1 // pred_region
      %s31 = ssub.s32 1024, 1024
      %32 = vsyncadd [#allocation8], %s31
      %s33 = sshll.u32 [#allocation7], 4
      %s34 = int_to_ptr.vmem [resolvable:$true] %s33
      %39 = dma.hbm_to_vmem [thread:$0]  %s1, 1024, %s34, [#allocation8], 256, 256, 16
    $region9: #{tpu_custom_call.1} parent=1 // pred_fallthru
      _
    // Predicated region
    $region10: #{tpu_custom_call.1} parent=1 // pred_check
      _
    $region11: #{tpu_custom_call.1} parent=1 // pred_check_branch
      %41 = sbr.rel (0) target = $region13
    $region12: #{tpu_custom_call.1} parent=1 // pred_region
      %s43 = ssub.s32 4096, 4096
      %44 = vsyncadd [#allocation8], %s43
      %s45 = sshll.u32 [#allocation9], 4
      %s46 = int_to_ptr.vmem [resolvable:$true] %s45
      %51 = dma.hbm_to_vmem [thread:$0]  %s2, 4096, %s46, [#allocation8], 256, 256, 16
    $region13: #{tpu_custom_call.1} parent=1 // pred_fallthru
      _
    // Predicated region
    $region14: #{tpu_custom_call.1} parent=1 // pred_check
      _
    $region15: #{tpu_custom_call.1} parent=1 // pred_check_branch
      %53 = sbr.rel (0) target = $region17
    $region16: #{tpu_custom_call.1} parent=1 // pred_region
      _
    $region17: #{tpu_custom_call.1} parent=1 // pred_fallthru
      _
    // Predicated region
    $region18: #{tpu_custom_call.1} parent=1 // pred_check
      _
    $region19: #{tpu_custom_call.1} parent=1 // pred_check_branch
      %55 = sbr.rel (0) target = $region21
    $region20: #{tpu_custom_call.1} parent=1 // pred_region
      %56 = dma.done [#allocation5], 128
    $region21: #{tpu_custom_call.1} parent=1 // pred_fallthru
      _
    // Predicated region
    $region22: #{tpu_custom_call.1} parent=1 // pred_check
      _
    $region23: #{tpu_custom_call.1} parent=1 // pred_check_branch
      %58 = sbr.rel (0) target = $region25
    $region24: #{tpu_custom_call.1} parent=1 // pred_region
      %59 = dma.done [#allocation8], 1024
    $region25: #{tpu_custom_call.1} parent=1 // pred_fallthru
      _
    // Predicated region
    $region26: #{tpu_custom_call.1} parent=1 // pred_check
      _
    $region27: #{tpu_custom_call.1} parent=1 // pred_check_branch
      %61 = sbr.rel (0) target = $region29
    $region28: #{tpu_custom_call.1} parent=1 // pred_region
      %62 = dma.done [#allocation8], 4096
    $region29: #{tpu_custom_call.1} parent=1 // pred_fallthru
      _
    %p64 = scmp.eq.s32.totalorder 0, 0
    // Predicated region
    $region30: #{tpu_custom_call.1} parent=1 // pred_check
      %p65 = pneg %p64
    $region31: #{tpu_custom_call.1} parent=1 // pred_check_branch
      %67 = sbr.rel (%p65) target = $region33
    $region32: #{tpu_custom_call.1} parent=1 // pred_region
      %68 = vst [vmem:[#allocation2] sm:$0x3] 0.0
      %69 = vst [vmem:[#allocation3] sm:$0x3] 0.0
    $region33: #{tpu_custom_call.1} parent=1 // pred_fallthru
      _
    %v70 = vld [vmem:[%s3] sm:$0xf]
    %v71 = vld [vmem:[#allocation2] sm:$0x3]
    %v72 = vld [vmem:[#allocation3] sm:$0x3]
    %v73 = vld [vmem:[#allocation4] sm:$0x1]
    %v74 = vld [vmem:[#allocation7] sm:$0xff]
    %v75 = vld [vmem:[#allocation7 + $0x8] sm:$0xff]
    %v76 = vld [vmem:[#allocation7 + $0x10] sm:$0xff]
    %v77 = vld [vmem:[#allocation7 + $0x18] sm:$0xff]
    %v78 = vld [vmem:[#allocation7 + $0x20] sm:$0xff]
    %v79 = vld [vmem:[#allocation7 + $0x28] sm:$0xff]
    %v80 = vld [vmem:[#allocation7 + $0x30] sm:$0xff]
    %v81 = vld [vmem:[#allocation7 + $0x38] sm:$0xff]
    %v82 = vpack.c.bf16 %v71, %v71
    %v83 = vld [vmem:[#allocation9] sm:$0xff]
    %v84 = vld [vmem:[#allocation9 + $0x8] sm:$0xff]
    %v85 = vld [vmem:[#allocation9 + $0x10] sm:$0xff]
    %v86 = vld [vmem:[#allocation9 + $0x18] sm:$0xff]
    %v87 = vld [vmem:[#allocation9 + $0x20] sm:$0xff]
    %v88 = vld [vmem:[#allocation9 + $0x28] sm:$0xff]
    %v89 = vld [vmem:[#allocation9 + $0x30] sm:$0xff]
    %v90 = vld [vmem:[#allocation9 + $0x38] sm:$0xff]
    %v91 = vld [vmem:[#allocation9 + $0x40] sm:$0xff]
    %v92 = vld [vmem:[#allocation9 + $0x48] sm:$0xff]
    %v93 = vld [vmem:[#allocation9 + $0x50] sm:$0xff]
    %v94 = vld [vmem:[#allocation9 + $0x58] sm:$0xff]
    %v95 = vld [vmem:[#allocation9 + $0x60] sm:$0xff]
    %v96 = vld [vmem:[#allocation9 + $0x68] sm:$0xff]
    %v97 = vld [vmem:[#allocation9 + $0x70] sm:$0xff]
    %v98 = vld [vmem:[#allocation9 + $0x78] sm:$0xff]
    %v99 = vld [vmem:[#allocation9 + $0x80] sm:$0xff]
    %v100 = vld [vmem:[#allocation9 + $0x88] sm:$0xff]
    %v101 = vld [vmem:[#allocation9 + $0x90] sm:$0xff]
    %v102 = vld [vmem:[#allocation9 + $0x98] sm:$0xff]
    %v103 = vld [vmem:[#allocation9 + $0xa0] sm:$0xff]
    %v104 = vld [vmem:[#allocation9 + $0xa8] sm:$0xff]
    %v105 = vld [vmem:[#allocation9 + $0xb0] sm:$0xff]
    %v106 = vld [vmem:[#allocation9 + $0xb8] sm:$0xff]
    %v107 = vld [vmem:[#allocation9 + $0xc0] sm:$0xff]
    %v108 = vld [vmem:[#allocation9 + $0xc8] sm:$0xff]
    %v109 = vld [vmem:[#allocation9 + $0xd0] sm:$0xff]
    %v110 = vld [vmem:[#allocation9 + $0xd8] sm:$0xff]
    %v111 = vld [vmem:[#allocation9 + $0xe0] sm:$0xff]
    %v112 = vld [vmem:[#allocation9 + $0xe8] sm:$0xff]
    %v113 = vld [vmem:[#allocation9 + $0xf0] sm:$0xff]
    %v114 = vld [vmem:[#allocation9 + $0xf8] sm:$0xff]
    %v147 = vunpack.c.l.b16 %v83
    %v148 = vunpack.c.h.b16 %v83
    %v149 = vunpack.c.l.b16 %v84
    %v150 = vunpack.c.h.b16 %v84
    %v151 = vunpack.c.l.b16 %v85
    %v152 = vunpack.c.h.b16 %v85
    %v153 = vunpack.c.l.b16 %v86
    %v154 = vunpack.c.h.b16 %v86
    %v155 = vunpack.c.l.b16 %v87
    %v156 = vunpack.c.h.b16 %v87
    %v157 = vunpack.c.l.b16 %v88
    %v158 = vunpack.c.h.b16 %v88
    %v159 = vunpack.c.l.b16 %v89
    %v160 = vunpack.c.h.b16 %v89
    %v161 = vunpack.c.l.b16 %v90
    %v162 = vunpack.c.h.b16 %v90
    %v163 = vunpack.c.l.b16 %v91
    %v164 = vunpack.c.h.b16 %v91
    %v165 = vunpack.c.l.b16 %v92
    %v166 = vunpack.c.h.b16 %v92
    %v167 = vunpack.c.l.b16 %v93
    %v168 = vunpack.c.h.b16 %v93
    %v169 = vunpack.c.l.b16 %v94
    %v170 = vunpack.c.h.b16 %v94
    %v171 = vunpack.c.l.b16 %v95
    %v172 = vunpack.c.h.b16 %v95
    %v173 = vunpack.c.l.b16 %v96
    %v174 = vunpack.c.h.b16 %v96
    %v175 = vunpack.c.l.b16 %v97
    %v176 = vunpack.c.h.b16 %v97
    %v177 = vunpack.c.l.b16 %v98
    %v178 = vunpack.c.h.b16 %v98
    %v179 = vunpack.c.l.b16 %v99
    %v180 = vunpack.c.h.b16 %v99
    %v181 = vunpack.c.l.b16 %v100
    %v182 = vunpack.c.h.b16 %v100
    %v183 = vunpack.c.l.b16 %v101
    %v184 = vunpack.c.h.b16 %v101
    %v185 = vunpack.c.l.b16 %v102
    %v186 = vunpack.c.h.b16 %v102
    %v187 = vunpack.c.l.b16 %v103
    %v188 = vunpack.c.h.b16 %v103
    %v189 = vunpack.c.l.b16 %v104
    %v190 = vunpack.c.h.b16 %v104
    %v191 = vunpack.c.l.b16 %v105
    %v192 = vunpack.c.h.b16 %v105
    %v193 = vunpack.c.l.b16 %v106
    %v194 = vunpack.c.h.b16 %v106
    %v195 = vunpack.c.l.b16 %v107
    %v196 = vunpack.c.h.b16 %v107
    %v197 = vunpack.c.l.b16 %v108
    %v198 = vunpack.c.h.b16 %v108
    %v199 = vunpack.c.l.b16 %v109
    %v200 = vunpack.c.h.b16 %v109
    %v201 = vunpack.c.l.b16 %v110
    %v202 = vunpack.c.h.b16 %v110
    %v203 = vunpack.c.l.b16 %v111
    %v204 = vunpack.c.h.b16 %v111
    %v205 = vunpack.c.l.b16 %v112
    %v206 = vunpack.c.h.b16 %v112
    %v207 = vunpack.c.l.b16 %v113
    %v208 = vunpack.c.h.b16 %v113
    %v209 = vunpack.c.l.b16 %v114
    %v210 = vunpack.c.h.b16 %v114
    %v211 = vpack.c.b16 %v151, %v147
    %v212 = vpack.c.b16 %v152, %v148
    %v213 = vpack.c.b16 %v153, %v149
    %v214 = vpack.c.b16 %v154, %v150
    %v215 = vpack.c.b16 %v159, %v155
    %v216 = vpack.c.b16 %v160, %v156
    %v217 = vpack.c.b16 %v161, %v157
    %v218 = vpack.c.b16 %v162, %v158
    %v219 = vpack.c.b16 %v167, %v163
    %v220 = vpack.c.b16 %v168, %v164
    %v221 = vpack.c.b16 %v169, %v165
    %v222 = vpack.c.b16 %v170, %v166
    %v223 = vpack.c.b16 %v175, %v171
    %v224 = vpack.c.b16 %v176, %v172
    %v225 = vpack.c.b16 %v177, %v173
    %v226 = vpack.c.b16 %v178, %v174
    %v227 = vpack.c.b16 %v183, %v179
    %v228 = vpack.c.b16 %v184, %v180
    %v229 = vpack.c.b16 %v185, %v181
    %v230 = vpack.c.b16 %v186, %v182
    %v231 = vpack.c.b16 %v191, %v187
    %v232 = vpack.c.b16 %v192, %v188
    %v233 = vpack.c.b16 %v193, %v189
    %v234 = vpack.c.b16 %v194, %v190
    %v235 = vpack.c.b16 %v199, %v195
    %v236 = vpack.c.b16 %v200, %v196
    %v237 = vpack.c.b16 %v201, %v197
    %v238 = vpack.c.b16 %v202, %v198
    %v239 = vpack.c.b16 %v207, %v203
    %v240 = vpack.c.b16 %v208, %v204
    %v241 = vpack.c.b16 %v209, %v205
    %v242 = vpack.c.b16 %v210, %v206
    %275 = vmatprep.subr.bf16.mxu0 %v212
    %276 = vmatpush1.bf16.msra.mxu0 %v211
    %277 = vmatprep.subr.bf16.mxu0 %v216
    %278 = vmatpush1.bf16.msra.mxu0 %v215
    %279 = vmatprep.subr.bf16.mxu0 %v220
    %280 = vmatpush1.bf16.msra.mxu0 %v219
    %281 = vmatprep.subr.bf16.mxu0 %v224
    %282 = vmatpush1.bf16.msra.mxu0 %v223
    %283 = vmatprep.subr.bf16.mxu0 %v228
    %284 = vmatpush1.bf16.msra.mxu0 %v227
    %285 = vmatprep.subr.bf16.mxu0 %v232
    %286 = vmatpush1.bf16.msra.mxu0 %v231
    %287 = vmatprep.subr.bf16.mxu0 %v236
    %288 = vmatpush1.bf16.msra.mxu0 %v235
    %289 = vmatprep.subr.bf16.mxu0 %v240
    %290 = vmatpush1.bf16.msra.mxu0 %v239
    %291 = vmatprep.subr.bf16.mxu0 0
    %292 = vmatpush1.bf16.msra.mxu0 0
    %293 = vmatprep.subr.bf16.mxu0 0
    %294 = vmatpush1.bf16.msra.mxu0 0
    %295 = vmatprep.subr.bf16.mxu0 0
    %296 = vmatpush1.bf16.msra.mxu0 0
    %297 = vmatprep.subr.bf16.mxu0 0
    %298 = vmatpush1.bf16.msra.mxu0 0
    %299 = vmatprep.subr.bf16.mxu0 0
    %300 = vmatpush1.bf16.msra.mxu0 0
    %301 = vmatprep.subr.bf16.mxu0 0
    %302 = vmatpush1.bf16.msra.mxu0 0
    %303 = vmatprep.subr.bf16.mxu0 0
    %304 = vmatpush1.bf16.msra.mxu0 0
    %305 = vmatprep.subr.bf16.mxu0 0
    %306 = vmatpush1.bf16.msra.mxu0 0
    %307 = vmatprep.mubr.bf16.mxu0 0
    %308 = vmatmul.mubr.bf16.gmra.mrb[0].mxu0 %v82
    %v309 = vpop.f32.mrb[0].mxu0
    %v310 = vadd.f32 0.0, %v309
    %v311 = vpop.f32.mrb[0].mxu0
    %v312 = vadd.f32 0.0, %v311
    %v313 = vpop.f32.mrb[0].mxu0
    %v314 = vpop.f32.mrb[0].mxu0
    %315 = vdwg.mxu0
    %316 = vmatprep.subr.bf16.mxu0 %v214
    %317 = vmatpush1.bf16.msra.mxu0 %v213
    %318 = vmatprep.subr.bf16.mxu0 %v218
    %319 = vmatpush1.bf16.msra.mxu0 %v217
    %320 = vmatprep.subr.bf16.mxu0 %v222
    %321 = vmatpush1.bf16.msra.mxu0 %v221
    %322 = vmatprep.subr.bf16.mxu0 %v226
    %323 = vmatpush1.bf16.msra.mxu0 %v225
    %324 = vmatprep.subr.bf16.mxu0 %v230
    %325 = vmatpush1.bf16.msra.mxu0 %v229
    %326 = vmatprep.subr.bf16.mxu0 %v234
    %327 = vmatpush1.bf16.msra.mxu0 %v233
    %328 = vmatprep.subr.bf16.mxu0 %v238
    %329 = vmatpush1.bf16.msra.mxu0 %v237
    %330 = vmatprep.subr.bf16.mxu0 %v242
    %331 = vmatpush1.bf16.msra.mxu0 %v241
    %332 = vmatprep.subr.bf16.mxu0 0
    %333 = vmatpush1.bf16.msra.mxu0 0
    %334 = vmatprep.subr.bf16.mxu0 0
    %335 = vmatpush1.bf16.msra.mxu0 0
    %336 = vmatprep.subr.bf16.mxu0 0
    %337 = vmatpush1.bf16.msra.mxu0 0
    %338 = vmatprep.subr.bf16.mxu0 0
    %339 = vmatpush1.bf16.msra.mxu0 0
    %340 = vmatprep.subr.bf16.mxu0 0
    %341 = vmatpush1.bf16.msra.mxu0 0
    %342 = vmatprep.subr.bf16.mxu0 0
    %343 = vmatpush1.bf16.msra.mxu0 0
    %344 = vmatprep.subr.bf16.mxu0 0
    %345 = vmatpush1.bf16.msra.mxu0 0
    %346 = vmatprep.subr.bf16.mxu0 0
    %347 = vmatpush1.bf16.msra.mxu0 0
    %348 = vmatprep.mubr.bf16.mxu0 0
    %349 = vmatmul.mubr.bf16.gmra.mrb[0].mxu0 %v82
    %v350 = vpop.f32.mrb[0].mxu0
    %v351 = vadd.f32 0.0, %v350
    %v352 = vpop.f32.mrb[0].mxu0
    %v353 = vadd.f32 0.0, %v352
    %v354 = vpop.f32.mrb[0].mxu0
    %v355 = vpop.f32.mrb[0].mxu0
    %356 = vdwg.mxu0
    %v365 = vunpack.c.l.b16 %v74
    %v366 = vunpack.c.h.b16 %v74
    %v367 = vunpack.c.l.b16 %v75
    %v368 = vunpack.c.h.b16 %v75
    %v369 = vunpack.c.l.b16 %v76
    %v370 = vunpack.c.h.b16 %v76
    %v371 = vunpack.c.l.b16 %v77
    %v372 = vunpack.c.h.b16 %v77
    %v373 = vunpack.c.l.b16 %v78
    %v374 = vunpack.c.h.b16 %v78
    %v375 = vunpack.c.l.b16 %v79
    %v376 = vunpack.c.h.b16 %v79
    %v377 = vunpack.c.l.b16 %v80
    %v378 = vunpack.c.h.b16 %v80
    %v379 = vunpack.c.l.b16 %v81
    %v380 = vunpack.c.h.b16 %v81
    %v381 = vpack.c.b16 %v369, %v365
    %v382 = vpack.c.b16 %v370, %v366
    %v383 = vpack.c.b16 %v371, %v367
    %v384 = vpack.c.b16 %v372, %v368
    %v385 = vpack.c.b16 %v377, %v373
    %v386 = vpack.c.b16 %v378, %v374
    %v387 = vpack.c.b16 %v379, %v375
    %v388 = vpack.c.b16 %v380, %v376
    %vm397 = vcmask 261120
    %v399 = vsel %vm397, %v73, 0
    %401 = vmatprep.subr.bf16.mxu0 %v382
    %402 = vmatpush1.bf16.msra.mxu0 %v381
    %403 = vmatprep.subr.bf16.mxu0 %v386
    %404 = vmatpush1.bf16.msra.mxu0 %v385
    %405 = vmatprep.subr.bf16.mxu0 0
    %406 = vmatpush1.bf16.msra.mxu0 0
    %407 = vmatprep.subr.bf16.mxu0 0
    %408 = vmatpush1.bf16.msra.mxu0 0
    %409 = vmatprep.subr.bf16.mxu0 0
    %410 = vmatpush1.bf16.msra.mxu0 0
    %411 = vmatprep.subr.bf16.mxu0 0
    %412 = vmatpush1.bf16.msra.mxu0 0
    %413 = vmatprep.subr.bf16.mxu0 0
    %414 = vmatpush1.bf16.msra.mxu0 0
    %415 = vmatprep.subr.bf16.mxu0 0
    %416 = vmatpush1.bf16.msra.mxu0 0
    %417 = vmatprep.subr.bf16.mxu0 0
    %418 = vmatpush1.bf16.msra.mxu0 0
    %419 = vmatprep.subr.bf16.mxu0 0
    %420 = vmatpush1.bf16.msra.mxu0 0
    %421 = vmatprep.subr.bf16.mxu0 0
    %422 = vmatpush1.bf16.msra.mxu0 0
    %423 = vmatprep.subr.bf16.mxu0 0
    %424 = vmatpush1.bf16.msra.mxu0 0
    %425 = vmatprep.subr.bf16.mxu0 0
    %426 = vmatpush1.bf16.msra.mxu0 0
    %427 = vmatprep.subr.bf16.mxu0 0
    %428 = vmatpush1.bf16.msra.mxu0 0
    %429 = vmatprep.subr.bf16.mxu0 0
    %430 = vmatpush1.bf16.msra.mxu0 0
    %431 = vmatprep.subr.bf16.mxu0 0
    %432 = vmatpush1.bf16.msra.mxu0 0
    %433 = vmatprep.mubr.bf16.mxu0 0
    %434 = vmatmul.mubr.bf16.gmra.mrb[0].mxu0 %v399
    %v435 = vpop.f32.mrb[0].mxu0
    %v436 = vadd.f32 %v310, %v435
    %v437 = vpop.f32.mrb[0].mxu0
    %v438 = vadd.f32 %v312, %v437
    %v439 = vpop.f32.mrb[0].mxu0
    %v440 = vpop.f32.mrb[0].mxu0
    %441 = vdwg.mxu0
    %442 = vmatprep.subr.bf16.mxu0 %v384
    %443 = vmatpush1.bf16.msra.mxu0 %v383
    %444 = vmatprep.subr.bf16.mxu0 %v388
    %445 = vmatpush1.bf16.msra.mxu0 %v387
    %446 = vmatprep.subr.bf16.mxu0 0
    %447 = vmatpush1.bf16.msra.mxu0 0
    %448 = vmatprep.subr.bf16.mxu0 0
    %449 = vmatpush1.bf16.msra.mxu0 0
    %450 = vmatprep.subr.bf16.mxu0 0
    %451 = vmatpush1.bf16.msra.mxu0 0
    %452 = vmatprep.subr.bf16.mxu0 0
    %453 = vmatpush1.bf16.msra.mxu0 0
    %454 = vmatprep.subr.bf16.mxu0 0
    %455 = vmatpush1.bf16.msra.mxu0 0
    %456 = vmatprep.subr.bf16.mxu0 0
    %457 = vmatpush1.bf16.msra.mxu0 0
    %458 = vmatprep.subr.bf16.mxu0 0
    %459 = vmatpush1.bf16.msra.mxu0 0
    %460 = vmatprep.subr.bf16.mxu0 0
    %461 = vmatpush1.bf16.msra.mxu0 0
    %462 = vmatprep.subr.bf16.mxu0 0
    %463 = vmatpush1.bf16.msra.mxu0 0
    %464 = vmatprep.subr.bf16.mxu0 0
    %465 = vmatpush1.bf16.msra.mxu0 0
    %466 = vmatprep.subr.bf16.mxu0 0
    %467 = vmatpush1.bf16.msra.mxu0 0
    %468 = vmatprep.subr.bf16.mxu0 0
    %469 = vmatpush1.bf16.msra.mxu0 0
    %470 = vmatprep.subr.bf16.mxu0 0
    %471 = vmatpush1.bf16.msra.mxu0 0
    %472 = vmatprep.subr.bf16.mxu0 0
    %473 = vmatpush1.bf16.msra.mxu0 0
    %474 = vmatprep.mubr.bf16.mxu0 0
    %475 = vmatmul.mubr.bf16.gmra.mrb[0].mxu0 %v399
    %v476 = vpop.f32.mrb[0].mxu0
    %v477 = vadd.f32 %v351, %v476
    %v478 = vpop.f32.mrb[0].mxu0
    %v479 = vadd.f32 %v353, %v478
    %v480 = vpop.f32.mrb[0].mxu0
    %v481 = vpop.f32.mrb[0].mxu0
    %482 = vdwg.mxu0
    %v484 = vlaneseq
    %v485 = vshrl.u32 %v484, 7
    %v486 = vsub.s32 0, %v485
    %v487 = vrot.slane %v70, %v486
    %v488 = vlaneseq
    %v489 = vshrl.u32 %v488, 7
    %v490 = vsub.s32 1, %v489
    %v491 = vrot.slane %v70, %v490
    %v492 = vlaneseq
    %v493 = vshrl.u32 %v492, 7
    %v494 = vsub.s32 2, %v493
    %v495 = vrot.slane %v70, %v494
    %v496 = vlaneseq
    %v497 = vshrl.u32 %v496, 7
    %v498 = vsub.s32 3, %v497
    %v499 = vrot.slane %v70, %v498
    %v504 = vadd.f32 %v436, %v487
    %v505 = vadd.f32 %v438, %v491
    %v506 = vadd.f32 %v477, %v495
    %v507 = vadd.f32 %v479, %v499
    %v508 = vxor.u32 %v504, 2147483648
    %v509 = vmul.f32 %v508, 1.442695
    %v510 = vpow.pop %v509
    %v511 = vadd.f32 %v510, 1.0
    %v512 = vrcp.pop %v511
    %v513 = vmul.f32 1.0, %v512
    %v514 = vxor.u32 %v505, 2147483648
    %v515 = vmul.f32 %v514, 1.442695
    %v516 = vpow.pop %v515
    %v517 = vadd.f32 %v516, 1.0
    %v518 = vrcp.pop %v517
    %v519 = vmul.f32 1.0, %v518
    %v520 = vtanh.pop %v506
    %v521 = vxor.u32 %v507, 2147483648
    %v522 = vmul.f32 %v521, 1.442695
    %v523 = vpow.pop %v522
    %v524 = vadd.f32 %v523, 1.0
    %v525 = vrcp.pop %v524
    %v526 = vmul.f32 1.0, %v525
    %v527 = vmul.f32 %v519, %v72
    %v528 = vmul.f32 %v513, %v520
    %v529 = vadd.f32 %v527, %v528
    %v530 = vtanh.pop %v529
    %v531 = vmul.f32 %v526, %v530
    %v532 = vpack.c.bf16 %v531, %v531
    %533 = vst [vmem:[#allocation10] sm:$0x1] %v532
    %s534 = scalar_lea.vmem [#allocation4], 1
    %v535 = vld [vmem:[%s534] sm:$0x1]
    %v536 = vld [vmem:[#allocation7] sm:$0xff]
    %v537 = vld [vmem:[#allocation7 + $0x8] sm:$0xff]
    %v538 = vld [vmem:[#allocation7 + $0x10] sm:$0xff]
    %v539 = vld [vmem:[#allocation7 + $0x18] sm:$0xff]
    %v540 = vld [vmem:[#allocation7 + $0x20] sm:$0xff]
    %v541 = vld [vmem:[#allocation7 + $0x28] sm:$0xff]
    %v542 = vld [vmem:[#allocation7 + $0x30] sm:$0xff]
    %v543 = vld [vmem:[#allocation7 + $0x38] sm:$0xff]
    %v544 = vld [vmem:[#allocation9] sm:$0xff]
    %v545 = vld [vmem:[#allocation9 + $0x8] sm:$0xff]
    %v546 = vld [vmem:[#allocation9 + $0x10] sm:$0xff]
    %v547 = vld [vmem:[#allocation9 + $0x18] sm:$0xff]
    %v548 = vld [vmem:[#allocation9 + $0x20] sm:$0xff]
    %v549 = vld [vmem:[#allocation9 + $0x28] sm:$0xff]
    %v550 = vld [vmem:[#allocation9 + $0x30] sm:$0xff]
    %v551 = vld [vmem:[#allocation9 + $0x38] sm:$0xff]
    %v552 = vld [vmem:[#allocation9 + $0x40] sm:$0xff]
    %v553 = vld [vmem:[#allocation9 + $0x48] sm:$0xff]
    %v554 = vld [vmem:[#allocation9 + $0x50] sm:$0xff]
    %v555 = vld [vmem:[#allocation9 + $0x58] sm:$0xff]
    %v556 = vld [vmem:[#allocation9 + $0x60] sm:$0xff]
    %v557 = vld [vmem:[#allocation9 + $0x68] sm:$0xff]
    %v558 = vld [vmem:[#allocation9 + $0x70] sm:$0xff]
    %v559 = vld [vmem:[#allocation9 + $0x78] sm:$0xff]
    %v560 = vld [vmem:[#allocation9 + $0x80] sm:$0xff]
    %v561 = vld [vmem:[#allocation9 + $0x88] sm:$0xff]
    %v562 = vld [vmem:[#allocation9 + $0x90] sm:$0xff]
    %v563 = vld [vmem:[#allocation9 + $0x98] sm:$0xff]
    %v564 = vld [vmem:[#allocation9 + $0xa0] sm:$0xff]
    %v565 = vld [vmem:[#allocation9 + $0xa8] sm:$0xff]
    %v566 = vld [vmem:[#allocation9 + $0xb0] sm:$0xff]
    %v567 = vld [vmem:[#allocation9 + $0xb8] sm:$0xff]
    %v568 = vld [vmem:[#allocation9 + $0xc0] sm:$0xff]
    %v569 = vld [vmem:[#allocation9 + $0xc8] sm:$0xff]
    %v570 = vld [vmem:[#allocation9 + $0xd0] sm:$0xff]
    %v571 = vld [vmem:[#allocation9 + $0xd8] sm:$0xff]
    %v572 = vld [vmem:[#allocation9 + $0xe0] sm:$0xff]
    %v573 = vld [vmem:[#allocation9 + $0xe8] sm:$0xff]
    %v574 = vld [vmem:[#allocation9 + $0xf0] sm:$0xff]
    %v575 = vld [vmem:[#allocation9 + $0xf8] sm:$0xff]
    %v608 = vunpack.c.l.b16 %v544
    %v609 = vunpack.c.h.b16 %v544
    %v610 = vunpack.c.l.b16 %v545
    %v611 = vunpack.c.h.b16 %v545
    %v612 = vunpack.c.l.b16 %v546
    %v613 = vunpack.c.h.b16 %v546
    %v614 = vunpack.c.l.b16 %v547
    %v615 = vunpack.c.h.b16 %v547
    %v616 = vunpack.c.l.b16 %v548
    %v617 = vunpack.c.h.b16 %v548
    %v618 = vunpack.c.l.b16 %v549
    %v619 = vunpack.c.h.b16 %v549
    %v620 = vunpack.c.l.b16 %v550
    %v621 = vunpack.c.h.b16 %v550
    %v622 = vunpack.c.l.b16 %v551
    %v623 = vunpack.c.h.b16 %v551
    %v624 = vunpack.c.l.b16 %v552
    %v625 = vunpack.c.h.b16 %v552
    %v626 = vunpack.c.l.b16 %v553
    %v627 = vunpack.c.h.b16 %v553
    %v628 = vunpack.c.l.b16 %v554
    %v629 = vunpack.c.h.b16 %v554
    %v630 = vunpack.c.l.b16 %v555
    %v631 = vunpack.c.h.b16 %v555
    %v632 = vunpack.c.l.b16 %v556
    %v633 = vunpack.c.h.b16 %v556
    %v634 = vunpack.c.l.b16 %v557
    %v635 = vunpack.c.h.b16 %v557
    %v636 = vunpack.c.l.b16 %v558
    %v637 = vunpack.c.h.b16 %v558
    %v638 = vunpack.c.l.b16 %v559
    %v639 = vunpack.c.h.b16 %v559
    %v640 = vunpack.c.l.b16 %v560
    %v641 = vunpack.c.h.b16 %v560
    %v642 = vunpack.c.l.b16 %v561
    %v643 = vunpack.c.h.b16 %v561
    %v644 = vunpack.c.l.b16 %v562
    %v645 = vunpack.c.h.b16 %v562
    %v646 = vunpack.c.l.b16 %v563
    %v647 = vunpack.c.h.b16 %v563
    %v648 = vunpack.c.l.b16 %v564
    %v649 = vunpack.c.h.b16 %v564
    %v650 = vunpack.c.l.b16 %v565
    %v651 = vunpack.c.h.b16 %v565
    %v652 = vunpack.c.l.b16 %v566
    %v653 = vunpack.c.h.b16 %v566
    %v654 = vunpack.c.l.b16 %v567
    %v655 = vunpack.c.h.b16 %v567
    %v656 = vunpack.c.l.b16 %v568
    %v657 = vunpack.c.h.b16 %v568
    %v658 = vunpack.c.l.b16 %v569
    %v659 = vunpack.c.h.b16 %v569
    %v660 = vunpack.c.l.b16 %v570
    %v661 = vunpack.c.h.b16 %v570
    %v662 = vunpack.c.l.b16 %v571
    %v663 = vunpack.c.h.b16 %v571
    %v664 = vunpack.c.l.b16 %v572
    %v665 = vunpack.c.h.b16 %v572
    %v666 = vunpack.c.l.b16 %v573
    %v667 = vunpack.c.h.b16 %v573
    %v668 = vunpack.c.l.b16 %v574
    %v669 = vunpack.c.h.b16 %v574
    %v670 = vunpack.c.l.b16 %v575
    %v671 = vunpack.c.h.b16 %v575
    %v672 = vpack.c.b16 %v612, %v608
    %v673 = vpack.c.b16 %v613, %v609
    %v674 = vpack.c.b16 %v614, %v610
    %v675 = vpack.c.b16 %v615, %v611
    %v676 = vpack.c.b16 %v620, %v616
    %v677 = vpack.c.b16 %v621, %v617
    %v678 = vpack.c.b16 %v622, %v618
    %v679 = vpack.c.b16 %v623, %v619
    %v680 = vpack.c.b16 %v628, %v624
    %v681 = vpack.c.b16 %v629, %v625
    %v682 = vpack.c.b16 %v630, %v626
    %v683 = vpack.c.b16 %v631, %v627
    %v684 = vpack.c.b16 %v636, %v632
    %v685 = vpack.c.b16 %v637, %v633
    %v686 = vpack.c.b16 %v638, %v634
    %v687 = vpack.c.b16 %v639, %v635
    %v688 = vpack.c.b16 %v644, %v640
    %v689 = vpack.c.b16 %v645, %v641
    %v690 = vpack.c.b16 %v646, %v642
    %v691 = vpack.c.b16 %v647, %v643
    %v692 = vpack.c.b16 %v652, %v648
    %v693 = vpack.c.b16 %v653, %v649
    %v694 = vpack.c.b16 %v654, %v650
    %v695 = vpack.c.b16 %v655, %v651
    %v696 = vpack.c.b16 %v660, %v656
    %v697 = vpack.c.b16 %v661, %v657
    %v698 = vpack.c.b16 %v662, %v658
    %v699 = vpack.c.b16 %v663, %v659
    %v700 = vpack.c.b16 %v668, %v664
    %v701 = vpack.c.b16 %v669, %v665
    %v702 = vpack.c.b16 %v670, %v666
    %v703 = vpack.c.b16 %v671, %v667
    %736 = vmatprep.subr.bf16.mxu0 %v673
    %737 = vmatpush1.bf16.msra.mxu0 %v672
    %738 = vmatprep.subr.bf16.mxu0 %v677
    %739 = vmatpush1.bf16.msra.mxu0 %v676
    %740 = vmatprep.subr.bf16.mxu0 %v681
    %741 = vmatpush1.bf16.msra.mxu0 %v680
    %742 = vmatprep.subr.bf16.mxu0 %v685
    %743 = vmatpush1.bf16.msra.mxu0 %v684
    %744 = vmatprep.subr.bf16.mxu0 %v689
    %745 = vmatpush1.bf16.msra.mxu0 %v688
    %746 = vmatprep.subr.bf16.mxu0 %v693
    %747 = vmatpush1.bf16.msra.mxu0 %v692
    %748 = vmatprep.subr.bf16.mxu0 %v697
    %749 = vmatpush1.bf16.msra.mxu0 %v696
    %750 = vmatprep.subr.bf16.mxu0 %v701
    %751 = vmatpush1.bf16.msra.mxu0 %v700
    %752 = vmatprep.subr.bf16.mxu0 0
    %753 = vmatpush1.bf16.msra.mxu0 0
    %754 = vmatprep.subr.bf16.mxu0 0
    %755 = vmatpush1.bf16.msra.mxu0 0
    %756 = vmatprep.subr.bf16.mxu0 0
    %757 = vmatpush1.bf16.msra.mxu0 0
    %758 = vmatprep.subr.bf16.mxu0 0
    %759 = vmatpush1.bf16.msra.mxu0 0
    %760 = vmatprep.subr.bf16.mxu0 0
    %761 = vmatpush1.bf16.msra.mxu0 0
    %762 = vmatprep.subr.bf16.mxu0 0
    %763 = vmatpush1.bf16.msra.mxu0 0
    %764 = vmatprep.subr.bf16.mxu0 0
    %765 = vmatpush1.bf16.msra.mxu0 0
    %766 = vmatprep.subr.bf16.mxu0 0
    %767 = vmatpush1.bf16.msra.mxu0 0
    %768 = vmatprep.mubr.bf16.mxu0 0
    %769 = vmatmul.mubr.bf16.gmra.mrb[0].mxu0 %v532
    %v770 = vpop.f32.mrb[0].mxu0
    %v771 = vadd.f32 0.0, %v770
    %v772 = vpop.f32.mrb[0].mxu0
    %v773 = vadd.f32 0.0, %v772
    %v774 = vpop.f32.mrb[0].mxu0
    %v775 = vpop.f32.mrb[0].mxu0
    %776 = vdwg.mxu0
    %777 = vmatprep.subr.bf16.mxu0 %v675
    %778 = vmatpush1.bf16.msra.mxu0 %v674
    %779 = vmatprep.subr.bf16.mxu0 %v679
    %780 = vmatpush1.bf16.msra.mxu0 %v678
    %781 = vmatprep.subr.bf16.mxu0 %v683
    %782 = vmatpush1.bf16.msra.mxu0 %v682
    %783 = vmatprep.subr.bf16.mxu0 %v687
    %784 = vmatpush1.bf16.msra.mxu0 %v686
    %785 = vmatprep.subr.bf16.mxu0 %v691
    %786 = vmatpush1.bf16.msra.mxu0 %v690
    %787 = vmatprep.subr.bf16.mxu0 %v695
    %788 = vmatpush1.bf16.msra.mxu0 %v694
    %789 = vmatprep.subr.bf16.mxu0 %v699
    %790 = vmatpush1.bf16.msra.mxu0 %v698
    %791 = vmatprep.subr.bf16.mxu0 %v703
    %792 = vmatpush1.bf16.msra.mxu0 %v702
    %793 = vmatprep.subr.bf16.mxu0 0
    %794 = vmatpush1.bf16.msra.mxu0 0
    %795 = vmatprep.subr.bf16.mxu0 0
    %796 = vmatpush1.bf16.msra.mxu0 0
    %797 = vmatprep.subr.bf16.mxu0 0
    %798 = vmatpush1.bf16.msra.mxu0 0
    %799 = vmatprep.subr.bf16.mxu0 0
    %800 = vmatpush1.bf16.msra.mxu0 0
    %801 = vmatprep.subr.bf16.mxu0 0
    %802 = vmatpush1.bf16.msra.mxu0 0
    %803 = vmatprep.subr.bf16.mxu0 0
    %804 = vmatpush1.bf16.msra.mxu0 0
    %805 = vmatprep.subr.bf16.mxu0 0
    %806 = vmatpush1.bf16.msra.mxu0 0
    %807 = vmatprep.subr.bf16.mxu0 0
    %808 = vmatpush1.bf16.msra.mxu0 0
    %809 = vmatprep.mubr.bf16.mxu0 0
    %810 = vmatmul.mubr.bf16.gmra.mrb[0].mxu0 %v532
    %v811 = vpop.f32.mrb[0].mxu0
    %v812 = vadd.f32 0.0, %v811
    %v813 = vpop.f32.mrb[0].mxu0
    %v814 = vadd.f32 0.0, %v813
    %v815 = vpop.f32.mrb[0].mxu0
    %v816 = vpop.f32.mrb[0].mxu0
    %817 = vdwg.mxu0
    %v826 = vunpack.c.l.b16 %v536
    %v827 = vunpack.c.h.b16 %v536
    %v828 = vunpack.c.l.b16 %v537
    %v829 = vunpack.c.h.b16 %v537
    %v830 = vunpack.c.l.b16 %v538
    %v831 = vunpack.c.h.b16 %v538
    %v832 = vunpack.c.l.b16 %v539
    %v833 = vunpack.c.h.b16 %v539
    %v834 = vunpack.c.l.b16 %v540
    %v835 = vunpack.c.h.b16 %v540
    %v836 = vunpack.c.l.b16 %v541
    %v837 = vunpack.c.h.b16 %v541
    %v838 = vunpack.c.l.b16 %v542
    %v839 = vunpack.c.h.b16 %v542
    %v840 = vunpack.c.l.b16 %v543
    %v841 = vunpack.c.h.b16 %v543
    %v842 = vpack.c.b16 %v830, %v826
    %v843 = vpack.c.b16 %v831, %v827
    %v844 = vpack.c.b16 %v832, %v828
    %v845 = vpack.c.b16 %v833, %v829
    %v846 = vpack.c.b16 %v838, %v834
    %v847 = vpack.c.b16 %v839, %v835
    %v848 = vpack.c.b16 %v840, %v836
    %v849 = vpack.c.b16 %v841, %v837
    %v859 = vsel %vm397, %v535, 0
    %861 = vmatprep.subr.bf16.mxu0 %v843
    %862 = vmatpush1.bf16.msra.mxu0 %v842
    %863 = vmatprep.subr.bf16.mxu0 %v847
    %864 = vmatpush1.bf16.msra.mxu0 %v846
    %865 = vmatprep.subr.bf16.mxu0 0
    %866 = vmatpush1.bf16.msra.mxu0 0
    %867 = vmatprep.subr.bf16.mxu0 0
    %868 = vmatpush1.bf16.msra.mxu0 0
    %869 = vmatprep.subr.bf16.mxu0 0
    %870 = vmatpush1.bf16.msra.mxu0 0
    %871 = vmatprep.subr.bf16.mxu0 0
    %872 = vmatpush1.bf16.msra.mxu0 0
    %873 = vmatprep.subr.bf16.mxu0 0
    %874 = vmatpush1.bf16.msra.mxu0 0
    %875 = vmatprep.subr.bf16.mxu0 0
    %876 = vmatpush1.bf16.msra.mxu0 0
    %877 = vmatprep.subr.bf16.mxu0 0
    %878 = vmatpush1.bf16.msra.mxu0 0
    %879 = vmatprep.subr.bf16.mxu0 0
    %880 = vmatpush1.bf16.msra.mxu0 0
    %881 = vmatprep.subr.bf16.mxu0 0
    %882 = vmatpush1.bf16.msra.mxu0 0
    %883 = vmatprep.subr.bf16.mxu0 0
    %884 = vmatpush1.bf16.msra.mxu0 0
    %885 = vmatprep.subr.bf16.mxu0 0
    %886 = vmatpush1.bf16.msra.mxu0 0
    %887 = vmatprep.subr.bf16.mxu0 0
    %888 = vmatpush1.bf16.msra.mxu0 0
    %889 = vmatprep.subr.bf16.mxu0 0
    %890 = vmatpush1.bf16.msra.mxu0 0
    %891 = vmatprep.subr.bf16.mxu0 0
    %892 = vmatpush1.bf16.msra.mxu0 0
    %893 = vmatprep.mubr.bf16.mxu0 0
    %894 = vmatmul.mubr.bf16.gmra.mrb[0].mxu0 %v859
    %v895 = vpop.f32.mrb[0].mxu0
    %v896 = vadd.f32 %v771, %v895
    %v897 = vpop.f32.mrb[0].mxu0
    %v898 = vadd.f32 %v773, %v897
    %v899 = vpop.f32.mrb[0].mxu0
    %v900 = vpop.f32.mrb[0].mxu0
    %901 = vdwg.mxu0
    %902 = vmatprep.subr.bf16.mxu0 %v845
    %903 = vmatpush1.bf16.msra.mxu0 %v844
    %904 = vmatprep.subr.bf16.mxu0 %v849
    %905 = vmatpush1.bf16.msra.mxu0 %v848
    %906 = vmatprep.subr.bf16.mxu0 0
    %907 = vmatpush1.bf16.msra.mxu0 0
    %908 = vmatprep.subr.bf16.mxu0 0
    %909 = vmatpush1.bf16.msra.mxu0 0
    %910 = vmatprep.subr.bf16.mxu0 0
    %911 = vmatpush1.bf16.msra.mxu0 0
    %912 = vmatprep.subr.bf16.mxu0 0
    %913 = vmatpush1.bf16.msra.mxu0 0
    %914 = vmatprep.subr.bf16.mxu0 0
    %915 = vmatpush1.bf16.msra.mxu0 0
    %916 = vmatprep.subr.bf16.mxu0 0
    %917 = vmatpush1.bf16.msra.mxu0 0
    %918 = vmatprep.subr.bf16.mxu0 0
    %919 = vmatpush1.bf16.msra.mxu0 0
    %920 = vmatprep.subr.bf16.mxu0 0
    %921 = vmatpush1.bf16.msra.mxu0 0
    %922 = vmatprep.subr.bf16.mxu0 0
    %923 = vmatpush1.bf16.msra.mxu0 0
    %924 = vmatprep.subr.bf16.mxu0 0
    %925 = vmatpush1.bf16.msra.mxu0 0
    %926 = vmatprep.subr.bf16.mxu0 0
    %927 = vmatpush1.bf16.msra.mxu0 0
    %928 = vmatprep.subr.bf16.mxu0 0
    %929 = vmatpush1.bf16.msra.mxu0 0
    %930 = vmatprep.subr.bf16.mxu0 0
    %931 = vmatpush1.bf16.msra.mxu0 0
    %932 = vmatprep.subr.bf16.mxu0 0
    %933 = vmatpush1.bf16.msra.mxu0 0
    %934 = vmatprep.mubr.bf16.mxu0 0
    %935 = vmatmul.mubr.bf16.gmra.mrb[0].mxu0 %v859
    %v936 = vpop.f32.mrb[0].mxu0
    %v937 = vadd.f32 %v812, %v936
    %v938 = vpop.f32.mrb[0].mxu0
    %v939 = vadd.f32 %v814, %v938
    %v940 = vpop.f32.mrb[0].mxu0
    %v941 = vpop.f32.mrb[0].mxu0
    %942 = vdwg.mxu0
    %v943 = vadd.f32 %v896, %v487
    %v944 = vadd.f32 %v898, %v491
    %v945 = vadd.f32 %v937, %v495
    %v946 = vadd.f32 %v939, %v499
    %v947 = vxor.u32 %v943, 2147483648
    %v948 = vmul.f32 %v947, 1.442695
    %v949 = vpow.pop %v948
    %v950 = vadd.f32 %v949, 1.0
    %v951 = vrcp.pop %v950
    %v952 = vmul.f32 1.0, %v951
    %v953 = vxor.u32 %v944, 2147483648
    %v954 = vmul.f32 %v953, 1.442695
    %v955 = vpow.pop %v954
    %v956 = vadd.f32 %v955, 1.0
    %v957 = vrcp.pop %v956
    %v958 = vmul.f32 1.0, %v957
    %v959 = vtanh.pop %v945
    %v960 = vxor.u32 %v946, 2147483648
    %v961 = vmul.f32 %v960, 1.442695
    %v962 = vpow.pop %v961
    %v963 = vadd.f32 %v962, 1.0
    %v964 = vrcp.pop %v963
    %v965 = vmul.f32 1.0, %v964
    %v966 = vmul.f32 %v958, %v529
    %v967 = vmul.f32 %v952, %v959
    %v968 = vadd.f32 %v966, %v967
    %v969 = vtanh.pop %v968
    %v970 = vmul.f32 %v965, %v969
    %v971 = vpack.c.bf16 %v970, %v970
    %s972 = scalar_lea.vmem [#allocation10], 1
    %973 = vst [vmem:[%s972] sm:$0x1] %v971
    %s974 = scalar_lea.vmem [#allocation4], 2
    %v975 = vld [vmem:[%s974] sm:$0x1]
    %v976 = vld [vmem:[#allocation7] sm:$0xff]
    %v977 = vld [vmem:[#allocation7 + $0x8] sm:$0xff]
    %v978 = vld [vmem:[#allocation7 + $0x10] sm:$0xff]
    %v979 = vld [vmem:[#allocation7 + $0x18] sm:$0xff]
    %v980 = vld [vmem:[#allocation7 + $0x20] sm:$0xff]
    %v981 = vld [vmem:[#allocation7 + $0x28] sm:$0xff]
    %v982 = vld [vmem:[#allocation7 + $0x30] sm:$0xff]
    %v983 = vld [vmem:[#allocation7 + $0x38] sm:$0xff]
    %v984 = vld [vmem:[#allocation9] sm:$0xff]
    %v985 = vld [vmem:[#allocation9 + $0x8] sm:$0xff]
    %v986 = vld [vmem:[#allocation9 + $0x10] sm:$0xff]
    %v987 = vld [vmem:[#allocation9 + $0x18] sm:$0xff]
    %v988 = vld [vmem:[#allocation9 + $0x20] sm:$0xff]
    %v989 = vld [vmem:[#allocation9 + $0x28] sm:$0xff]
    %v990 = vld [vmem:[#allocation9 + $0x30] sm:$0xff]
    %v991 = vld [vmem:[#allocation9 + $0x38] sm:$0xff]
    %v992 = vld [vmem:[#allocation9 + $0x40] sm:$0xff]
    %v993 = vld [vmem:[#allocation9 + $0x48] sm:$0xff]
    %v994 = vld [vmem:[#allocation9 + $0x50] sm:$0xff]
    %v995 = vld [vmem:[#allocation9 + $0x58] sm:$0xff]
    %v996 = vld [vmem:[#allocation9 + $0x60] sm:$0xff]
    %v997 = vld [vmem:[#allocation9 + $0x68] sm:$0xff]
    %v998 = vld [vmem:[#allocation9 + $0x70] sm:$0xff]
    %v999 = vld [vmem:[#allocation9 + $0x78] sm:$0xff]
    %v1000 = vld [vmem:[#allocation9 + $0x80] sm:$0xff]
    %v1001 = vld [vmem:[#allocation9 + $0x88] sm:$0xff]
    %v1002 = vld [vmem:[#allocation9 + $0x90] sm:$0xff]
    %v1003 = vld [vmem:[#allocation9 + $0x98] sm:$0xff]
    %v1004 = vld [vmem:[#allocation9 + $0xa0] sm:$0xff]
    %v1005 = vld [vmem:[#allocation9 + $0xa8] sm:$0xff]
    %v1006 = vld [vmem:[#allocation9 + $0xb0] sm:$0xff]
    %v1007 = vld [vmem:[#allocation9 + $0xb8] sm:$0xff]
    %v1008 = vld [vmem:[#allocation9 + $0xc0] sm:$0xff]
    %v1009 = vld [vmem:[#allocation9 + $0xc8] sm:$0xff]
    %v1010 = vld [vmem:[#allocation9 + $0xd0] sm:$0xff]
    %v1011 = vld [vmem:[#allocation9 + $0xd8] sm:$0xff]
    %v1012 = vld [vmem:[#allocation9 + $0xe0] sm:$0xff]
    %v1013 = vld [vmem:[#allocation9 + $0xe8] sm:$0xff]
    %v1014 = vld [vmem:[#allocation9 + $0xf0] sm:$0xff]
    %v1015 = vld [vmem:[#allocation9 + $0xf8] sm:$0xff]
    %v1048 = vunpack.c.l.b16 %v984
    %v1049 = vunpack.c.h.b16 %v984
    %v1050 = vunpack.c.l.b16 %v985
    %v1051 = vunpack.c.h.b16 %v985
    %v1052 = vunpack.c.l.b16 %v986
    %v1053 = vunpack.c.h.b16 %v986
    %v1054 = vunpack.c.l.b16 %v987
    %v1055 = vunpack.c.h.b16 %v987
    %v1056 = vunpack.c.l.b16 %v988
    %v1057 = vunpack.c.h.b16 %v988
    %v1058 = vunpack.c.l.b16 %v989
    %v1059 = vunpack.c.h.b16 %v989
    %v1060 = vunpack.c.l.b16 %v990
    %v1061 = vunpack.c.h.b16 %v990
    %v1062 = vunpack.c.l.b16 %v991
    %v1063 = vunpack.c.h.b16 %v991
    %v1064 = vunpack.c.l.b16 %v992
    %v1065 = vunpack.c.h.b16 %v992
    %v1066 = vunpack.c.l.b16 %v993
    %v1067 = vunpack.c.h.b16 %v993
    %v1068 = vunpack.c.l.b16 %v994
    %v1069 = vunpack.c.h.b16 %v994
    %v1070 = vunpack.c.l.b16 %v995
    %v1071 = vunpack.c.h.b16 %v995
    %v1072 = vunpack.c.l.b16 %v996
    %v1073 = vunpack.c.h.b16 %v996
    %v1074 = vunpack.c.l.b16 %v997
    %v1075 = vunpack.c.h.b16 %v997
    %v1076 = vunpack.c.l.b16 %v998
    %v1077 = vunpack.c.h.b16 %v998
    %v1078 = vunpack.c.l.b16 %v999
    %v1079 = vunpack.c.h.b16 %v999
    %v1080 = vunpack.c.l.b16 %v1000
    %v1081 = vunpack.c.h.b16 %v1000
    %v1082 = vunpack.c.l.b16 %v1001
    %v1083 = vunpack.c.h.b16 %v1001
    %v1084 = vunpack.c.l.b16 %v1002
    %v1085 = vunpack.c.h.b16 %v1002
    %v1086 = vunpack.c.l.b16 %v1003
    %v1087 = vunpack.c.h.b16 %v1003
    %v1088 = vunpack.c.l.b16 %v1004
    %v1089 = vunpack.c.h.b16 %v1004
    %v1090 = vunpack.c.l.b16 %v1005
    %v1091 = vunpack.c.h.b16 %v1005
    %v1092 = vunpack.c.l.b16 %v1006
    %v1093 = vunpack.c.h.b16 %v1006
    %v1094 = vunpack.c.l.b16 %v1007
    %v1095 = vunpack.c.h.b16 %v1007
    %v1096 = vunpack.c.l.b16 %v1008
    %v1097 = vunpack.c.h.b16 %v1008
    %v1098 = vunpack.c.l.b16 %v1009
    %v1099 = vunpack.c.h.b16 %v1009
    %v1100 = vunpack.c.l.b16 %v1010
    %v1101 = vunpack.c.h.b16 %v1010
    %v1102 = vunpack.c.l.b16 %v1011
    %v1103 = vunpack.c.h.b16 %v1011
    %v1104 = vunpack.c.l.b16 %v1012
    %v1105 = vunpack.c.h.b16 %v1012
    %v1106 = vunpack.c.l.b16 %v1013
    %v1107 = vunpack.c.h.b16 %v1013
    %v1108 = vunpack.c.l.b16 %v1014
    %v1109 = vunpack.c.h.b16 %v1014
    %v1110 = vunpack.c.l.b16 %v1015
    %v1111 = vunpack.c.h.b16 %v1015
    %v1112 = vpack.c.b16 %v1052, %v1048
    %v1113 = vpack.c.b16 %v1053, %v1049
    %v1114 = vpack.c.b16 %v1054, %v1050
    %v1115 = vpack.c.b16 %v1055, %v1051
    %v1116 = vpack.c.b16 %v1060, %v1056
    %v1117 = vpack.c.b16 %v1061, %v1057
    %v1118 = vpack.c.b16 %v1062, %v1058
    %v1119 = vpack.c.b16 %v1063, %v1059
    %v1120 = vpack.c.b16 %v1068, %v1064
    %v1121 = vpack.c.b16 %v1069, %v1065
    %v1122 = vpack.c.b16 %v1070, %v1066
    %v1123 = vpack.c.b16 %v1071, %v1067
    %v1124 = vpack.c.b16 %v1076, %v1072
    %v1125 = vpack.c.b16 %v1077, %v1073
    %v1126 = vpack.c.b16 %v1078, %v1074
    %v1127 = vpack.c.b16 %v1079, %v1075
    %v1128 = vpack.c.b16 %v1084, %v1080
    %v1129 = vpack.c.b16 %v1085, %v1081
    %v1130 = vpack.c.b16 %v1086, %v1082
    %v1131 = vpack.c.b16 %v1087, %v1083
    %v1132 = vpack.c.b16 %v1092, %v1088
    %v1133 = vpack.c.b16 %v1093, %v1089
    %v1134 = vpack.c.b16 %v1094, %v1090
    %v1135 = vpack.c.b16 %v1095, %v1091
    %v1136 = vpack.c.b16 %v1100, %v1096
    %v1137 = vpack.c.b16 %v1101, %v1097
    %v1138 = vpack.c.b16 %v1102, %v1098
    %v1139 = vpack.c.b16 %v1103, %v1099
    %v1140 = vpack.c.b16 %v1108, %v1104
    %v1141 = vpack.c.b16 %v1109, %v1105
    %v1142 = vpack.c.b16 %v1110, %v1106
    %v1143 = vpack.c.b16 %v1111, %v1107
    %1176 = vmatprep.subr.bf16.mxu0 %v1113
    %1177 = vmatpush1.bf16.msra.mxu0 %v1112
    %1178 = vmatprep.subr.bf16.mxu0 %v1117
    %1179 = vmatpush1.bf16.msra.mxu0 %v1116
    %1180 = vmatprep.subr.bf16.mxu0 %v1121
    %1181 = vmatpush1.bf16.msra.mxu0 %v1120
    %1182 = vmatprep.subr.bf16.mxu0 %v1125
    %1183 = vmatpush1.bf16.msra.mxu0 %v1124
    %1184 = vmatprep.subr.bf16.mxu0 %v1129
    %1185 = vmatpush1.bf16.msra.mxu0 %v1128
    %1186 = vmatprep.subr.bf16.mxu0 %v1133
    %1187 = vmatpush1.bf16.msra.mxu0 %v1132
    %1188 = vmatprep.subr.bf16.mxu0 %v1137
    %1189 = vmatpush1.bf16.msra.mxu0 %v1136
    %1190 = vmatprep.subr.bf16.mxu0 %v1141
    %1191 = vmatpush1.bf16.msra.mxu0 %v1140
    %1192 = vmatprep.subr.bf16.mxu0 0
    %1193 = vmatpush1.bf16.msra.mxu0 0
    %1194 = vmatprep.subr.bf16.mxu0 0
    %1195 = vmatpush1.bf16.msra.mxu0 0
    %1196 = vmatprep.subr.bf16.mxu0 0
    %1197 = vmatpush1.bf16.msra.mxu0 0
    %1198 = vmatprep.subr.bf16.mxu0 0
    %1199 = vmatpush1.bf16.msra.mxu0 0
    %1200 = vmatprep.subr.bf16.mxu0 0
    %1201 = vmatpush1.bf16.msra.mxu0 0
    %1202 = vmatprep.subr.bf16.mxu0 0
    %1203 = vmatpush1.bf16.msra.mxu0 0
    %1204 = vmatprep.subr.bf16.mxu0 0
    %1205 = vmatpush1.bf16.msra.mxu0 0
    %1206 = vmatprep.subr.bf16.mxu0 0
    %1207 = vmatpush1.bf16.msra.mxu0 0
    %1208 = vmatprep.mubr.bf16.mxu0 0
    %1209 = vmatmul.mubr.bf16.gmra.mrb[0].mxu0 %v971
    %v1210 = vpop.f32.mrb[0].mxu0
    %v1211 = vadd.f32 0.0, %v1210
    %v1212 = vpop.f32.mrb[0].mxu0
    %v1213 = vadd.f32 0.0, %v1212
    %v1214 = vpop.f32.mrb[0].mxu0
    %v1215 = vpop.f32.mrb[0].mxu0
    %1216 = vdwg.mxu0
    %1217 = vmatprep.subr.bf16.mxu0 %v1115
    %1218 = vmatpush1.bf16.msra.mxu0 %v1114
    %1219 = vmatprep.subr.bf16.mxu0 %v1119
    %1220 = vmatpush1.bf16.msra.mxu0 %v1118
    %1221 = vmatprep.subr.bf16.mxu0 %v1123
    %1222 = vmatpush1.bf16.msra.mxu0 %v1122
    %1223 = vmatprep.subr.bf16.mxu0 %v1127
    %1224 = vmatpush1.bf16.msra.mxu0 %v1126
    %1225 = vmatprep.subr.bf16.mxu0 %v1131
    %1226 = vmatpush1.bf16.msra.mxu0 %v1130
    %1227 = vmatprep.subr.bf16.mxu0 %v1135
    %1228 = vmatpush1.bf16.msra.mxu0 %v1134
    %1229 = vmatprep.subr.bf16.mxu0 %v1139
    %1230 = vmatpush1.bf16.msra.mxu0 %v1138
    %1231 = vmatprep.subr.bf16.mxu0 %v1143
    %1232 = vmatpush1.bf16.msra.mxu0 %v1142
    %1233 = vmatprep.subr.bf16.mxu0 0
    %1234 = vmatpush1.bf16.msra.mxu0 0
    %1235 = vmatprep.subr.bf16.mxu0 0
    %1236 = vmatpush1.bf16.msra.mxu0 0
    %1237 = vmatprep.subr.bf16.mxu0 0
    %1238 = vmatpush1.bf16.msra.mxu0 0
    %1239 = vmatprep.subr.bf16.mxu0 0
    %1240 = vmatpush1.bf16.msra.mxu0 0
    %1241 = vmatprep.subr.bf16.mxu0 0
    %1242 = vmatpush1.bf16.msra.mxu0 0
    %1243 = vmatprep.subr.bf16.mxu0 0
    %1244 = vmatpush1.bf16.msra.mxu0 0
    %1245 = vmatprep.subr.bf16.mxu0 0
    %1246 = vmatpush1.bf16.msra.mxu0 0
    %1247 = vmatprep.subr.bf16.mxu0 0
    %1248 = vmatpush1.bf16.msra.mxu0 0
    %1249 = vmatprep.mubr.bf16.mxu0 0
    %1250 = vmatmul.mubr.bf16.gmra.mrb[0].mxu0 %v971
    %v1251 = vpop.f32.mrb[0].mxu0
    %v1252 = vadd.f32 0.0, %v1251
    %v1253 = vpop.f32.mrb[0].mxu0
    %v1254 = vadd.f32 0.0, %v1253
    %v1255 = vpop.f32.mrb[0].mxu0
    %v1256 = vpop.f32.mrb[0].mxu0
    %1257 = vdwg.mxu0
    %v1266 = vunpack.c.l.b16 %v976
    %v1267 = vunpack.c.h.b16 %v976
    %v1268 = vunpack.c.l.b16 %v977
    %v1269 = vunpack.c.h.b16 %v977
    %v1270 = vunpack.c.l.b16 %v978
    %v1271 = vunpack.c.h.b16 %v978
    %v1272 = vunpack.c.l.b16 %v979
    %v1273 = vunpack.c.h.b16 %v979
    %v1274 = vunpack.c.l.b16 %v980
    %v1275 = vunpack.c.h.b16 %v980
    %v1276 = vunpack.c.l.b16 %v981
    %v1277 = vunpack.c.h.b16 %v981
    %v1278 = vunpack.c.l.b16 %v982
    %v1279 = vunpack.c.h.b16 %v982
    %v1280 = vunpack.c.l.b16 %v983
    %v1281 = vunpack.c.h.b16 %v983
    %v1282 = vpack.c.b16 %v1270, %v1266
    %v1283 = vpack.c.b16 %v1271, %v1267
    %v1284 = vpack.c.b16 %v1272, %v1268
    %v1285 = vpack.c.b16 %v1273, %v1269
    %v1286 = vpack.c.b16 %v1278, %v1274
    %v1287 = vpack.c.b16 %v1279, %v1275
    %v1288 = vpack.c.b16 %v1280, %v1276
    %v1289 = vpack.c.b16 %v1281, %v1277
    %v1299 = vsel %vm397, %v975, 0
    %1301 = vmatprep.subr.bf16.mxu0 %v1283
    %1302 = vmatpush1.bf16.msra.mxu0 %v1282
    %1303 = vmatprep.subr.bf16.mxu0 %v1287
    %1304 = vmatpush1.bf16.msra.mxu0 %v1286
    %1305 = vmatprep.subr.bf16.mxu0 0
    %1306 = vmatpush1.bf16.msra.mxu0 0
    %1307 = vmatprep.subr.bf16.mxu0 0
    %1308 = vmatpush1.bf16.msra.mxu0 0
    %1309 = vmatprep.subr.bf16.mxu0 0
    %1310 = vmatpush1.bf16.msra.mxu0 0
    %1311 = vmatprep.subr.bf16.mxu0 0
    %1312 = vmatpush1.bf16.msra.mxu0 0
    %1313 = vmatprep.subr.bf16.mxu0 0
    %1314 = vmatpush1.bf16.msra.mxu0 0
    %1315 = vmatprep.subr.bf16.mxu0 0
    %1316 = vmatpush1.bf16.msra.mxu0 0
    %1317 = vmatprep.subr.bf16.mxu0 0
    %1318 = vmatpush1.bf16.msra.mxu0 0
    %1319 = vmatprep.subr.bf16.mxu0 0
    %1320 = vmatpush1.bf16.msra.mxu0 0
    %1321 = vmatprep.subr.bf16.mxu0 0
    %1322 = vmatpush1.bf16.msra.mxu0 0
    %1323 = vmatprep.subr.bf16.mxu0 0
    %1324 = vmatpush1.bf16.msra.mxu0 0
    %1325 = vmatprep.subr.bf16.mxu0 0
    %1326 = vmatpush1.bf16.msra.mxu0 0
    %1327 = vmatprep.subr.bf16.mxu0 0
    %1328 = vmatpush1.bf16.msra.mxu0 0
    %1329 = vmatprep.subr.bf16.mxu0 0
    %1330 = vmatpush1.bf16.msra.mxu0 0
    %1331 = vmatprep.subr.bf16.mxu0 0
    %1332 = vmatpush1.bf16.msra.mxu0 0
    %1333 = vmatprep.mubr.bf16.mxu0 0
    %1334 = vmatmul.mubr.bf16.gmra.mrb[0].mxu0 %v1299
    %v1335 = vpop.f32.mrb[0].mxu0
    %v1336 = vadd.f32 %v1211, %v1335
    %v1337 = vpop.f32.mrb[0].mxu0
    %v1338 = vadd.f32 %v1213, %v1337
    %v1339 = vpop.f32.mrb[0].mxu0
    %v1340 = vpop.f32.mrb[0].mxu0
    %1341 = vdwg.mxu0
    %1342 = vmatprep.subr.bf16.mxu0 %v1285
    %1343 = vmatpush1.bf16.msra.mxu0 %v1284
    %1344 = vmatprep.subr.bf16.mxu0 %v1289
    %1345 = vmatpush1.bf16.msra.mxu0 %v1288
    %1346 = vmatprep.subr.bf16.mxu0 0
    %1347 = vmatpush1.bf16.msra.mxu0 0
    %1348 = vmatprep.subr.bf16.mxu0 0
    %1349 = vmatpush1.bf16.msra.mxu0 0
    %1350 = vmatprep.subr.bf16.mxu0 0
    %1351 = vmatpush1.bf16.msra.mxu0 0
    %1352 = vmatprep.subr.bf16.mxu0 0
    %1353 = vmatpush1.bf16.msra.mxu0 0
    %1354 = vmatprep.subr.bf16.mxu0 0
    %1355 = vmatpush1.bf16.msra.mxu0 0
    %1356 = vmatprep.subr.bf16.mxu0 0
    %1357 = vmatpush1.bf16.msra.mxu0 0
    %1358 = vmatprep.subr.bf16.mxu0 0
    %1359 = vmatpush1.bf16.msra.mxu0 0
    %1360 = vmatprep.subr.bf16.mxu0 0
    %1361 = vmatpush1.bf16.msra.mxu0 0
    %1362 = vmatprep.subr.bf16.mxu0 0
    %1363 = vmatpush1.bf16.msra.mxu0 0
    %1364 = vmatprep.subr.bf16.mxu0 0
    %1365 = vmatpush1.bf16.msra.mxu0 0
    %1366 = vmatprep.subr.bf16.mxu0 0
    %1367 = vmatpush1.bf16.msra.mxu0 0
    %1368 = vmatprep.subr.bf16.mxu0 0
    %1369 = vmatpush1.bf16.msra.mxu0 0
    %1370 = vmatprep.subr.bf16.mxu0 0
    %1371 = vmatpush1.bf16.msra.mxu0 0
    %1372 = vmatprep.subr.bf16.mxu0 0
    %1373 = vmatpush1.bf16.msra.mxu0 0
    %1374 = vmatprep.mubr.bf16.mxu0 0
    %1375 = vmatmul.mubr.bf16.gmra.mrb[0].mxu0 %v1299
    %v1376 = vpop.f32.mrb[0].mxu0
    %v1377 = vadd.f32 %v1252, %v1376
    %v1378 = vpop.f32.mrb[0].mxu0
    %v1379 = vadd.f32 %v1254, %v1378
    %v1380 = vpop.f32.mrb[0].mxu0
    %v1381 = vpop.f32.mrb[0].mxu0
    %1382 = vdwg.mxu0
    %v1383 = vadd.f32 %v1336, %v487
    %v1384 = vadd.f32 %v1338, %v491
    %v1385 = vadd.f32 %v1377, %v495
    %v1386 = vadd.f32 %v1379, %v499
    %v1387 = vxor.u32 %v1383, 2147483648
    %v1388 = vmul.f32 %v1387, 1.442695
    %v1389 = vpow.pop %v1388
    %v1390 = vadd.f32 %v1389, 1.0
    %v1391 = vrcp.pop %v1390
    %v1392 = vmul.f32 1.0, %v1391
    %v1393 = vxor.u32 %v1384, 2147483648
    %v1394 = vmul.f32 %v1393, 1.442695
    %v1395 = vpow.pop %v1394
    %v1396 = vadd.f32 %v1395, 1.0
    %v1397 = vrcp.pop %v1396
    %v1398 = vmul.f32 1.0, %v1397
    %v1399 = vtanh.pop %v1385
    %v1400 = vxor.u32 %v1386, 2147483648
    %v1401 = vmul.f32 %v1400, 1.442695
    %v1402 = vpow.pop %v1401
    %v1403 = vadd.f32 %v1402, 1.0
    %v1404 = vrcp.pop %v1403
    %v1405 = vmul.f32 1.0, %v1404
    %v1406 = vmul.f32 %v1398, %v968
    %v1407 = vmul.f32 %v1392, %v1399
    %v1408 = vadd.f32 %v1406, %v1407
    %v1409 = vtanh.pop %v1408
    %v1410 = vmul.f32 %v1405, %v1409
    %v1411 = vpack.c.bf16 %v1410, %v1410
    %s1412 = scalar_lea.vmem [#allocation10], 2
    %1413 = vst [vmem:[%s1412] sm:$0x1] %v1411
    %s1414 = scalar_lea.vmem [#allocation4], 3
    %v1415 = vld [vmem:[%s1414] sm:$0x1]
    %v1416 = vld [vmem:[#allocation7] sm:$0xff]
    %v1417 = vld [vmem:[#allocation7 + $0x8] sm:$0xff]
    %v1418 = vld [vmem:[#allocation7 + $0x10] sm:$0xff]
    %v1419 = vld [vmem:[#allocation7 + $0x18] sm:$0xff]
    %v1420 = vld [vmem:[#allocation7 + $0x20] sm:$0xff]
    %v1421 = vld [vmem:[#allocation7 + $0x28] sm:$0xff]
    %v1422 = vld [vmem:[#allocation7 + $0x30] sm:$0xff]
    %v1423 = vld [vmem:[#allocation7 + $0x38] sm:$0xff]
    %v1424 = vld [vmem:[#allocation9] sm:$0xff]
    %v1425 = vld [vmem:[#allocation9 + $0x8] sm:$0xff]
    %v1426 = vld [vmem:[#allocation9 + $0x10] sm:$0xff]
    %v1427 = vld [vmem:[#allocation9 + $0x18] sm:$0xff]
    %v1428 = vld [vmem:[#allocation9 + $0x20] sm:$0xff]
    %v1429 = vld [vmem:[#allocation9 + $0x28] sm:$0xff]
    %v1430 = vld [vmem:[#allocation9 + $0x30] sm:$0xff]
    %v1431 = vld [vmem:[#allocation9 + $0x38] sm:$0xff]
    %v1432 = vld [vmem:[#allocation9 + $0x40] sm:$0xff]
    %v1433 = vld [vmem:[#allocation9 + $0x48] sm:$0xff]
    %v1434 = vld [vmem:[#allocation9 + $0x50] sm:$0xff]
    %v1435 = vld [vmem:[#allocation9 + $0x58] sm:$0xff]
    %v1436 = vld [vmem:[#allocation9 + $0x60] sm:$0xff]
    %v1437 = vld [vmem:[#allocation9 + $0x68] sm:$0xff]
    %v1438 = vld [vmem:[#allocation9 + $0x70] sm:$0xff]
    %v1439 = vld [vmem:[#allocation9 + $0x78] sm:$0xff]
    %v1440 = vld [vmem:[#allocation9 + $0x80] sm:$0xff]
    %v1441 = vld [vmem:[#allocation9 + $0x88] sm:$0xff]
    %v1442 = vld [vmem:[#allocation9 + $0x90] sm:$0xff]
    %v1443 = vld [vmem:[#allocation9 + $0x98] sm:$0xff]
    %v1444 = vld [vmem:[#allocation9 + $0xa0] sm:$0xff]
    %v1445 = vld [vmem:[#allocation9 + $0xa8] sm:$0xff]
    %v1446 = vld [vmem:[#allocation9 + $0xb0] sm:$0xff]
    %v1447 = vld [vmem:[#allocation9 + $0xb8] sm:$0xff]
    %v1448 = vld [vmem:[#allocation9 + $0xc0] sm:$0xff]
    %v1449 = vld [vmem:[#allocation9 + $0xc8] sm:$0xff]
    %v1450 = vld [vmem:[#allocation9 + $0xd0] sm:$0xff]
    %v1451 = vld [vmem:[#allocation9 + $0xd8] sm:$0xff]
    %v1452 = vld [vmem:[#allocation9 + $0xe0] sm:$0xff]
    %v1453 = vld [vmem:[#allocation9 + $0xe8] sm:$0xff]
    %v1454 = vld [vmem:[#allocation9 + $0xf0] sm:$0xff]
    %v1455 = vld [vmem:[#allocation9 + $0xf8] sm:$0xff]
    %v1488 = vunpack.c.l.b16 %v1424
    %v1489 = vunpack.c.h.b16 %v1424
    %v1490 = vunpack.c.l.b16 %v1425
    %v1491 = vunpack.c.h.b16 %v1425
    %v1492 = vunpack.c.l.b16 %v1426
    %v1493 = vunpack.c.h.b16 %v1426
    %v1494 = vunpack.c.l.b16 %v1427
    %v1495 = vunpack.c.h.b16 %v1427
    %v1496 = vunpack.c.l.b16 %v1428
    %v1497 = vunpack.c.h.b16 %v1428
    %v1498 = vunpack.c.l.b16 %v1429
    %v1499 = vunpack.c.h.b16 %v1429
    %v1500 = vunpack.c.l.b16 %v1430
    %v1501 = vunpack.c.h.b16 %v1430
    %v1502 = vunpack.c.l.b16 %v1431
    %v1503 = vunpack.c.h.b16 %v1431
    %v1504 = vunpack.c.l.b16 %v1432
    %v1505 = vunpack.c.h.b16 %v1432
    %v1506 = vunpack.c.l.b16 %v1433
    %v1507 = vunpack.c.h.b16 %v1433
    %v1508 = vunpack.c.l.b16 %v1434
    %v1509 = vunpack.c.h.b16 %v1434
    %v1510 = vunpack.c.l.b16 %v1435
    %v1511 = vunpack.c.h.b16 %v1435
    %v1512 = vunpack.c.l.b16 %v1436
    %v1513 = vunpack.c.h.b16 %v1436
    %v1514 = vunpack.c.l.b16 %v1437
    %v1515 = vunpack.c.h.b16 %v1437
    %v1516 = vunpack.c.l.b16 %v1438
    %v1517 = vunpack.c.h.b16 %v1438
    %v1518 = vunpack.c.l.b16 %v1439
    %v1519 = vunpack.c.h.b16 %v1439
    %v1520 = vunpack.c.l.b16 %v1440
    %v1521 = vunpack.c.h.b16 %v1440
    %v1522 = vunpack.c.l.b16 %v1441
    %v1523 = vunpack.c.h.b16 %v1441
    %v1524 = vunpack.c.l.b16 %v1442
    %v1525 = vunpack.c.h.b16 %v1442
    %v1526 = vunpack.c.l.b16 %v1443
    %v1527 = vunpack.c.h.b16 %v1443
    %v1528 = vunpack.c.l.b16 %v1444
    %v1529 = vunpack.c.h.b16 %v1444
    %v1530 = vunpack.c.l.b16 %v1445
    %v1531 = vunpack.c.h.b16 %v1445
    %v1532 = vunpack.c.l.b16 %v1446
    %v1533 = vunpack.c.h.b16 %v1446
    %v1534 = vunpack.c.l.b16 %v1447
    %v1535 = vunpack.c.h.b16 %v1447
    %v1536 = vunpack.c.l.b16 %v1448
    %v1537 = vunpack.c.h.b16 %v1448
    %v1538 = vunpack.c.l.b16 %v1449
    %v1539 = vunpack.c.h.b16 %v1449
    %v1540 = vunpack.c.l.b16 %v1450
    %v1541 = vunpack.c.h.b16 %v1450
    %v1542 = vunpack.c.l.b16 %v1451
    %v1543 = vunpack.c.h.b16 %v1451
    %v1544 = vunpack.c.l.b16 %v1452
    %v1545 = vunpack.c.h.b16 %v1452
    %v1546 = vunpack.c.l.b16 %v1453
    %v1547 = vunpack.c.h.b16 %v1453
    %v1548 = vunpack.c.l.b16 %v1454
    %v1549 = vunpack.c.h.b16 %v1454
    %v1550 = vunpack.c.l.b16 %v1455
    %v1551 = vunpack.c.h.b16 %v1455
    %v1552 = vpack.c.b16 %v1492, %v1488
    %v1553 = vpack.c.b16 %v1493, %v1489
    %v1554 = vpack.c.b16 %v1494, %v1490
    %v1555 = vpack.c.b16 %v1495, %v1491
    %v1556 = vpack.c.b16 %v1500, %v1496
    %v1557 = vpack.c.b16 %v1501, %v1497
    %v1558 = vpack.c.b16 %v1502, %v1498
    %v1559 = vpack.c.b16 %v1503, %v1499
    %v1560 = vpack.c.b16 %v1508, %v1504
    %v1561 = vpack.c.b16 %v1509, %v1505
    %v1562 = vpack.c.b16 %v1510, %v1506
    %v1563 = vpack.c.b16 %v1511, %v1507
    %v1564 = vpack.c.b16 %v1516, %v1512
    %v1565 = vpack.c.b16 %v1517, %v1513
    %v1566 = vpack.c.b16 %v1518, %v1514
    %v1567 = vpack.c.b16 %v1519, %v1515
    %v1568 = vpack.c.b16 %v1524, %v1520
    %v1569 = vpack.c.b16 %v1525, %v1521
    %v1570 = vpack.c.b16 %v1526, %v1522
    %v1571 = vpack.c.b16 %v1527, %v1523
    %v1572 = vpack.c.b16 %v1532, %v1528
    %v1573 = vpack.c.b16 %v1533, %v1529
    %v1574 = vpack.c.b16 %v1534, %v1530
    %v1575 = vpack.c.b16 %v1535, %v1531
    %v1576 = vpack.c.b16 %v1540, %v1536
    %v1577 = vpack.c.b16 %v1541, %v1537
    %v1578 = vpack.c.b16 %v1542, %v1538
    %v1579 = vpack.c.b16 %v1543, %v1539
    %v1580 = vpack.c.b16 %v1548, %v1544
    %v1581 = vpack.c.b16 %v1549, %v1545
    %v1582 = vpack.c.b16 %v1550, %v1546
    %v1583 = vpack.c.b16 %v1551, %v1547
    %1616 = vmatprep.subr.bf16.mxu0 %v1553
    %1617 = vmatpush1.bf16.msra.mxu0 %v1552
    %1618 = vmatprep.subr.bf16.mxu0 %v1557
    %1619 = vmatpush1.bf16.msra.mxu0 %v1556
    %1620 = vmatprep.subr.bf16.mxu0 %v1561
    %1621 = vmatpush1.bf16.msra.mxu0 %v1560
    %1622 = vmatprep.subr.bf16.mxu0 %v1565
    %1623 = vmatpush1.bf16.msra.mxu0 %v1564
    %1624 = vmatprep.subr.bf16.mxu0 %v1569
    %1625 = vmatpush1.bf16.msra.mxu0 %v1568
    %1626 = vmatprep.subr.bf16.mxu0 %v1573
    %1627 = vmatpush1.bf16.msra.mxu0 %v1572
    %1628 = vmatprep.subr.bf16.mxu0 %v1577
    %1629 = vmatpush1.bf16.msra.mxu0 %v1576
    %1630 = vmatprep.subr.bf16.mxu0 %v1581
    %1631 = vmatpush1.bf16.msra.mxu0 %v1580
    %1632 = vmatprep.subr.bf16.mxu0 0
    %1633 = vmatpush1.bf16.msra.mxu0 0
    %1634 = vmatprep.subr.bf16.mxu0 0
    %1635 = vmatpush1.bf16.msra.mxu0 0
    %1636 = vmatprep.subr.bf16.mxu0 0
    %1637 = vmatpush1.bf16.msra.mxu0 0
    %1638 = vmatprep.subr.bf16.mxu0 0
    %1639 = vmatpush1.bf16.msra.mxu0 0
    %1640 = vmatprep.subr.bf16.mxu0 0
    %1641 = vmatpush1.bf16.msra.mxu0 0
    %1642 = vmatprep.subr.bf16.mxu0 0
    %1643 = vmatpush1.bf16.msra.mxu0 0
    %1644 = vmatprep.subr.bf16.mxu0 0
    %1645 = vmatpush1.bf16.msra.mxu0 0
    %1646 = vmatprep.subr.bf16.mxu0 0
    %1647 = vmatpush1.bf16.msra.mxu0 0
    %1648 = vmatprep.mubr.bf16.mxu0 0
    %1649 = vmatmul.mubr.bf16.gmra.mrb[0].mxu0 %v1411
    %v1650 = vpop.f32.mrb[0].mxu0
    %v1651 = vadd.f32 0.0, %v1650
    %v1652 = vpop.f32.mrb[0].mxu0
    %v1653 = vadd.f32 0.0, %v1652
    %v1654 = vpop.f32.mrb[0].mxu0
    %v1655 = vpop.f32.mrb[0].mxu0
    %1656 = vdwg.mxu0
    %1657 = vmatprep.subr.bf16.mxu0 %v1555
    %1658 = vmatpush1.bf16.msra.mxu0 %v1554
    %1659 = vmatprep.subr.bf16.mxu0 %v1559
    %1660 = vmatpush1.bf16.msra.mxu0 %v1558
    %1661 = vmatprep.subr.bf16.mxu0 %v1563
    %1662 = vmatpush1.bf16.msra.mxu0 %v1562
    %1663 = vmatprep.subr.bf16.mxu0 %v1567
    %1664 = vmatpush1.bf16.msra.mxu0 %v1566
    %1665 = vmatprep.subr.bf16.mxu0 %v1571
    %1666 = vmatpush1.bf16.msra.mxu0 %v1570
    %1667 = vmatprep.subr.bf16.mxu0 %v1575
    %1668 = vmatpush1.bf16.msra.mxu0 %v1574
    %1669 = vmatprep.subr.bf16.mxu0 %v1579
    %1670 = vmatpush1.bf16.msra.mxu0 %v1578
    %1671 = vmatprep.subr.bf16.mxu0 %v1583
    %1672 = vmatpush1.bf16.msra.mxu0 %v1582
    %1673 = vmatprep.subr.bf16.mxu0 0
    %1674 = vmatpush1.bf16.msra.mxu0 0
    %1675 = vmatprep.subr.bf16.mxu0 0
    %1676 = vmatpush1.bf16.msra.mxu0 0
    %1677 = vmatprep.subr.bf16.mxu0 0
    %1678 = vmatpush1.bf16.msra.mxu0 0
    %1679 = vmatprep.subr.bf16.mxu0 0
    %1680 = vmatpush1.bf16.msra.mxu0 0
    %1681 = vmatprep.subr.bf16.mxu0 0
    %1682 = vmatpush1.bf16.msra.mxu0 0
    %1683 = vmatprep.subr.bf16.mxu0 0
    %1684 = vmatpush1.bf16.msra.mxu0 0
    %1685 = vmatprep.subr.bf16.mxu0 0
    %1686 = vmatpush1.bf16.msra.mxu0 0
    %1687 = vmatprep.subr.bf16.mxu0 0
    %1688 = vmatpush1.bf16.msra.mxu0 0
    %1689 = vmatprep.mubr.bf16.mxu0 0
    %1690 = vmatmul.mubr.bf16.gmra.mrb[0].mxu0 %v1411
    %v1691 = vpop.f32.mrb[0].mxu0
    %v1692 = vadd.f32 0.0, %v1691
    %v1693 = vpop.f32.mrb[0].mxu0
    %v1694 = vadd.f32 0.0, %v1693
    %v1695 = vpop.f32.mrb[0].mxu0
    %v1696 = vpop.f32.mrb[0].mxu0
    %1697 = vdwg.mxu0
    %v1706 = vunpack.c.l.b16 %v1416
    %v1707 = vunpack.c.h.b16 %v1416
    %v1708 = vunpack.c.l.b16 %v1417
    %v1709 = vunpack.c.h.b16 %v1417
    %v1710 = vunpack.c.l.b16 %v1418
    %v1711 = vunpack.c.h.b16 %v1418
    %v1712 = vunpack.c.l.b16 %v1419
    %v1713 = vunpack.c.h.b16 %v1419
    %v1714 = vunpack.c.l.b16 %v1420
    %v1715 = vunpack.c.h.b16 %v1420
    %v1716 = vunpack.c.l.b16 %v1421
    %v1717 = vunpack.c.h.b16 %v1421
    %v1718 = vunpack.c.l.b16 %v1422
    %v1719 = vunpack.c.h.b16 %v1422
    %v1720 = vunpack.c.l.b16 %v1423
    %v1721 = vunpack.c.h.b16 %v1423
    %v1722 = vpack.c.b16 %v1710, %v1706
    %v1723 = vpack.c.b16 %v1711, %v1707
    %v1724 = vpack.c.b16 %v1712, %v1708
    %v1725 = vpack.c.b16 %v1713, %v1709
    %v1726 = vpack.c.b16 %v1718, %v1714
    %v1727 = vpack.c.b16 %v1719, %v1715
    %v1728 = vpack.c.b16 %v1720, %v1716
    %v1729 = vpack.c.b16 %v1721, %v1717
    %v1739 = vsel %vm397, %v1415, 0
    %1741 = vmatprep.subr.bf16.mxu0 %v1723
    %1742 = vmatpush1.bf16.msra.mxu0 %v1722
    %1743 = vmatprep.subr.bf16.mxu0 %v1727
    %1744 = vmatpush1.bf16.msra.mxu0 %v1726
    %1745 = vmatprep.subr.bf16.mxu0 0
    %1746 = vmatpush1.bf16.msra.mxu0 0
    %1747 = vmatprep.subr.bf16.mxu0 0
    %1748 = vmatpush1.bf16.msra.mxu0 0
    %1749 = vmatprep.subr.bf16.mxu0 0
    %1750 = vmatpush1.bf16.msra.mxu0 0
    %1751 = vmatprep.subr.bf16.mxu0 0
    %1752 = vmatpush1.bf16.msra.mxu0 0
    %1753 = vmatprep.subr.bf16.mxu0 0
    %1754 = vmatpush1.bf16.msra.mxu0 0
    %1755 = vmatprep.subr.bf16.mxu0 0
    %1756 = vmatpush1.bf16.msra.mxu0 0
    %1757 = vmatprep.subr.bf16.mxu0 0
    %1758 = vmatpush1.bf16.msra.mxu0 0
    %1759 = vmatprep.subr.bf16.mxu0 0
    %1760 = vmatpush1.bf16.msra.mxu0 0
    %1761 = vmatprep.subr.bf16.mxu0 0
    %1762 = vmatpush1.bf16.msra.mxu0 0
    %1763 = vmatprep.subr.bf16.mxu0 0
    %1764 = vmatpush1.bf16.msra.mxu0 0
    %1765 = vmatprep.subr.bf16.mxu0 0
    %1766 = vmatpush1.bf16.msra.mxu0 0
    %1767 = vmatprep.subr.bf16.mxu0 0
    %1768 = vmatpush1.bf16.msra.mxu0 0
    %1769 = vmatprep.subr.bf16.mxu0 0
    %1770 = vmatpush1.bf16.msra.mxu0 0
    %1771 = vmatprep.subr.bf16.mxu0 0
    %1772 = vmatpush1.bf16.msra.mxu0 0
    %1773 = vmatprep.mubr.bf16.mxu0 0
    %1774 = vmatmul.mubr.bf16.gmra.mrb[0].mxu0 %v1739
    %v1775 = vpop.f32.mrb[0].mxu0
    %v1776 = vadd.f32 %v1651, %v1775
    %v1777 = vpop.f32.mrb[0].mxu0
    %v1778 = vadd.f32 %v1653, %v1777
    %v1779 = vpop.f32.mrb[0].mxu0
    %v1780 = vpop.f32.mrb[0].mxu0
    %1781 = vdwg.mxu0
    %1782 = vmatprep.subr.bf16.mxu0 %v1725
    %1783 = vmatpush1.bf16.msra.mxu0 %v1724
    %1784 = vmatprep.subr.bf16.mxu0 %v1729
    %1785 = vmatpush1.bf16.msra.mxu0 %v1728
    %1786 = vmatprep.subr.bf16.mxu0 0
    %1787 = vmatpush1.bf16.msra.mxu0 0
    %1788 = vmatprep.subr.bf16.mxu0 0
    %1789 = vmatpush1.bf16.msra.mxu0 0
    %1790 = vmatprep.subr.bf16.mxu0 0
    %1791 = vmatpush1.bf16.msra.mxu0 0
    %1792 = vmatprep.subr.bf16.mxu0 0
    %1793 = vmatpush1.bf16.msra.mxu0 0
    %1794 = vmatprep.subr.bf16.mxu0 0
    %1795 = vmatpush1.bf16.msra.mxu0 0
    %1796 = vmatprep.subr.bf16.mxu0 0
    %1797 = vmatpush1.bf16.msra.mxu0 0
    %1798 = vmatprep.subr.bf16.mxu0 0
    %1799 = vmatpush1.bf16.msra.mxu0 0
    %1800 = vmatprep.subr.bf16.mxu0 0
    %1801 = vmatpush1.bf16.msra.mxu0 0
    %1802 = vmatprep.subr.bf16.mxu0 0
    %1803 = vmatpush1.bf16.msra.mxu0 0
    %1804 = vmatprep.subr.bf16.mxu0 0
    %1805 = vmatpush1.bf16.msra.mxu0 0
    %1806 = vmatprep.subr.bf16.mxu0 0
    %1807 = vmatpush1.bf16.msra.mxu0 0
    %1808 = vmatprep.subr.bf16.mxu0 0
    %1809 = vmatpush1.bf16.msra.mxu0 0
    %1810 = vmatprep.subr.bf16.mxu0 0
    %1811 = vmatpush1.bf16.msra.mxu0 0
    %1812 = vmatprep.subr.bf16.mxu0 0
    %1813 = vmatpush1.bf16.msra.mxu0 0
    %1814 = vmatprep.mubr.bf16.mxu0 0
    %1815 = vmatmul.mubr.bf16.gmra.mrb[0].mxu0 %v1739
    %v1816 = vpop.f32.mrb[0].mxu0
    %v1817 = vadd.f32 %v1692, %v1816
    %v1818 = vpop.f32.mrb[0].mxu0
    %v1819 = vadd.f32 %v1694, %v1818
    %v1820 = vpop.f32.mrb[0].mxu0
    %v1821 = vpop.f32.mrb[0].mxu0
    %1822 = vdwg.mxu0
    %v1823 = vadd.f32 %v1776, %v487
    %v1824 = vadd.f32 %v1778, %v491
    %v1825 = vadd.f32 %v1817, %v495
    %v1826 = vadd.f32 %v1819, %v499
    %v1827 = vxor.u32 %v1823, 2147483648
    %v1828 = vmul.f32 %v1827, 1.442695
    %v1829 = vpow.pop %v1828
    %v1830 = vadd.f32 %v1829, 1.0
    %v1831 = vrcp.pop %v1830
    %v1832 = vmul.f32 1.0, %v1831
    %v1833 = vxor.u32 %v1824, 2147483648
    %v1834 = vmul.f32 %v1833, 1.442695
    %v1835 = vpow.pop %v1834
    %v1836 = vadd.f32 %v1835, 1.0
    %v1837 = vrcp.pop %v1836
    %v1838 = vmul.f32 1.0, %v1837
    %v1839 = vtanh.pop %v1825
    %v1840 = vxor.u32 %v1826, 2147483648
    %v1841 = vmul.f32 %v1840, 1.442695
    %v1842 = vpow.pop %v1841
    %v1843 = vadd.f32 %v1842, 1.0
    %v1844 = vrcp.pop %v1843
    %v1845 = vmul.f32 1.0, %v1844
    %v1846 = vmul.f32 %v1838, %v1408
    %v1847 = vmul.f32 %v1832, %v1839
    %v1848 = vadd.f32 %v1846, %v1847
    %v1849 = vtanh.pop %v1848
    %v1850 = vmul.f32 %v1845, %v1849
    %v1851 = vpack.c.bf16 %v1850, %v1850
    %s1852 = scalar_lea.vmem [#allocation10], 3
    %1853 = vst [vmem:[%s1852] sm:$0x1] %v1851
    %s1854 = scalar_lea.vmem [#allocation4], 4
    %v1855 = vld [vmem:[%s1854] sm:$0x1]
    %v1856 = vld [vmem:[#allocation7] sm:$0xff]
    %v1857 = vld [vmem:[#allocation7 + $0x8] sm:$0xff]
    %v1858 = vld [vmem:[#allocation7 + $0x10] sm:$0xff]
    %v1859 = vld [vmem:[#allocation7 + $0x18] sm:$0xff]
    %v1860 = vld [vmem:[#allocation7 + $0x20] sm:$0xff]
    %v1861 = vld [vmem:[#allocation7 + $0x28] sm:$0xff]
    %v1862 = vld [vmem:[#allocation7 + $0x30] sm:$0xff]
    %v1863 = vld [vmem:[#allocation7 + $0x38] sm:$0xff]
    %v1864 = vld [vmem:[#allocation9] sm:$0xff]
    %v1865 = vld [vmem:[#allocation9 + $0x8] sm:$0xff]
    %v1866 = vld [vmem:[#allocation9 + $0x10] sm:$0xff]
    %v1867 = vld [vmem:[#allocation9 + $0x18] sm:$0xff]
    %v1868 = vld [vmem:[#allocation9 + $0x20] sm:$0xff]
    %v1869 = vld [vmem:[#allocation9 + $0x28] sm:$0xff]
    %v1870 = vld [vmem:[#allocation9 + $0x30] sm:$0xff]
    %v1871 = vld [vmem:[#allocation9 + $0x38] sm:$0xff]
    %v1872 = vld [vmem:[#allocation9 + $0x40] sm:$0xff]
    %v1873 = vld [vmem:[#allocation9 + $0x48] sm:$0xff]
    %v1874 = vld [vmem:[#allocation9 + $0x50] sm:$0xff]
    %v1875 = vld [vmem:[#allocation9 + $0x58] sm:$0xff]
    %v1876 = vld [vmem:[#allocation9 + $0x60] sm:$0xff]
    %v1877 = vld [vmem:[#allocation9 + $0x68] sm:$0xff]
    %v1878 = vld [vmem:[#allocation9 + $0x70] sm:$0xff]
    %v1879 = vld [vmem:[#allocation9 + $0x78] sm:$0xff]
    %v1880 = vld [vmem:[#allocation9 + $0x80] sm:$0xff]
    %v1881 = vld [vmem:[#allocation9 + $0x88] sm:$0xff]
    %v1882 = vld [vmem:[#allocation9 + $0x90] sm:$0xff]
    %v1883 = vld [vmem:[#allocation9 + $0x98] sm:$0xff]
    %v1884 = vld [vmem:[#allocation9 + $0xa0] sm:$0xff]
    %v1885 = vld [vmem:[#allocation9 + $0xa8] sm:$0xff]
    %v1886 = vld [vmem:[#allocation9 + $0xb0] sm:$0xff]
    %v1887 = vld [vmem:[#allocation9 + $0xb8] sm:$0xff]
    %v1888 = vld [vmem:[#allocation9 + $0xc0] sm:$0xff]
    %v1889 = vld [vmem:[#allocation9 + $0xc8] sm:$0xff]
    %v1890 = vld [vmem:[#allocation9 + $0xd0] sm:$0xff]
    %v1891 = vld [vmem:[#allocation9 + $0xd8] sm:$0xff]
    %v1892 = vld [vmem:[#allocation9 + $0xe0] sm:$0xff]
    %v1893 = vld [vmem:[#allocation9 + $0xe8] sm:$0xff]
    %v1894 = vld [vmem:[#allocation9 + $0xf0] sm:$0xff]
    %v1895 = vld [vmem:[#allocation9 + $0xf8] sm:$0xff]
    %v1928 = vunpack.c.l.b16 %v1864
    %v1929 = vunpack.c.h.b16 %v1864
    %v1930 = vunpack.c.l.b16 %v1865
    %v1931 = vunpack.c.h.b16 %v1865
    %v1932 = vunpack.c.l.b16 %v1866
    %v1933 = vunpack.c.h.b16 %v1866
    %v1934 = vunpack.c.l.b16 %v1867
    %v1935 = vunpack.c.h.b16 %v1867
    %v1936 = vunpack.c.l.b16 %v1868
    %v1937 = vunpack.c.h.b16 %v1868
    %v1938 = vunpack.c.l.b16 %v1869
    %v1939 = vunpack.c.h.b16 %v1869
    %v1940 = vunpack.c.l.b16 %v1870
    %v1941 = vunpack.c.h.b16 %v1870
    %v1942 = vunpack.c.l.b16 %v1871
    %v1943 = vunpack.c.h.b16 %v1871
    %v1944 = vunpack.c.l.b16 %v1872
    %v1945 = vunpack.c.h.b16 %v1872
    %v1946 = vunpack.c.l.b16 %v1873
    %v1947 = vunpack.c.h.b16 %v1873
    %v1948 = vunpack.c.l.b16 %v1874
    %v1949 = vunpack.c.h.b16 %v1874
    %v1950 = vunpack.c.l.b16 %v1875
    %v1951 = vunpack.c.h.b16 %v1875
    %v1952 = vunpack.c.l.b16 %v1876
    %v1953 = vunpack.c.h.b16 %v1876
    %v1954 = vunpack.c.l.b16 %v1877
    %v1955 = vunpack.c.h.b16 %v1877
    %v1956 = vunpack.c.l.b16 %v1878
    %v1957 = vunpack.c.h.b16 %v1878
    %v1958 = vunpack.c.l.b16 %v1879
    %v1959 = vunpack.c.h.b16 %v1879
    %v1960 = vunpack.c.l.b16 %v1880
    %v1961 = vunpack.c.h.b16 %v1880
    %v1962 = vunpack.c.l.b16 %v1881
    %v1963 = vunpack.c.h.b16 %v1881
    %v1964 = vunpack.c.l.b16 %v1882
    %v1965 = vunpack.c.h.b16 %v1882
    %v1966 = vunpack.c.l.b16 %v1883
    %v1967 = vunpack.c.h.b16 %v1883
    %v1968 = vunpack.c.l.b16 %v1884
    %v1969 = vunpack.c.h.b16 %v1884
    %v1970 = vunpack.c.l.b16 %v1885
    %v1971 = vunpack.c.h.b16 %v1885
    %v1972 = vunpack.c.l.b16 %v1886
    %v1973 = vunpack.c.h.b16 %v1886
    %v1974 = vunpack.c.l.b16 %v1887
    %v1975 = vunpack.c.h.b16 %v1887
    %v1976 = vunpack.c.l.b16 %v1888
    %v1977 = vunpack.c.h.b16 %v1888
    %v1978 = vunpack.c.l.b16 %v1889
    %v1979 = vunpack.c.h.b16 %v1889
    %v1980 = vunpack.c.l.b16 %v1890
    %v1981 = vunpack.c.h.b16 %v1890
    %v1982 = vunpack.c.l.b16 %v1891
    %v1983 = vunpack.c.h.b16 %v1891
    %v1984 = vunpack.c.l.b16 %v1892
    %v1985 = vunpack.c.h.b16 %v1892
    %v1986 = vunpack.c.l.b16 %v1893
    %v1987 = vunpack.c.h.b16 %v1893
    %v1988 = vunpack.c.l.b16 %v1894
    %v1989 = vunpack.c.h.b16 %v1894
    %v1990 = vunpack.c.l.b16 %v1895
    %v1991 = vunpack.c.h.b16 %v1895
    %v1992 = vpack.c.b16 %v1932, %v1928
    %v1993 = vpack.c.b16 %v1933, %v1929
    %v1994 = vpack.c.b16 %v1934, %v1930
    %v1995 = vpack.c.b16 %v1935, %v1931
    %v1996 = vpack.c.b16 %v1940, %v1936
    %v1997 = vpack.c.b16 %v1941, %v1937
    %v1998 = vpack.c.b16 %v1942, %v1938
    %v1999 = vpack.c.b16 %v1943, %v1939
    %v2000 = vpack.c.b16 %v1948, %v1944
    %v2001 = vpack.c.b16 %v1949, %v1945
    %v2002 = vpack.c.b16 %v1950, %v1946
    %v2003 = vpack.c.b16 %v1951, %v1947
    %v2004 = vpack.c.b16 %v1956, %v1952
    %v2005 = vpack.c.b16 %v1957, %v1953
    %v2006 = vpack.c.b16 %v1958, %v1954
    %v2007 = vpack.c.b16 %v1959, %v1955
    %v2008 = vpack.c.b16 %v1964, %v1960
    %v2009 = vpack.c.b16 %v1965, %v1961
    %v2010 = vpack.c.b16 %v1966, %v1962
    %v2011 = vpack.c.b16 %v1967, %v1963
    %v2012 = vpack.c.b16 %v1972, %v1968
    %v2013 = vpack.c.b16 %v1973, %v1969
    %v2014 = vpack.c.b16 %v1974, %v1970
    %v2015 = vpack.c.b16 %v1975, %v1971
    %v2016 = vpack.c.b16 %v1980, %v1976
    %v2017 = vpack.c.b16 %v1981, %v1977
    %v2018 = vpack.c.b16 %v1982, %v1978
    %v2019 = vpack.c.b16 %v1983, %v1979
    %v2020 = vpack.c.b16 %v1988, %v1984
    %v2021 = vpack.c.b16 %v1989, %v1985
    %v2022 = vpack.c.b16 %v1990, %v1986
    %v2023 = vpack.c.b16 %v1991, %v1987
    %2056 = vmatprep.subr.bf16.mxu0 %v1993
    %2057 = vmatpush1.bf16.msra.mxu0 %v1992
    %2058 = vmatprep.subr.bf16.mxu0 %v1997
    %2059 = vmatpush1.bf16.msra.mxu0 %v1996
    %2060 = vmatprep.subr.bf16.mxu0 %v2001
    %2061 = vmatpush1.bf16.msra.mxu0 %v2000
    %2062 = vmatprep.subr.bf16.mxu0 %v2005
    %2063 = vmatpush1.bf16.msra.mxu0 %v2004
    %2064 = vmatprep.subr.bf16.mxu0 %v2009
    %2065 = vmatpush1.bf16.msra.mxu0 %v2008
    %2066 = vmatprep.subr.bf16.mxu0 %v2013
    %2067 = vmatpush1.bf16.msra.mxu0 %v2012
    %2068 = vmatprep.subr.bf16.mxu0 %v2017
    %2069 = vmatpush1.bf16.msra.mxu0 %v2016
    %2070 = vmatprep.subr.bf16.mxu0 %v2021
    %2071 = vmatpush1.bf16.msra.mxu0 %v2020
    %2072 = vmatprep.subr.bf16.mxu0 0
    %2073 = vmatpush1.bf16.msra.mxu0 0
    %2074 = vmatprep.subr.bf16.mxu0 0
    %2075 = vmatpush1.bf16.msra.mxu0 0
    %2076 = vmatprep.subr.bf16.mxu0 0
    %2077 = vmatpush1.bf16.msra.mxu0 0
    %2078 = vmatprep.subr.bf16.mxu0 0
    %2079 = vmatpush1.bf16.msra.mxu0 0
    %2080 = vmatprep.subr.bf16.mxu0 0
    %2081 = vmatpush1.bf16.msra.mxu0 0
    %2082 = vmatprep.subr.bf16.mxu0 0
    %2083 = vmatpush1.bf16.msra.mxu0 0
    %2084 = vmatprep.subr.bf16.mxu0 0
    %2085 = vmatpush1.bf16.msra.mxu0 0
    %2086 = vmatprep.subr.bf16.mxu0 0
    %2087 = vmatpush1.bf16.msra.mxu0 0
    %2088 = vmatprep.mubr.bf16.mxu0 0
    %2089 = vmatmul.mubr.bf16.gmra.mrb[0].mxu0 %v1851
    %v2090 = vpop.f32.mrb[0].mxu0
    %v2091 = vadd.f32 0.0, %v2090
    %v2092 = vpop.f32.mrb[0].mxu0
    %v2093 = vadd.f32 0.0, %v2092
    %v2094 = vpop.f32.mrb[0].mxu0
    %v2095 = vpop.f32.mrb[0].mxu0
    %2096 = vdwg.mxu0
    %2097 = vmatprep.subr.bf16.mxu0 %v1995
    %2098 = vmatpush1.bf16.msra.mxu0 %v1994
    %2099 = vmatprep.subr.bf16.mxu0 %v1999
    %2100 = vmatpush1.bf16.msra.mxu0 %v1998
    %2101 = vmatprep.subr.bf16.mxu0 %v2003
    %2102 = vmatpush1.bf16.msra.mxu0 %v2002
    %2103 = vmatprep.subr.bf16.mxu0 %v2007
    %2104 = vmatpush1.bf16.msra.mxu0 %v2006
    %2105 = vmatprep.subr.bf16.mxu0 %v2011
    %2106 = vmatpush1.bf16.msra.mxu0 %v2010
    %2107 = vmatprep.subr.bf16.mxu0 %v2015
    %2108 = vmatpush1.bf16.msra.mxu0 %v2014
    %2109 = vmatprep.subr.bf16.mxu0 %v2019
    %2110 = vmatpush1.bf16.msra.mxu0 %v2018
    %2111 = vmatprep.subr.bf16.mxu0 %v2023
    %2112 = vmatpush1.bf16.msra.mxu0 %v2022
    %2113 = vmatprep.subr.bf16.mxu0 0
    %2114 = vmatpush1.bf16.msra.mxu0 0
    %2115 = vmatprep.subr.bf16.mxu0 0
    %2116 = vmatpush1.bf16.msra.mxu0 0
    %2117 = vmatprep.subr.bf16.mxu0 0
    %2118 = vmatpush1.bf16.msra.mxu0 0
    %2119 = vmatprep.subr.bf16.mxu0 0
    %2120 = vmatpush1.bf16.msra.mxu0 0
    %2121 = vmatprep.subr.bf16.mxu0 0
    %2122 = vmatpush1.bf16.msra.mxu0 0
    %2123 = vmatprep.subr.bf16.mxu0 0
    %2124 = vmatpush1.bf16.msra.mxu0 0
    %2125 = vmatprep.subr.bf16.mxu0 0
    %2126 = vmatpush1.bf16.msra.mxu0 0
    %2127 = vmatprep.subr.bf16.mxu0 0
    %2128 = vmatpush1.bf16.msra.mxu0 0
    %2129 = vmatprep.mubr.bf16.mxu0 0
    %2130 = vmatmul.mubr.bf16.gmra.mrb[0].mxu0 %v1851
    %v2131 = vpop.f32.mrb[0].mxu0
    %v2132 = vadd.f32 0.0, %v2131
    %v2133 = vpop.f32.mrb[0].mxu0
    %v2134 = vadd.f32 0.0, %v2133
    %v2135 = vpop.f32.mrb[0].mxu0
    %v2136 = vpop.f32.mrb[0].mxu0
    %2137 = vdwg.mxu0
    %v2146 = vunpack.c.l.b16 %v1856
    %v2147 = vunpack.c.h.b16 %v1856
    %v2148 = vunpack.c.l.b16 %v1857
    %v2149 = vunpack.c.h.b16 %v1857
    %v2150 = vunpack.c.l.b16 %v1858
    %v2151 = vunpack.c.h.b16 %v1858
    %v2152 = vunpack.c.l.b16 %v1859
    %v2153 = vunpack.c.h.b16 %v1859
    %v2154 = vunpack.c.l.b16 %v1860
    %v2155 = vunpack.c.h.b16 %v1860
    %v2156 = vunpack.c.l.b16 %v1861
    %v2157 = vunpack.c.h.b16 %v1861
    %v2158 = vunpack.c.l.b16 %v1862
    %v2159 = vunpack.c.h.b16 %v1862
    %v2160 = vunpack.c.l.b16 %v1863
    %v2161 = vunpack.c.h.b16 %v1863
    %v2162 = vpack.c.b16 %v2150, %v2146
    %v2163 = vpack.c.b16 %v2151, %v2147
    %v2164 = vpack.c.b16 %v2152, %v2148
    %v2165 = vpack.c.b16 %v2153, %v2149
    %v2166 = vpack.c.b16 %v2158, %v2154
    %v2167 = vpack.c.b16 %v2159, %v2155
    %v2168 = vpack.c.b16 %v2160, %v2156
    %v2169 = vpack.c.b16 %v2161, %v2157
    %v2179 = vsel %vm397, %v1855, 0
    %2181 = vmatprep.subr.bf16.mxu0 %v2163
    %2182 = vmatpush1.bf16.msra.mxu0 %v2162
    %2183 = vmatprep.subr.bf16.mxu0 %v2167
    %2184 = vmatpush1.bf16.msra.mxu0 %v2166
    %2185 = vmatprep.subr.bf16.mxu0 0
    %2186 = vmatpush1.bf16.msra.mxu0 0
    %2187 = vmatprep.subr.bf16.mxu0 0
    %2188 = vmatpush1.bf16.msra.mxu0 0
    %2189 = vmatprep.subr.bf16.mxu0 0
    %2190 = vmatpush1.bf16.msra.mxu0 0
    %2191 = vmatprep.subr.bf16.mxu0 0
    %2192 = vmatpush1.bf16.msra.mxu0 0
    %2193 = vmatprep.subr.bf16.mxu0 0
    %2194 = vmatpush1.bf16.msra.mxu0 0
    %2195 = vmatprep.subr.bf16.mxu0 0
    %2196 = vmatpush1.bf16.msra.mxu0 0
    %2197 = vmatprep.subr.bf16.mxu0 0
    %2198 = vmatpush1.bf16.msra.mxu0 0
    %2199 = vmatprep.subr.bf16.mxu0 0
    %2200 = vmatpush1.bf16.msra.mxu0 0
    %2201 = vmatprep.subr.bf16.mxu0 0
    %2202 = vmatpush1.bf16.msra.mxu0 0
    %2203 = vmatprep.subr.bf16.mxu0 0
    %2204 = vmatpush1.bf16.msra.mxu0 0
    %2205 = vmatprep.subr.bf16.mxu0 0
    %2206 = vmatpush1.bf16.msra.mxu0 0
    %2207 = vmatprep.subr.bf16.mxu0 0
    %2208 = vmatpush1.bf16.msra.mxu0 0
    %2209 = vmatprep.subr.bf16.mxu0 0
    %2210 = vmatpush1.bf16.msra.mxu0 0
    %2211 = vmatprep.subr.bf16.mxu0 0
    %2212 = vmatpush1.bf16.msra.mxu0 0
    %2213 = vmatprep.mubr.bf16.mxu0 0
    %2214 = vmatmul.mubr.bf16.gmra.mrb[0].mxu0 %v2179
    %v2215 = vpop.f32.mrb[0].mxu0
    %v2216 = vadd.f32 %v2091, %v2215
    %v2217 = vpop.f32.mrb[0].mxu0
    %v2218 = vadd.f32 %v2093, %v2217
    %v2219 = vpop.f32.mrb[0].mxu0
    %v2220 = vpop.f32.mrb[0].mxu0
    %2221 = vdwg.mxu0
    %2222 = vmatprep.subr.bf16.mxu0 %v2165
    %2223 = vmatpush1.bf16.msra.mxu0 %v2164
    %2224 = vmatprep.subr.bf16.mxu0 %v2169
    %2225 = vmatpush1.bf16.msra.mxu0 %v2168
    %2226 = vmatprep.subr.bf16.mxu0 0
    %2227 = vmatpush1.bf16.msra.mxu0 0
    %2228 = vmatprep.subr.bf16.mxu0 0
    %2229 = vmatpush1.bf16.msra.mxu0 0
    %2230 = vmatprep.subr.bf16.mxu0 0
    %2231 = vmatpush1.bf16.msra.mxu0 0
    %2232 = vmatprep.subr.bf16.mxu0 0
    %2233 = vmatpush1.bf16.msra.mxu0 0
    %2234 = vmatprep.subr.bf16.mxu0 0
    %2235 = vmatpush1.bf16.msra.mxu0 0
    %2236 = vmatprep.subr.bf16.mxu0 0
    %2237 = vmatpush1.bf16.msra.mxu0 0
    %2238 = vmatprep.subr.bf16.mxu0 0
    %2239 = vmatpush1.bf16.msra.mxu0 0
    %2240 = vmatprep.subr.bf16.mxu0 0
    %2241 = vmatpush1.bf16.msra.mxu0 0
    %2242 = vmatprep.subr.bf16.mxu0 0
    %2243 = vmatpush1.bf16.msra.mxu0 0
    %2244 = vmatprep.subr.bf16.mxu0 0
    %2245 = vmatpush1.bf16.msra.mxu0 0
    %2246 = vmatprep.subr.bf16.mxu0 0
    %2247 = vmatpush1.bf16.msra.mxu0 0
    %2248 = vmatprep.subr.bf16.mxu0 0
    %2249 = vmatpush1.bf16.msra.mxu0 0
    %2250 = vmatprep.subr.bf16.mxu0 0
    %2251 = vmatpush1.bf16.msra.mxu0 0
    %2252 = vmatprep.subr.bf16.mxu0 0
    %2253 = vmatpush1.bf16.msra.mxu0 0
    %2254 = vmatprep.mubr.bf16.mxu0 0
    %2255 = vmatmul.mubr.bf16.gmra.mrb[0].mxu0 %v2179
    %v2256 = vpop.f32.mrb[0].mxu0
    %v2257 = vadd.f32 %v2132, %v2256
    %v2258 = vpop.f32.mrb[0].mxu0
    %v2259 = vadd.f32 %v2134, %v2258
    %v2260 = vpop.f32.mrb[0].mxu0
    %v2261 = vpop.f32.mrb[0].mxu0
    %2262 = vdwg.mxu0
    %v2263 = vadd.f32 %v2216, %v487
    %v2264 = vadd.f32 %v2218, %v491
    %v2265 = vadd.f32 %v2257, %v495
    %v2266 = vadd.f32 %v2259, %v499
    %v2267 = vxor.u32 %v2263, 2147483648
    %v2268 = vmul.f32 %v2267, 1.442695
    %v2269 = vpow.pop %v2268
    %v2270 = vadd.f32 %v2269, 1.0
    %v2271 = vrcp.pop %v2270
    %v2272 = vmul.f32 1.0, %v2271
    %v2273 = vxor.u32 %v2264, 2147483648
    %v2274 = vmul.f32 %v2273, 1.442695
    %v2275 = vpow.pop %v2274
    %v2276 = vadd.f32 %v2275, 1.0
    %v2277 = vrcp.pop %v2276
    %v2278 = vmul.f32 1.0, %v2277
    %v2279 = vtanh.pop %v2265
    %v2280 = vxor.u32 %v2266, 2147483648
    %v2281 = vmul.f32 %v2280, 1.442695
    %v2282 = vpow.pop %v2281
    %v2283 = vadd.f32 %v2282, 1.0
    %v2284 = vrcp.pop %v2283
    %v2285 = vmul.f32 1.0, %v2284
    %v2286 = vmul.f32 %v2278, %v1848
    %v2287 = vmul.f32 %v2272, %v2279
    %v2288 = vadd.f32 %v2286, %v2287
    %v2289 = vtanh.pop %v2288
    %v2290 = vmul.f32 %v2285, %v2289
    %v2291 = vpack.c.bf16 %v2290, %v2290
    %s2292 = scalar_lea.vmem [#allocation10], 4
    %2293 = vst [vmem:[%s2292] sm:$0x1] %v2291
    %s2294 = scalar_lea.vmem [#allocation4], 5
    %v2295 = vld [vmem:[%s2294] sm:$0x1]
    %v2296 = vld [vmem:[#allocation7] sm:$0xff]
    %v2297 = vld [vmem:[#allocation7 + $0x8] sm:$0xff]
    %v2298 = vld [vmem:[#allocation7 + $0x10] sm:$0xff]
    %v2299 = vld [vmem:[#allocation7 + $0x18] sm:$0xff]
    %v2300 = vld [vmem:[#allocation7 + $0x20] sm:$0xff]
    %v2301 = vld [vmem:[#allocation7 + $0x28] sm:$0xff]
    %v2302 = vld [vmem:[#allocation7 + $0x30] sm:$0xff]
    %v2303 = vld [vmem:[#allocation7 + $0x38] sm:$0xff]
    %v2304 = vld [vmem:[#allocation9] sm:$0xff]
    %v2305 = vld [vmem:[#allocation9 + $0x8] sm:$0xff]
    %v2306 = vld [vmem:[#allocation9 + $0x10] sm:$0xff]
    %v2307 = vld [vmem:[#allocation9 + $0x18] sm:$0xff]
    %v2308 = vld [vmem:[#allocation9 + $0x20] sm:$0xff]
    %v2309 = vld [vmem:[#allocation9 + $0x28] sm:$0xff]
    %v2310 = vld [vmem:[#allocation9 + $0x30] sm:$0xff]
    %v2311 = vld [vmem:[#allocation9 + $0x38] sm:$0xff]
    %v2312 = vld [vmem:[#allocation9 + $0x40] sm:$0xff]
    %v2313 = vld [vmem:[#allocation9 + $0x48] sm:$0xff]
    %v2314 = vld [vmem:[#allocation9 + $0x50] sm:$0xff]
    %v2315 = vld [vmem:[#allocation9 + $0x58] sm:$0xff]
    %v2316 = vld [vmem:[#allocation9 + $0x60] sm:$0xff]
    %v2317 = vld [vmem:[#allocation9 + $0x68] sm:$0xff]
    %v2318 = vld [vmem:[#allocation9 + $0x70] sm:$0xff]
    %v2319 = vld [vmem:[#allocation9 + $0x78] sm:$0xff]
    %v2320 = vld [vmem:[#allocation9 + $0x80] sm:$0xff]
    %v2321 = vld [vmem:[#allocation9 + $0x88] sm:$0xff]
    %v2322 = vld [vmem:[#allocation9 + $0x90] sm:$0xff]
    %v2323 = vld [vmem:[#allocation9 + $0x98] sm:$0xff]
    %v2324 = vld [vmem:[#allocation9 + $0xa0] sm:$0xff]
    %v2325 = vld [vmem:[#allocation9 + $0xa8] sm:$0xff]
    %v2326 = vld [vmem:[#allocation9 + $0xb0] sm:$0xff]
    %v2327 = vld [vmem:[#allocation9 + $0xb8] sm:$0xff]
    %v2328 = vld [vmem:[#allocation9 + $0xc0] sm:$0xff]
    %v2329 = vld [vmem:[#allocation9 + $0xc8] sm:$0xff]
    %v2330 = vld [vmem:[#allocation9 + $0xd0] sm:$0xff]
    %v2331 = vld [vmem:[#allocation9 + $0xd8] sm:$0xff]
    %v2332 = vld [vmem:[#allocation9 + $0xe0] sm:$0xff]
    %v2333 = vld [vmem:[#allocation9 + $0xe8] sm:$0xff]
    %v2334 = vld [vmem:[#allocation9 + $0xf0] sm:$0xff]
    %v2335 = vld [vmem:[#allocation9 + $0xf8] sm:$0xff]
    %v2368 = vunpack.c.l.b16 %v2304
    %v2369 = vunpack.c.h.b16 %v2304
    %v2370 = vunpack.c.l.b16 %v2305
    %v2371 = vunpack.c.h.b16 %v2305
    %v2372 = vunpack.c.l.b16 %v2306
    %v2373 = vunpack.c.h.b16 %v2306
    %v2374 = vunpack.c.l.b16 %v2307
    %v2375 = vunpack.c.h.b16 %v2307
    %v2376 = vunpack.c.l.b16 %v2308
    %v2377 = vunpack.c.h.b16 %v2308
    %v2378 = vunpack.c.l.b16 %v2309
    %v2379 = vunpack.c.h.b16 %v2309
    %v2380 = vunpack.c.l.b16 %v2310
    %v2381 = vunpack.c.h.b16 %v2310
    %v2382 = vunpack.c.l.b16 %v2311
    %v2383 = vunpack.c.h.b16 %v2311
    %v2384 = vunpack.c.l.b16 %v2312
    %v2385 = vunpack.c.h.b16 %v2312
    %v2386 = vunpack.c.l.b16 %v2313
    %v2387 = vunpack.c.h.b16 %v2313
    %v2388 = vunpack.c.l.b16 %v2314
    %v2389 = vunpack.c.h.b16 %v2314
    %v2390 = vunpack.c.l.b16 %v2315
    %v2391 = vunpack.c.h.b16 %v2315
    %v2392 = vunpack.c.l.b16 %v2316
    %v2393 = vunpack.c.h.b16 %v2316
    %v2394 = vunpack.c.l.b16 %v2317
    %v2395 = vunpack.c.h.b16 %v2317
    %v2396 = vunpack.c.l.b16 %v2318
    %v2397 = vunpack.c.h.b16 %v2318
    %v2398 = vunpack.c.l.b16 %v2319
    %v2399 = vunpack.c.h.b16 %v2319
    %v2400 = vunpack.c.l.b16 %v2320
    %v2401 = vunpack.c.h.b16 %v2320
    %v2402 = vunpack.c.l.b16 %v2321
    %v2403 = vunpack.c.h.b16 %v2321
    %v2404 = vunpack.c.l.b16 %v2322
    %v2405 = vunpack.c.h.b16 %v2322
    %v2406 = vunpack.c.l.b16 %v2323
    %v2407 = vunpack.c.h.b16 %v2323
    %v2408 = vunpack.c.l.b16 %v2324
    %v2409 = vunpack.c.h.b16 %v2324
    %v2410 = vunpack.c.l.b16 %v2325
    %v2411 = vunpack.c.h.b16 %v2325
    %v2412 = vunpack.c.l.b16 %v2326
    %v2413 = vunpack.c.h.b16 %v2326
    %v2414 = vunpack.c.l.b16 %v2327
    %v2415 = vunpack.c.h.b16 %v2327
    %v2416 = vunpack.c.l.b16 %v2328
    %v2417 = vunpack.c.h.b16 %v2328
    %v2418 = vunpack.c.l.b16 %v2329
    %v2419 = vunpack.c.h.b16 %v2329
    %v2420 = vunpack.c.l.b16 %v2330
    %v2421 = vunpack.c.h.b16 %v2330
    %v2422 = vunpack.c.l.b16 %v2331
    %v2423 = vunpack.c.h.b16 %v2331
    %v2424 = vunpack.c.l.b16 %v2332
    %v2425 = vunpack.c.h.b16 %v2332
    %v2426 = vunpack.c.l.b16 %v2333
    %v2427 = vunpack.c.h.b16 %v2333
    %v2428 = vunpack.c.l.b16 %v2334
    %v2429 = vunpack.c.h.b16 %v2334
    %v2430 = vunpack.c.l.b16 %v2335
    %v2431 = vunpack.c.h.b16 %v2335
    %v2432 = vpack.c.b16 %v2372, %v2368
    %v2433 = vpack.c.b16 %v2373, %v2369
    %v2434 = vpack.c.b16 %v2374, %v2370
    %v2435 = vpack.c.b16 %v2375, %v2371
    %v2436 = vpack.c.b16 %v2380, %v2376
    %v2437 = vpack.c.b16 %v2381, %v2377
    %v2438 = vpack.c.b16 %v2382, %v2378
    %v2439 = vpack.c.b16 %v2383, %v2379
    %v2440 = vpack.c.b16 %v2388, %v2384
    %v2441 = vpack.c.b16 %v2389, %v2385
    %v2442 = vpack.c.b16 %v2390, %v2386
    %v2443 = vpack.c.b16 %v2391, %v2387
    %v2444 = vpack.c.b16 %v2396, %v2392
    %v2445 = vpack.c.b16 %v2397, %v2393
    %v2446 = vpack.c.b16 %v2398, %v2394
    %v2447 = vpack.c.b16 %v2399, %v2395
    %v2448 = vpack.c.b16 %v2404, %v2400
    %v2449 = vpack.c.b16 %v2405, %v2401
    %v2450 = vpack.c.b16 %v2406, %v2402
    %v2451 = vpack.c.b16 %v2407, %v2403
    %v2452 = vpack.c.b16 %v2412, %v2408
    %v2453 = vpack.c.b16 %v2413, %v2409
    %v2454 = vpack.c.b16 %v2414, %v2410
    %v2455 = vpack.c.b16 %v2415, %v2411
    %v2456 = vpack.c.b16 %v2420, %v2416
    %v2457 = vpack.c.b16 %v2421, %v2417
    %v2458 = vpack.c.b16 %v2422, %v2418
    %v2459 = vpack.c.b16 %v2423, %v2419
    %v2460 = vpack.c.b16 %v2428, %v2424
    %v2461 = vpack.c.b16 %v2429, %v2425
    %v2462 = vpack.c.b16 %v2430, %v2426
    %v2463 = vpack.c.b16 %v2431, %v2427
    %2496 = vmatprep.subr.bf16.mxu0 %v2433
    %2497 = vmatpush1.bf16.msra.mxu0 %v2432
    %2498 = vmatprep.subr.bf16.mxu0 %v2437
    %2499 = vmatpush1.bf16.msra.mxu0 %v2436
    %2500 = vmatprep.subr.bf16.mxu0 %v2441
    %2501 = vmatpush1.bf16.msra.mxu0 %v2440
    %2502 = vmatprep.subr.bf16.mxu0 %v2445
    %2503 = vmatpush1.bf16.msra.mxu0 %v2444
    %2504 = vmatprep.subr.bf16.mxu0 %v2449
    %2505 = vmatpush1.bf16.msra.mxu0 %v2448
    %2506 = vmatprep.subr.bf16.mxu0 %v2453
    %2507 = vmatpush1.bf16.msra.mxu0 %v2452
    %2508 = vmatprep.subr.bf16.mxu0 %v2457
    %2509 = vmatpush1.bf16.msra.mxu0 %v2456
    %2510 = vmatprep.subr.bf16.mxu0 %v2461
    %2511 = vmatpush1.bf16.msra.mxu0 %v2460
    %2512 = vmatprep.subr.bf16.mxu0 0
    %2513 = vmatpush1.bf16.msra.mxu0 0
    %2514 = vmatprep.subr.bf16.mxu0 0
    %2515 = vmatpush1.bf16.msra.mxu0 0
    %2516 = vmatprep.subr.bf16.mxu0 0
    %2517 = vmatpush1.bf16.msra.mxu0 0
    %2518 = vmatprep.subr.bf16.mxu0 0
    %2519 = vmatpush1.bf16.msra.mxu0 0
    %2520 = vmatprep.subr.bf16.mxu0 0
    %2521 = vmatpush1.bf16.msra.mxu0 0
    %2522 = vmatprep.subr.bf16.mxu0 0
    %2523 = vmatpush1.bf16.msra.mxu0 0
    %2524 = vmatprep.subr.bf16.mxu0 0
    %2525 = vmatpush1.bf16.msra.mxu0 0
    %2526 = vmatprep.subr.bf16.mxu0 0
    %2527 = vmatpush1.bf16.msra.mxu0 0
    %2528 = vmatprep.mubr.bf16.mxu0 0
    %2529 = vmatmul.mubr.bf16.gmra.mrb[0].mxu0 %v2291
    %v2530 = vpop.f32.mrb[0].mxu0
    %v2531 = vadd.f32 0.0, %v2530
    %v2532 = vpop.f32.mrb[0].mxu0
    %v2533 = vadd.f32 0.0, %v2532
    %v2534 = vpop.f32.mrb[0].mxu0
    %v2535 = vpop.f32.mrb[0].mxu0
    %2536 = vdwg.mxu0
    %2537 = vmatprep.subr.bf16.mxu0 %v2435
    %2538 = vmatpush1.bf16.msra.mxu0 %v2434
    %2539 = vmatprep.subr.bf16.mxu0 %v2439
    %2540 = vmatpush1.bf16.msra.mxu0 %v2438
    %2541 = vmatprep.subr.bf16.mxu0 %v2443
    %2542 = vmatpush1.bf16.msra.mxu0 %v2442
    %2543 = vmatprep.subr.bf16.mxu0 %v2447
    %2544 = vmatpush1.bf16.msra.mxu0 %v2446
    %2545 = vmatprep.subr.bf16.mxu0 %v2451
    %2546 = vmatpush1.bf16.msra.mxu0 %v2450
    %2547 = vmatprep.subr.bf16.mxu0 %v2455
    %2548 = vmatpush1.bf16.msra.mxu0 %v2454
    %2549 = vmatprep.subr.bf16.mxu0 %v2459
    %2550 = vmatpush1.bf16.msra.mxu0 %v2458
    %2551 = vmatprep.subr.bf16.mxu0 %v2463
    %2552 = vmatpush1.bf16.msra.mxu0 %v2462
    %2553 = vmatprep.subr.bf16.mxu0 0
    %2554 = vmatpush1.bf16.msra.mxu0 0
    %2555 = vmatprep.subr.bf16.mxu0 0
    %2556 = vmatpush1.bf16.msra.mxu0 0
    %2557 = vmatprep.subr.bf16.mxu0 0
    %2558 = vmatpush1.bf16.msra.mxu0 0
    %2559 = vmatprep.subr.bf16.mxu0 0
    %2560 = vmatpush1.bf16.msra.mxu0 0
    %2561 = vmatprep.subr.bf16.mxu0 0
    %2562 = vmatpush1.bf16.msra.mxu0 0
    %2563 = vmatprep.subr.bf16.mxu0 0
    %2564 = vmatpush1.bf16.msra.mxu0 0
    %2565 = vmatprep.subr.bf16.mxu0 0
    %2566 = vmatpush1.bf16.msra.mxu0 0
    %2567 = vmatprep.subr.bf16.mxu0 0
    %2568 = vmatpush1.bf16.msra.mxu0 0
    %2569 = vmatprep.mubr.bf16.mxu0 0
    %2570 = vmatmul.mubr.bf16.gmra.mrb[0].mxu0 %v2291
    %v2571 = vpop.f32.mrb[0].mxu0
    %v2572 = vadd.f32 0.0, %v2571
    %v2573 = vpop.f32.mrb[0].mxu0
    %v2574 = vadd.f32 0.0, %v2573
    %v2575 = vpop.f32.mrb[0].mxu0
    %v2576 = vpop.f32.mrb[0].mxu0
    %2577 = vdwg.mxu0
    %v2586 = vunpack.c.l.b16 %v2296
    %v2587 = vunpack.c.h.b16 %v2296
    %v2588 = vunpack.c.l.b16 %v2297
    %v2589 = vunpack.c.h.b16 %v2297
    %v2590 = vunpack.c.l.b16 %v2298
    %v2591 = vunpack.c.h.b16 %v2298
    %v2592 = vunpack.c.l.b16 %v2299
    %v2593 = vunpack.c.h.b16 %v2299
    %v2594 = vunpack.c.l.b16 %v2300
    %v2595 = vunpack.c.h.b16 %v2300
    %v2596 = vunpack.c.l.b16 %v2301
    %v2597 = vunpack.c.h.b16 %v2301
    %v2598 = vunpack.c.l.b16 %v2302
    %v2599 = vunpack.c.h.b16 %v2302
    %v2600 = vunpack.c.l.b16 %v2303
    %v2601 = vunpack.c.h.b16 %v2303
    %v2602 = vpack.c.b16 %v2590, %v2586
    %v2603 = vpack.c.b16 %v2591, %v2587
    %v2604 = vpack.c.b16 %v2592, %v2588
    %v2605 = vpack.c.b16 %v2593, %v2589
    %v2606 = vpack.c.b16 %v2598, %v2594
    %v2607 = vpack.c.b16 %v2599, %v2595
    %v2608 = vpack.c.b16 %v2600, %v2596
    %v2609 = vpack.c.b16 %v2601, %v2597
    %v2619 = vsel %vm397, %v2295, 0
    %2621 = vmatprep.subr.bf16.mxu0 %v2603
    %2622 = vmatpush1.bf16.msra.mxu0 %v2602
    %2623 = vmatprep.subr.bf16.mxu0 %v2607
    %2624 = vmatpush1.bf16.msra.mxu0 %v2606
    %2625 = vmatprep.subr.bf16.mxu0 0
    %2626 = vmatpush1.bf16.msra.mxu0 0
    %2627 = vmatprep.subr.bf16.mxu0 0
    %2628 = vmatpush1.bf16.msra.mxu0 0
    %2629 = vmatprep.subr.bf16.mxu0 0
    %2630 = vmatpush1.bf16.msra.mxu0 0
    %2631 = vmatprep.subr.bf16.mxu0 0
    %2632 = vmatpush1.bf16.msra.mxu0 0
    %2633 = vmatprep.subr.bf16.mxu0 0
    %2634 = vmatpush1.bf16.msra.mxu0 0
    %2635 = vmatprep.subr.bf16.mxu0 0
    %2636 = vmatpush1.bf16.msra.mxu0 0
    %2637 = vmatprep.subr.bf16.mxu0 0
    %2638 = vmatpush1.bf16.msra.mxu0 0
    %2639 = vmatprep.subr.bf16.mxu0 0
    %2640 = vmatpush1.bf16.msra.mxu0 0
    %2641 = vmatprep.subr.bf16.mxu0 0
    %2642 = vmatpush1.bf16.msra.mxu0 0
    %2643 = vmatprep.subr.bf16.mxu0 0
    %2644 = vmatpush1.bf16.msra.mxu0 0
    %2645 = vmatprep.subr.bf16.mxu0 0
    %2646 = vmatpush1.bf16.msra.mxu0 0
    %2647 = vmatprep.subr.bf16.mxu0 0
    %2648 = vmatpush1.bf16.msra.mxu0 0
    %2649 = vmatprep.subr.bf16.mxu0 0
    %2650 = vmatpush1.bf16.msra.mxu0 0
    %2651 = vmatprep.subr.bf16.mxu0 0
    %2652 = vmatpush1.bf16.msra.mxu0 0
    %2653 = vmatprep.mubr.bf16.mxu0 0
    %2654 = vmatmul.mubr.bf16.gmra.mrb[0].mxu0 %v2619
    %v2655 = vpop.f32.mrb[0].mxu0
    %v2656 = vadd.f32 %v2531, %v2655
    %v2657 = vpop.f32.mrb[0].mxu0
    %v2658 = vadd.f32 %v2533, %v2657
    %v2659 = vpop.f32.mrb[0].mxu0
    %v2660 = vpop.f32.mrb[0].mxu0
    %2661 = vdwg.mxu0
    %2662 = vmatprep.subr.bf16.mxu0 %v2605
    %2663 = vmatpush1.bf16.msra.mxu0 %v2604
    %2664 = vmatprep.subr.bf16.mxu0 %v2609
    %2665 = vmatpush1.bf16.msra.mxu0 %v2608
    %2666 = vmatprep.subr.bf16.mxu0 0
    %2667 = vmatpush1.bf16.msra.mxu0 0
    %2668 = vmatprep.subr.bf16.mxu0 0
    %2669 = vmatpush1.bf16.msra.mxu0 0
    %2670 = vmatprep.subr.bf16.mxu0 0
    %2671 = vmatpush1.bf16.msra.mxu0 0
    %2672 = vmatprep.subr.bf16.mxu0 0
    %2673 = vmatpush1.bf16.msra.mxu0 0
    %2674 = vmatprep.subr.bf16.mxu0 0
    %2675 = vmatpush1.bf16.msra.mxu0 0
    %2676 = vmatprep.subr.bf16.mxu0 0
    %2677 = vmatpush1.bf16.msra.mxu0 0
    %2678 = vmatprep.subr.bf16.mxu0 0
    %2679 = vmatpush1.bf16.msra.mxu0 0
    %2680 = vmatprep.subr.bf16.mxu0 0
    %2681 = vmatpush1.bf16.msra.mxu0 0
    %2682 = vmatprep.subr.bf16.mxu0 0
    %2683 = vmatpush1.bf16.msra.mxu0 0
    %2684 = vmatprep.subr.bf16.mxu0 0
    %2685 = vmatpush1.bf16.msra.mxu0 0
    %2686 = vmatprep.subr.bf16.mxu0 0
    %2687 = vmatpush1.bf16.msra.mxu0 0
    %2688 = vmatprep.subr.bf16.mxu0 0
    %2689 = vmatpush1.bf16.msra.mxu0 0
    %2690 = vmatprep.subr.bf16.mxu0 0
    %2691 = vmatpush1.bf16.msra.mxu0 0
    %2692 = vmatprep.subr.bf16.mxu0 0
    %2693 = vmatpush1.bf16.msra.mxu0 0
    %2694 = vmatprep.mubr.bf16.mxu0 0
    %2695 = vmatmul.mubr.bf16.gmra.mrb[0].mxu0 %v2619
    %v2696 = vpop.f32.mrb[0].mxu0
    %v2697 = vadd.f32 %v2572, %v2696
    %v2698 = vpop.f32.mrb[0].mxu0
    %v2699 = vadd.f32 %v2574, %v2698
    %v2700 = vpop.f32.mrb[0].mxu0
    %v2701 = vpop.f32.mrb[0].mxu0
    %2702 = vdwg.mxu0
    %v2703 = vadd.f32 %v2656, %v487
    %v2704 = vadd.f32 %v2658, %v491
    %v2705 = vadd.f32 %v2697, %v495
    %v2706 = vadd.f32 %v2699, %v499
    %v2707 = vxor.u32 %v2703, 2147483648
    %v2708 = vmul.f32 %v2707, 1.442695
    %v2709 = vpow.pop %v2708
    %v2710 = vadd.f32 %v2709, 1.0
    %v2711 = vrcp.pop %v2710
    %v2712 = vmul.f32 1.0, %v2711
    %v2713 = vxor.u32 %v2704, 2147483648
    %v2714 = vmul.f32 %v2713, 1.442695
    %v2715 = vpow.pop %v2714
    %v2716 = vadd.f32 %v2715, 1.0
    %v2717 = vrcp.pop %v2716
    %v2718 = vmul.f32 1.0, %v2717
    %v2719 = vtanh.pop %v2705
    %v2720 = vxor.u32 %v2706, 2147483648
    %v2721 = vmul.f32 %v2720, 1.442695
    %v2722 = vpow.pop %v2721
    %v2723 = vadd.f32 %v2722, 1.0
    %v2724 = vrcp.pop %v2723
    %v2725 = vmul.f32 1.0, %v2724
    %v2726 = vmul.f32 %v2718, %v2288
    %v2727 = vmul.f32 %v2712, %v2719
    %v2728 = vadd.f32 %v2726, %v2727
    %v2729 = vtanh.pop %v2728
    %v2730 = vmul.f32 %v2725, %v2729
    %v2731 = vpack.c.bf16 %v2730, %v2730
    %s2732 = scalar_lea.vmem [#allocation10], 5
    %2733 = vst [vmem:[%s2732] sm:$0x1] %v2731
    %s2734 = scalar_lea.vmem [#allocation4], 6
    %v2735 = vld [vmem:[%s2734] sm:$0x1]
    %v2736 = vld [vmem:[#allocation7] sm:$0xff]
    %v2737 = vld [vmem:[#allocation7 + $0x8] sm:$0xff]
    %v2738 = vld [vmem:[#allocation7 + $0x10] sm:$0xff]
    %v2739 = vld [vmem:[#allocation7 + $0x18] sm:$0xff]
    %v2740 = vld [vmem:[#allocation7 + $0x20] sm:$0xff]
    %v2741 = vld [vmem:[#allocation7 + $0x28] sm:$0xff]
    %v2742 = vld [vmem:[#allocation7 + $0x30] sm:$0xff]
    %v2743 = vld [vmem:[#allocation7 + $0x38] sm:$0xff]
    %v2744 = vld [vmem:[#allocation9] sm:$0xff]
    %v2745 = vld [vmem:[#allocation9 + $0x8] sm:$0xff]
    %v2746 = vld [vmem:[#allocation9 + $0x10] sm:$0xff]
    %v2747 = vld [vmem:[#allocation9 + $0x18] sm:$0xff]
    %v2748 = vld [vmem:[#allocation9 + $0x20] sm:$0xff]
    %v2749 = vld [vmem:[#allocation9 + $0x28] sm:$0xff]
    %v2750 = vld [vmem:[#allocation9 + $0x30] sm:$0xff]
    %v2751 = vld [vmem:[#allocation9 + $0x38] sm:$0xff]
    %v2752 = vld [vmem:[#allocation9 + $0x40] sm:$0xff]
    %v2753 = vld [vmem:[#allocation9 + $0x48] sm:$0xff]
    %v2754 = vld [vmem:[#allocation9 + $0x50] sm:$0xff]
    %v2755 = vld [vmem:[#allocation9 + $0x58] sm:$0xff]
    %v2756 = vld [vmem:[#allocation9 + $0x60] sm:$0xff]
    %v2757 = vld [vmem:[#allocation9 + $0x68] sm:$0xff]
    %v2758 = vld [vmem:[#allocation9 + $0x70] sm:$0xff]
    %v2759 = vld [vmem:[#allocation9 + $0x78] sm:$0xff]
    %v2760 = vld [vmem:[#allocation9 + $0x80] sm:$0xff]
    %v2761 = vld [vmem:[#allocation9 + $0x88] sm:$0xff]
    %v2762 = vld [vmem:[#allocation9 + $0x90] sm:$0xff]
    %v2763 = vld [vmem:[#allocation9 + $0x98] sm:$0xff]
    %v2764 = vld [vmem:[#allocation9 + $0xa0] sm:$0xff]
    %v2765 = vld [vmem:[#allocation9 + $0xa8] sm:$0xff]
    %v2766 = vld [vmem:[#allocation9 + $0xb0] sm:$0xff]
    %v2767 = vld [vmem:[#allocation9 + $0xb8] sm:$0xff]
    %v2768 = vld [vmem:[#allocation9 + $0xc0] sm:$0xff]
    %v2769 = vld [vmem:[#allocation9 + $0xc8] sm:$0xff]
    %v2770 = vld [vmem:[#allocation9 + $0xd0] sm:$0xff]
    %v2771 = vld [vmem:[#allocation9 + $0xd8] sm:$0xff]
    %v2772 = vld [vmem:[#allocation9 + $0xe0] sm:$0xff]
    %v2773 = vld [vmem:[#allocation9 + $0xe8] sm:$0xff]
    %v2774 = vld [vmem:[#allocation9 + $0xf0] sm:$0xff]
    %v2775 = vld [vmem:[#allocation9 + $0xf8] sm:$0xff]
    %v2808 = vunpack.c.l.b16 %v2744
    %v2809 = vunpack.c.h.b16 %v2744
    %v2810 = vunpack.c.l.b16 %v2745
    %v2811 = vunpack.c.h.b16 %v2745
    %v2812 = vunpack.c.l.b16 %v2746
    %v2813 = vunpack.c.h.b16 %v2746
    %v2814 = vunpack.c.l.b16 %v2747
    %v2815 = vunpack.c.h.b16 %v2747
    %v2816 = vunpack.c.l.b16 %v2748
    %v2817 = vunpack.c.h.b16 %v2748
    %v2818 = vunpack.c.l.b16 %v2749
    %v2819 = vunpack.c.h.b16 %v2749
    %v2820 = vunpack.c.l.b16 %v2750
    %v2821 = vunpack.c.h.b16 %v2750
    %v2822 = vunpack.c.l.b16 %v2751
    %v2823 = vunpack.c.h.b16 %v2751
    %v2824 = vunpack.c.l.b16 %v2752
    %v2825 = vunpack.c.h.b16 %v2752
    %v2826 = vunpack.c.l.b16 %v2753
    %v2827 = vunpack.c.h.b16 %v2753
    %v2828 = vunpack.c.l.b16 %v2754
    %v2829 = vunpack.c.h.b16 %v2754
    %v2830 = vunpack.c.l.b16 %v2755
    %v2831 = vunpack.c.h.b16 %v2755
    %v2832 = vunpack.c.l.b16 %v2756
    %v2833 = vunpack.c.h.b16 %v2756
    %v2834 = vunpack.c.l.b16 %v2757
    %v2835 = vunpack.c.h.b16 %v2757
    %v2836 = vunpack.c.l.b16 %v2758
    %v2837 = vunpack.c.h.b16 %v2758
    %v2838 = vunpack.c.l.b16 %v2759
    %v2839 = vunpack.c.h.b16 %v2759
    %v2840 = vunpack.c.l.b16 %v2760
    %v2841 = vunpack.c.h.b16 %v2760
    %v2842 = vunpack.c.l.b16 %v2761
    %v2843 = vunpack.c.h.b16 %v2761
    %v2844 = vunpack.c.l.b16 %v2762
    %v2845 = vunpack.c.h.b16 %v2762
    %v2846 = vunpack.c.l.b16 %v2763
    %v2847 = vunpack.c.h.b16 %v2763
    %v2848 = vunpack.c.l.b16 %v2764
    %v2849 = vunpack.c.h.b16 %v2764
    %v2850 = vunpack.c.l.b16 %v2765
    %v2851 = vunpack.c.h.b16 %v2765
    %v2852 = vunpack.c.l.b16 %v2766
    %v2853 = vunpack.c.h.b16 %v2766
    %v2854 = vunpack.c.l.b16 %v2767
    %v2855 = vunpack.c.h.b16 %v2767
    %v2856 = vunpack.c.l.b16 %v2768
    %v2857 = vunpack.c.h.b16 %v2768
    %v2858 = vunpack.c.l.b16 %v2769
    %v2859 = vunpack.c.h.b16 %v2769
    %v2860 = vunpack.c.l.b16 %v2770
    %v2861 = vunpack.c.h.b16 %v2770
    %v2862 = vunpack.c.l.b16 %v2771
    %v2863 = vunpack.c.h.b16 %v2771
    %v2864 = vunpack.c.l.b16 %v2772
    %v2865 = vunpack.c.h.b16 %v2772
    %v2866 = vunpack.c.l.b16 %v2773
    %v2867 = vunpack.c.h.b16 %v2773
    %v2868 = vunpack.c.l.b16 %v2774
    %v2869 = vunpack.c.h.b16 %v2774
    %v2870 = vunpack.c.l.b16 %v2775
    %v2871 = vunpack.c.h.b16 %v2775
    %v2872 = vpack.c.b16 %v2812, %v2808
    %v2873 = vpack.c.b16 %v2813, %v2809
    %v2874 = vpack.c.b16 %v2814, %v2810
    %v2875 = vpack.c.b16 %v2815, %v2811
    %v2876 = vpack.c.b16 %v2820, %v2816
    %v2877 = vpack.c.b16 %v2821, %v2817
    %v2878 = vpack.c.b16 %v2822, %v2818
    %v2879 = vpack.c.b16 %v2823, %v2819
    %v2880 = vpack.c.b16 %v2828, %v2824
    %v2881 = vpack.c.b16 %v2829, %v2825
    %v2882 = vpack.c.b16 %v2830, %v2826
    %v2883 = vpack.c.b16 %v2831, %v2827
    %v2884 = vpack.c.b16 %v2836, %v2832
    %v2885 = vpack.c.b16 %v2837, %v2833
    %v2886 = vpack.c.b16 %v2838, %v2834
    %v2887 = vpack.c.b16 %v2839, %v2835
    %v2888 = vpack.c.b16 %v2844, %v2840
    %v2889 = vpack.c.b16 %v2845, %v2841
    %v2890 = vpack.c.b16 %v2846, %v2842
    %v2891 = vpack.c.b16 %v2847, %v2843
    %v2892 = vpack.c.b16 %v2852, %v2848
    %v2893 = vpack.c.b16 %v2853, %v2849
    %v2894 = vpack.c.b16 %v2854, %v2850
    %v2895 = vpack.c.b16 %v2855, %v2851
    %v2896 = vpack.c.b16 %v2860, %v2856
    %v2897 = vpack.c.b16 %v2861, %v2857
    %v2898 = vpack.c.b16 %v2862, %v2858
    %v2899 = vpack.c.b16 %v2863, %v2859
    %v2900 = vpack.c.b16 %v2868, %v2864
    %v2901 = vpack.c.b16 %v2869, %v2865
    %v2902 = vpack.c.b16 %v2870, %v2866
    %v2903 = vpack.c.b16 %v2871, %v2867
    %2936 = vmatprep.subr.bf16.mxu0 %v2873
    %2937 = vmatpush1.bf16.msra.mxu0 %v2872
    %2938 = vmatprep.subr.bf16.mxu0 %v2877
    %2939 = vmatpush1.bf16.msra.mxu0 %v2876
    %2940 = vmatprep.subr.bf16.mxu0 %v2881
    %2941 = vmatpush1.bf16.msra.mxu0 %v2880
    %2942 = vmatprep.subr.bf16.mxu0 %v2885
    %2943 = vmatpush1.bf16.msra.mxu0 %v2884
    %2944 = vmatprep.subr.bf16.mxu0 %v2889
    %2945 = vmatpush1.bf16.msra.mxu0 %v2888
    %2946 = vmatprep.subr.bf16.mxu0 %v2893
    %2947 = vmatpush1.bf16.msra.mxu0 %v2892
    %2948 = vmatprep.subr.bf16.mxu0 %v2897
    %2949 = vmatpush1.bf16.msra.mxu0 %v2896
    %2950 = vmatprep.subr.bf16.mxu0 %v2901
    %2951 = vmatpush1.bf16.msra.mxu0 %v2900
    %2952 = vmatprep.subr.bf16.mxu0 0
    %2953 = vmatpush1.bf16.msra.mxu0 0
    %2954 = vmatprep.subr.bf16.mxu0 0
    %2955 = vmatpush1.bf16.msra.mxu0 0
    %2956 = vmatprep.subr.bf16.mxu0 0
    %2957 = vmatpush1.bf16.msra.mxu0 0
    %2958 = vmatprep.subr.bf16.mxu0 0
    %2959 = vmatpush1.bf16.msra.mxu0 0
    %2960 = vmatprep.subr.bf16.mxu0 0
    %2961 = vmatpush1.bf16.msra.mxu0 0
    %2962 = vmatprep.subr.bf16.mxu0 0
    %2963 = vmatpush1.bf16.msra.mxu0 0
    %2964 = vmatprep.subr.bf16.mxu0 0
    %2965 = vmatpush1.bf16.msra.mxu0 0
    %2966 = vmatprep.subr.bf16.mxu0 0
    %2967 = vmatpush1.bf16.msra.mxu0 0
    %2968 = vmatprep.mubr.bf16.mxu0 0
    %2969 = vmatmul.mubr.bf16.gmra.mrb[0].mxu0 %v2731
    %v2970 = vpop.f32.mrb[0].mxu0
    %v2971 = vadd.f32 0.0, %v2970
    %v2972 = vpop.f32.mrb[0].mxu0
    %v2973 = vadd.f32 0.0, %v2972
    %v2974 = vpop.f32.mrb[0].mxu0
    %v2975 = vpop.f32.mrb[0].mxu0
    %2976 = vdwg.mxu0
    %2977 = vmatprep.subr.bf16.mxu0 %v2875
    %2978 = vmatpush1.bf16.msra.mxu0 %v2874
    %2979 = vmatprep.subr.bf16.mxu0 %v2879
    %2980 = vmatpush1.bf16.msra.mxu0 %v2878
    %2981 = vmatprep.subr.bf16.mxu0 %v2883
    %2982 = vmatpush1.bf16.msra.mxu0 %v2882
    %2983 = vmatprep.subr.bf16.mxu0 %v2887
    %2984 = vmatpush1.bf16.msra.mxu0 %v2886
    %2985 = vmatprep.subr.bf16.mxu0 %v2891
    %2986 = vmatpush1.bf16.msra.mxu0 %v2890
    %2987 = vmatprep.subr.bf16.mxu0 %v2895
    %2988 = vmatpush1.bf16.msra.mxu0 %v2894
    %2989 = vmatprep.subr.bf16.mxu0 %v2899
    %2990 = vmatpush1.bf16.msra.mxu0 %v2898
    %2991 = vmatprep.subr.bf16.mxu0 %v2903
    %2992 = vmatpush1.bf16.msra.mxu0 %v2902
    %2993 = vmatprep.subr.bf16.mxu0 0
    %2994 = vmatpush1.bf16.msra.mxu0 0
    %2995 = vmatprep.subr.bf16.mxu0 0
    %2996 = vmatpush1.bf16.msra.mxu0 0
    %2997 = vmatprep.subr.bf16.mxu0 0
    %2998 = vmatpush1.bf16.msra.mxu0 0
    %2999 = vmatprep.subr.bf16.mxu0 0
    %3000 = vmatpush1.bf16.msra.mxu0 0
    %3001 = vmatprep.subr.bf16.mxu0 0
    %3002 = vmatpush1.bf16.msra.mxu0 0
    %3003 = vmatprep.subr.bf16.mxu0 0
    %3004 = vmatpush1.bf16.msra.mxu0 0
    %3005 = vmatprep.subr.bf16.mxu0 0
    %3006 = vmatpush1.bf16.msra.mxu0 0
    %3007 = vmatprep.subr.bf16.mxu0 0
    %3008 = vmatpush1.bf16.msra.mxu0 0
    %3009 = vmatprep.mubr.bf16.mxu0 0
    %3010 = vmatmul.mubr.bf16.gmra.mrb[0].mxu0 %v2731
    %v3011 = vpop.f32.mrb[0].mxu0
    %v3012 = vadd.f32 0.0, %v3011
    %v3013 = vpop.f32.mrb[0].mxu0
    %v3014 = vadd.f32 0.0, %v3013
    %v3015 = vpop.f32.mrb[0].mxu0
    %v3016 = vpop.f32.mrb[0].mxu0
    %3017 = vdwg.mxu0
    %v3026 = vunpack.c.l.b16 %v2736
    %v3027 = vunpack.c.h.b16 %v2736
    %v3028 = vunpack.c.l.b16 %v2737
    %v3029 = vunpack.c.h.b16 %v2737
    %v3030 = vunpack.c.l.b16 %v2738
    %v3031 = vunpack.c.h.b16 %v2738
    %v3032 = vunpack.c.l.b16 %v2739
    %v3033 = vunpack.c.h.b16 %v2739
    %v3034 = vunpack.c.l.b16 %v2740
    %v3035 = vunpack.c.h.b16 %v2740
    %v3036 = vunpack.c.l.b16 %v2741
    %v3037 = vunpack.c.h.b16 %v2741
    %v3038 = vunpack.c.l.b16 %v2742
    %v3039 = vunpack.c.h.b16 %v2742
    %v3040 = vunpack.c.l.b16 %v2743
    %v3041 = vunpack.c.h.b16 %v2743
    %v3042 = vpack.c.b16 %v3030, %v3026
    %v3043 = vpack.c.b16 %v3031, %v3027
    %v3044 = vpack.c.b16 %v3032, %v3028
    %v3045 = vpack.c.b16 %v3033, %v3029
    %v3046 = vpack.c.b16 %v3038, %v3034
    %v3047 = vpack.c.b16 %v3039, %v3035
    %v3048 = vpack.c.b16 %v3040, %v3036
    %v3049 = vpack.c.b16 %v3041, %v3037
    %v3059 = vsel %vm397, %v2735, 0
    %3061 = vmatprep.subr.bf16.mxu0 %v3043
    %3062 = vmatpush1.bf16.msra.mxu0 %v3042
    %3063 = vmatprep.subr.bf16.mxu0 %v3047
    %3064 = vmatpush1.bf16.msra.mxu0 %v3046
    %3065 = vmatprep.subr.bf16.mxu0 0
    %3066 = vmatpush1.bf16.msra.mxu0 0
    %3067 = vmatprep.subr.bf16.mxu0 0
    %3068 = vmatpush1.bf16.msra.mxu0 0
    %3069 = vmatprep.subr.bf16.mxu0 0
    %3070 = vmatpush1.bf16.msra.mxu0 0
    %3071 = vmatprep.subr.bf16.mxu0 0
    %3072 = vmatpush1.bf16.msra.mxu0 0
    %3073 = vmatprep.subr.bf16.mxu0 0
    %3074 = vmatpush1.bf16.msra.mxu0 0
    %3075 = vmatprep.subr.bf16.mxu0 0
    %3076 = vmatpush1.bf16.msra.mxu0 0
    %3077 = vmatprep.subr.bf16.mxu0 0
    %3078 = vmatpush1.bf16.msra.mxu0 0
    %3079 = vmatprep.subr.bf16.mxu0 0
    %3080 = vmatpush1.bf16.msra.mxu0 0
    %3081 = vmatprep.subr.bf16.mxu0 0
    %3082 = vmatpush1.bf16.msra.mxu0 0
    %3083 = vmatprep.subr.bf16.mxu0 0
    %3084 = vmatpush1.bf16.msra.mxu0 0
    %3085 = vmatprep.subr.bf16.mxu0 0
    %3086 = vmatpush1.bf16.msra.mxu0 0
    %3087 = vmatprep.subr.bf16.mxu0 0
    %3088 = vmatpush1.bf16.msra.mxu0 0
    %3089 = vmatprep.subr.bf16.mxu0 0
    %3090 = vmatpush1.bf16.msra.mxu0 0
    %3091 = vmatprep.subr.bf16.mxu0 0
    %3092 = vmatpush1.bf16.msra.mxu0 0
    %3093 = vmatprep.mubr.bf16.mxu0 0
    %3094 = vmatmul.mubr.bf16.gmra.mrb[0].mxu0 %v3059
    %v3095 = vpop.f32.mrb[0].mxu0
    %v3096 = vadd.f32 %v2971, %v3095
    %v3097 = vpop.f32.mrb[0].mxu0
    %v3098 = vadd.f32 %v2973, %v3097
    %v3099 = vpop.f32.mrb[0].mxu0
    %v3100 = vpop.f32.mrb[0].mxu0
    %3101 = vdwg.mxu0
    %3102 = vmatprep.subr.bf16.mxu0 %v3045
    %3103 = vmatpush1.bf16.msra.mxu0 %v3044
    %3104 = vmatprep.subr.bf16.mxu0 %v3049
    %3105 = vmatpush1.bf16.msra.mxu0 %v3048
    %3106 = vmatprep.subr.bf16.mxu0 0
    %3107 = vmatpush1.bf16.msra.mxu0 0
    %3108 = vmatprep.subr.bf16.mxu0 0
    %3109 = vmatpush1.bf16.msra.mxu0 0
    %3110 = vmatprep.subr.bf16.mxu0 0
    %3111 = vmatpush1.bf16.msra.mxu0 0
    %3112 = vmatprep.subr.bf16.mxu0 0
    %3113 = vmatpush1.bf16.msra.mxu0 0
    %3114 = vmatprep.subr.bf16.mxu0 0
    %3115 = vmatpush1.bf16.msra.mxu0 0
    %3116 = vmatprep.subr.bf16.mxu0 0
    %3117 = vmatpush1.bf16.msra.mxu0 0
    %3118 = vmatprep.subr.bf16.mxu0 0
    %3119 = vmatpush1.bf16.msra.mxu0 0
    %3120 = vmatprep.subr.bf16.mxu0 0
    %3121 = vmatpush1.bf16.msra.mxu0 0
    %3122 = vmatprep.subr.bf16.mxu0 0
    %3123 = vmatpush1.bf16.msra.mxu0 0
    %3124 = vmatprep.subr.bf16.mxu0 0
    %3125 = vmatpush1.bf16.msra.mxu0 0
    %3126 = vmatprep.subr.bf16.mxu0 0
    %3127 = vmatpush1.bf16.msra.mxu0 0
    %3128 = vmatprep.subr.bf16.mxu0 0
    %3129 = vmatpush1.bf16.msra.mxu0 0
    %3130 = vmatprep.subr.bf16.mxu0 0
    %3131 = vmatpush1.bf16.msra.mxu0 0
    %3132 = vmatprep.subr.bf16.mxu0 0
    %3133 = vmatpush1.bf16.msra.mxu0 0
    %3134 = vmatprep.mubr.bf16.mxu0 0
    %3135 = vmatmul.mubr.bf16.gmra.mrb[0].mxu0 %v3059
    %v3136 = vpop.f32.mrb[0].mxu0
    %v3137 = vadd.f32 %v3012, %v3136
    %v3138 = vpop.f32.mrb[0].mxu0
    %v3139 = vadd.f32 %v3014, %v3138
    %v3140 = vpop.f32.mrb[0].mxu0
    %v3141 = vpop.f32.mrb[0].mxu0
    %3142 = vdwg.mxu0
    %v3143 = vadd.f32 %v3096, %v487
    %v3144 = vadd.f32 %v3098, %v491
    %v3145 = vadd.f32 %v3137, %v495
    %v3146 = vadd.f32 %v3139, %v499
    %v3147 = vxor.u32 %v3143, 2147483648
    %v3148 = vmul.f32 %v3147, 1.442695
    %v3149 = vpow.pop %v3148
    %v3150 = vadd.f32 %v3149, 1.0
    %v3151 = vrcp.pop %v3150
    %v3152 = vmul.f32 1.0, %v3151
    %v3153 = vxor.u32 %v3144, 2147483648
    %v3154 = vmul.f32 %v3153, 1.442695
    %v3155 = vpow.pop %v3154
    %v3156 = vadd.f32 %v3155, 1.0
    %v3157 = vrcp.pop %v3156
    %v3158 = vmul.f32 1.0, %v3157
    %v3159 = vtanh.pop %v3145
    %v3160 = vxor.u32 %v3146, 2147483648
    %v3161 = vmul.f32 %v3160, 1.442695
    %v3162 = vpow.pop %v3161
    %v3163 = vadd.f32 %v3162, 1.0
    %v3164 = vrcp.pop %v3163
    %v3165 = vmul.f32 1.0, %v3164
    %v3166 = vmul.f32 %v3158, %v2728
    %v3167 = vmul.f32 %v3152, %v3159
    %v3168 = vadd.f32 %v3166, %v3167
    %v3169 = vtanh.pop %v3168
    %v3170 = vmul.f32 %v3165, %v3169
    %v3171 = vpack.c.bf16 %v3170, %v3170
    %s3172 = scalar_lea.vmem [#allocation10], 6
    %3173 = vst [vmem:[%s3172] sm:$0x1] %v3171
    %s3174 = scalar_lea.vmem [#allocation4], 7
    %v3175 = vld [vmem:[%s3174] sm:$0x1]
    %v3176 = vld [vmem:[#allocation7] sm:$0xff]
    %v3177 = vld [vmem:[#allocation7 + $0x8] sm:$0xff]
    %v3178 = vld [vmem:[#allocation7 + $0x10] sm:$0xff]
    %v3179 = vld [vmem:[#allocation7 + $0x18] sm:$0xff]
    %v3180 = vld [vmem:[#allocation7 + $0x20] sm:$0xff]
    %v3181 = vld [vmem:[#allocation7 + $0x28] sm:$0xff]
    %v3182 = vld [vmem:[#allocation7 + $0x30] sm:$0xff]
    %v3183 = vld [vmem:[#allocation7 + $0x38] sm:$0xff]
    %v3184 = vld [vmem:[#allocation9] sm:$0xff]
    %v3185 = vld [vmem:[#allocation9 + $0x8] sm:$0xff]
    %v3186 = vld [vmem:[#allocation9 + $0x10] sm:$0xff]
    %v3187 = vld [vmem:[#allocation9 + $0x18] sm:$0xff]
    %v3188 = vld [vmem:[#allocation9 + $0x20] sm:$0xff]
    %v3189 = vld [vmem:[#allocation9 + $0x28] sm:$0xff]
    %v3190 = vld [vmem:[#allocation9 + $0x30] sm:$0xff]
    %v3191 = vld [vmem:[#allocation9 + $0x38] sm:$0xff]
    %v3192 = vld [vmem:[#allocation9 + $0x40] sm:$0xff]
    %v3193 = vld [vmem:[#allocation9 + $0x48] sm:$0xff]
    %v3194 = vld [vmem:[#allocation9 + $0x50] sm:$0xff]
    %v3195 = vld [vmem:[#allocation9 + $0x58] sm:$0xff]
    %v3196 = vld [vmem:[#allocation9 + $0x60] sm:$0xff]
    %v3197 = vld [vmem:[#allocation9 + $0x68] sm:$0xff]
    %v3198 = vld [vmem:[#allocation9 + $0x70] sm:$0xff]
    %v3199 = vld [vmem:[#allocation9 + $0x78] sm:$0xff]
    %v3200 = vld [vmem:[#allocation9 + $0x80] sm:$0xff]
    %v3201 = vld [vmem:[#allocation9 + $0x88] sm:$0xff]
    %v3202 = vld [vmem:[#allocation9 + $0x90] sm:$0xff]
    %v3203 = vld [vmem:[#allocation9 + $0x98] sm:$0xff]
    %v3204 = vld [vmem:[#allocation9 + $0xa0] sm:$0xff]
    %v3205 = vld [vmem:[#allocation9 + $0xa8] sm:$0xff]
    %v3206 = vld [vmem:[#allocation9 + $0xb0] sm:$0xff]
    %v3207 = vld [vmem:[#allocation9 + $0xb8] sm:$0xff]
    %v3208 = vld [vmem:[#allocation9 + $0xc0] sm:$0xff]
    %v3209 = vld [vmem:[#allocation9 + $0xc8] sm:$0xff]
    %v3210 = vld [vmem:[#allocation9 + $0xd0] sm:$0xff]
    %v3211 = vld [vmem:[#allocation9 + $0xd8] sm:$0xff]
    %v3212 = vld [vmem:[#allocation9 + $0xe0] sm:$0xff]
    %v3213 = vld [vmem:[#allocation9 + $0xe8] sm:$0xff]
    %v3214 = vld [vmem:[#allocation9 + $0xf0] sm:$0xff]
    %v3215 = vld [vmem:[#allocation9 + $0xf8] sm:$0xff]
    %v3248 = vunpack.c.l.b16 %v3184
    %v3249 = vunpack.c.h.b16 %v3184
    %v3250 = vunpack.c.l.b16 %v3185
    %v3251 = vunpack.c.h.b16 %v3185
    %v3252 = vunpack.c.l.b16 %v3186
    %v3253 = vunpack.c.h.b16 %v3186
    %v3254 = vunpack.c.l.b16 %v3187
    %v3255 = vunpack.c.h.b16 %v3187
    %v3256 = vunpack.c.l.b16 %v3188
    %v3257 = vunpack.c.h.b16 %v3188
    %v3258 = vunpack.c.l.b16 %v3189
    %v3259 = vunpack.c.h.b16 %v3189
    %v3260 = vunpack.c.l.b16 %v3190
    %v3261 = vunpack.c.h.b16 %v3190
    %v3262 = vunpack.c.l.b16 %v3191
    %v3263 = vunpack.c.h.b16 %v3191
    %v3264 = vunpack.c.l.b16 %v3192
    %v3265 = vunpack.c.h.b16 %v3192
    %v3266 = vunpack.c.l.b16 %v3193
    %v3267 = vunpack.c.h.b16 %v3193
    %v3268 = vunpack.c.l.b16 %v3194
    %v3269 = vunpack.c.h.b16 %v3194
    %v3270 = vunpack.c.l.b16 %v3195
    %v3271 = vunpack.c.h.b16 %v3195
    %v3272 = vunpack.c.l.b16 %v3196
    %v3273 = vunpack.c.h.b16 %v3196
    %v3274 = vunpack.c.l.b16 %v3197
    %v3275 = vunpack.c.h.b16 %v3197
    %v3276 = vunpack.c.l.b16 %v3198
    %v3277 = vunpack.c.h.b16 %v3198
    %v3278 = vunpack.c.l.b16 %v3199
    %v3279 = vunpack.c.h.b16 %v3199
    %v3280 = vunpack.c.l.b16 %v3200
    %v3281 = vunpack.c.h.b16 %v3200
    %v3282 = vunpack.c.l.b16 %v3201
    %v3283 = vunpack.c.h.b16 %v3201
    %v3284 = vunpack.c.l.b16 %v3202
    %v3285 = vunpack.c.h.b16 %v3202
    %v3286 = vunpack.c.l.b16 %v3203
    %v3287 = vunpack.c.h.b16 %v3203
    %v3288 = vunpack.c.l.b16 %v3204
    %v3289 = vunpack.c.h.b16 %v3204
    %v3290 = vunpack.c.l.b16 %v3205
    %v3291 = vunpack.c.h.b16 %v3205
    %v3292 = vunpack.c.l.b16 %v3206
    %v3293 = vunpack.c.h.b16 %v3206
    %v3294 = vunpack.c.l.b16 %v3207
    %v3295 = vunpack.c.h.b16 %v3207
    %v3296 = vunpack.c.l.b16 %v3208
    %v3297 = vunpack.c.h.b16 %v3208
    %v3298 = vunpack.c.l.b16 %v3209
    %v3299 = vunpack.c.h.b16 %v3209
    %v3300 = vunpack.c.l.b16 %v3210
    %v3301 = vunpack.c.h.b16 %v3210
    %v3302 = vunpack.c.l.b16 %v3211
    %v3303 = vunpack.c.h.b16 %v3211
    %v3304 = vunpack.c.l.b16 %v3212
    %v3305 = vunpack.c.h.b16 %v3212
    %v3306 = vunpack.c.l.b16 %v3213
    %v3307 = vunpack.c.h.b16 %v3213
    %v3308 = vunpack.c.l.b16 %v3214
    %v3309 = vunpack.c.h.b16 %v3214
    %v3310 = vunpack.c.l.b16 %v3215
    %v3311 = vunpack.c.h.b16 %v3215
    %v3312 = vpack.c.b16 %v3252, %v3248
    %v3313 = vpack.c.b16 %v3253, %v3249
    %v3314 = vpack.c.b16 %v3254, %v3250
    %v3315 = vpack.c.b16 %v3255, %v3251
    %v3316 = vpack.c.b16 %v3260, %v3256
    %v3317 = vpack.c.b16 %v3261, %v3257
    %v3318 = vpack.c.b16 %v3262, %v3258
    %v3319 = vpack.c.b16 %v3263, %v3259
    %v3320 = vpack.c.b16 %v3268, %v3264
    %v3321 = vpack.c.b16 %v3269, %v3265
    %v3322 = vpack.c.b16 %v3270, %v3266
    %v3323 = vpack.c.b16 %v3271, %v3267
    %v3324 = vpack.c.b16 %v3276, %v3272
    %v3325 = vpack.c.b16 %v3277, %v3273
    %v3326 = vpack.c.b16 %v3278, %v3274
    %v3327 = vpack.c.b16 %v3279, %v3275
    %v3328 = vpack.c.b16 %v3284, %v3280
    %v3329 = vpack.c.b16 %v3285, %v3281
    %v3330 = vpack.c.b16 %v3286, %v3282
    %v3331 = vpack.c.b16 %v3287, %v3283
    %v3332 = vpack.c.b16 %v3292, %v3288
    %v3333 = vpack.c.b16 %v3293, %v3289
    %v3334 = vpack.c.b16 %v3294, %v3290
    %v3335 = vpack.c.b16 %v3295, %v3291
    %v3336 = vpack.c.b16 %v3300, %v3296
    %v3337 = vpack.c.b16 %v3301, %v3297
    %v3338 = vpack.c.b16 %v3302, %v3298
    %v3339 = vpack.c.b16 %v3303, %v3299
    %v3340 = vpack.c.b16 %v3308, %v3304
    %v3341 = vpack.c.b16 %v3309, %v3305
    %v3342 = vpack.c.b16 %v3310, %v3306
    %v3343 = vpack.c.b16 %v3311, %v3307
    %3376 = vmatprep.subr.bf16.mxu0 %v3313
    %3377 = vmatpush1.bf16.msra.mxu0 %v3312
    %3378 = vmatprep.subr.bf16.mxu0 %v3317
    %3379 = vmatpush1.bf16.msra.mxu0 %v3316
    %3380 = vmatprep.subr.bf16.mxu0 %v3321
    %3381 = vmatpush1.bf16.msra.mxu0 %v3320
    %3382 = vmatprep.subr.bf16.mxu0 %v3325
    %3383 = vmatpush1.bf16.msra.mxu0 %v3324
    %3384 = vmatprep.subr.bf16.mxu0 %v3329
    %3385 = vmatpush1.bf16.msra.mxu0 %v3328
    %3386 = vmatprep.subr.bf16.mxu0 %v3333
    %3387 = vmatpush1.bf16.msra.mxu0 %v3332
    %3388 = vmatprep.subr.bf16.mxu0 %v3337
    %3389 = vmatpush1.bf16.msra.mxu0 %v3336
    %3390 = vmatprep.subr.bf16.mxu0 %v3341
    %3391 = vmatpush1.bf16.msra.mxu0 %v3340
    %3392 = vmatprep.subr.bf16.mxu0 0
    %3393 = vmatpush1.bf16.msra.mxu0 0
    %3394 = vmatprep.subr.bf16.mxu0 0
    %3395 = vmatpush1.bf16.msra.mxu0 0
    %3396 = vmatprep.subr.bf16.mxu0 0
    %3397 = vmatpush1.bf16.msra.mxu0 0
    %3398 = vmatprep.subr.bf16.mxu0 0
    %3399 = vmatpush1.bf16.msra.mxu0 0
    %3400 = vmatprep.subr.bf16.mxu0 0
    %3401 = vmatpush1.bf16.msra.mxu0 0
    %3402 = vmatprep.subr.bf16.mxu0 0
    %3403 = vmatpush1.bf16.msra.mxu0 0
    %3404 = vmatprep.subr.bf16.mxu0 0
    %3405 = vmatpush1.bf16.msra.mxu0 0
    %3406 = vmatprep.subr.bf16.mxu0 0
    %3407 = vmatpush1.bf16.msra.mxu0 0
    %3408 = vmatprep.mubr.bf16.mxu0 0
    %3409 = vmatmul.mubr.bf16.gmra.mrb[0].mxu0 %v3171
    %v3410 = vpop.f32.mrb[0].mxu0
    %v3411 = vadd.f32 0.0, %v3410
    %v3412 = vpop.f32.mrb[0].mxu0
    %v3413 = vadd.f32 0.0, %v3412
    %v3414 = vpop.f32.mrb[0].mxu0
    %v3415 = vpop.f32.mrb[0].mxu0
    %3416 = vdwg.mxu0
    %3417 = vmatprep.subr.bf16.mxu0 %v3315
    %3418 = vmatpush1.bf16.msra.mxu0 %v3314
    %3419 = vmatprep.subr.bf16.mxu0 %v3319
    %3420 = vmatpush1.bf16.msra.mxu0 %v3318
    %3421 = vmatprep.subr.bf16.mxu0 %v3323
    %3422 = vmatpush1.bf16.msra.mxu0 %v3322
    %3423 = vmatprep.subr.bf16.mxu0 %v3327
    %3424 = vmatpush1.bf16.msra.mxu0 %v3326
    %3425 = vmatprep.subr.bf16.mxu0 %v3331
    %3426 = vmatpush1.bf16.msra.mxu0 %v3330
    %3427 = vmatprep.subr.bf16.mxu0 %v3335
    %3428 = vmatpush1.bf16.msra.mxu0 %v3334
    %3429 = vmatprep.subr.bf16.mxu0 %v3339
    %3430 = vmatpush1.bf16.msra.mxu0 %v3338
    %3431 = vmatprep.subr.bf16.mxu0 %v3343
    %3432 = vmatpush1.bf16.msra.mxu0 %v3342
    %3433 = vmatprep.subr.bf16.mxu0 0
    %3434 = vmatpush1.bf16.msra.mxu0 0
    %3435 = vmatprep.subr.bf16.mxu0 0
    %3436 = vmatpush1.bf16.msra.mxu0 0
    %3437 = vmatprep.subr.bf16.mxu0 0
    %3438 = vmatpush1.bf16.msra.mxu0 0
    %3439 = vmatprep.subr.bf16.mxu0 0
    %3440 = vmatpush1.bf16.msra.mxu0 0
    %3441 = vmatprep.subr.bf16.mxu0 0
    %3442 = vmatpush1.bf16.msra.mxu0 0
    %3443 = vmatprep.subr.bf16.mxu0 0
    %3444 = vmatpush1.bf16.msra.mxu0 0
    %3445 = vmatprep.subr.bf16.mxu0 0
    %3446 = vmatpush1.bf16.msra.mxu0 0
    %3447 = vmatprep.subr.bf16.mxu0 0
    %3448 = vmatpush1.bf16.msra.mxu0 0
    %3449 = vmatprep.mubr.bf16.mxu0 0
    %3450 = vmatmul.mubr.bf16.gmra.mrb[0].mxu0 %v3171
    %v3451 = vpop.f32.mrb[0].mxu0
    %v3452 = vadd.f32 0.0, %v3451
    %v3453 = vpop.f32.mrb[0].mxu0
    %v3454 = vadd.f32 0.0, %v3453
    %v3455 = vpop.f32.mrb[0].mxu0
    %v3456 = vpop.f32.mrb[0].mxu0
    %3457 = vdwg.mxu0
    %v3466 = vunpack.c.l.b16 %v3176
    %v3467 = vunpack.c.h.b16 %v3176
    %v3468 = vunpack.c.l.b16 %v3177
    %v3469 = vunpack.c.h.b16 %v3177
    %v3470 = vunpack.c.l.b16 %v3178
    %v3471 = vunpack.c.h.b16 %v3178
    %v3472 = vunpack.c.l.b16 %v3179
    %v3473 = vunpack.c.h.b16 %v3179
    %v3474 = vunpack.c.l.b16 %v3180
    %v3475 = vunpack.c.h.b16 %v3180
    %v3476 = vunpack.c.l.b16 %v3181
    %v3477 = vunpack.c.h.b16 %v3181
    %v3478 = vunpack.c.l.b16 %v3182
    %v3479 = vunpack.c.h.b16 %v3182
    %v3480 = vunpack.c.l.b16 %v3183
    %v3481 = vunpack.c.h.b16 %v3183
    %v3482 = vpack.c.b16 %v3470, %v3466
    %v3483 = vpack.c.b16 %v3471, %v3467
    %v3484 = vpack.c.b16 %v3472, %v3468
    %v3485 = vpack.c.b16 %v3473, %v3469
    %v3486 = vpack.c.b16 %v3478, %v3474
    %v3487 = vpack.c.b16 %v3479, %v3475
    %v3488 = vpack.c.b16 %v3480, %v3476
    %v3489 = vpack.c.b16 %v3481, %v3477
    %v3499 = vsel %vm397, %v3175, 0
    %3501 = vmatprep.subr.bf16.mxu0 %v3483
    %3502 = vmatpush1.bf16.msra.mxu0 %v3482
    %3503 = vmatprep.subr.bf16.mxu0 %v3487
    %3504 = vmatpush1.bf16.msra.mxu0 %v3486
    %3505 = vmatprep.subr.bf16.mxu0 0
    %3506 = vmatpush1.bf16.msra.mxu0 0
    %3507 = vmatprep.subr.bf16.mxu0 0
    %3508 = vmatpush1.bf16.msra.mxu0 0
    %3509 = vmatprep.subr.bf16.mxu0 0
    %3510 = vmatpush1.bf16.msra.mxu0 0
    %3511 = vmatprep.subr.bf16.mxu0 0
    %3512 = vmatpush1.bf16.msra.mxu0 0
    %3513 = vmatprep.subr.bf16.mxu0 0
    %3514 = vmatpush1.bf16.msra.mxu0 0
    %3515 = vmatprep.subr.bf16.mxu0 0
    %3516 = vmatpush1.bf16.msra.mxu0 0
    %3517 = vmatprep.subr.bf16.mxu0 0
    %3518 = vmatpush1.bf16.msra.mxu0 0
    %3519 = vmatprep.subr.bf16.mxu0 0
    %3520 = vmatpush1.bf16.msra.mxu0 0
    %3521 = vmatprep.subr.bf16.mxu0 0
    %3522 = vmatpush1.bf16.msra.mxu0 0
    %3523 = vmatprep.subr.bf16.mxu0 0
    %3524 = vmatpush1.bf16.msra.mxu0 0
    %3525 = vmatprep.subr.bf16.mxu0 0
    %3526 = vmatpush1.bf16.msra.mxu0 0
    %3527 = vmatprep.subr.bf16.mxu0 0
    %3528 = vmatpush1.bf16.msra.mxu0 0
    %3529 = vmatprep.subr.bf16.mxu0 0
    %3530 = vmatpush1.bf16.msra.mxu0 0
    %3531 = vmatprep.subr.bf16.mxu0 0
    %3532 = vmatpush1.bf16.msra.mxu0 0
    %3533 = vmatprep.mubr.bf16.mxu0 0
    %3534 = vmatmul.mubr.bf16.gmra.mrb[0].mxu0 %v3499
    %v3535 = vpop.f32.mrb[0].mxu0
    %v3536 = vadd.f32 %v3411, %v3535
    %v3537 = vpop.f32.mrb[0].mxu0
    %v3538 = vadd.f32 %v3413, %v3537
    %v3539 = vpop.f32.mrb[0].mxu0
    %v3540 = vpop.f32.mrb[0].mxu0
    %3541 = vdwg.mxu0
    %3542 = vmatprep.subr.bf16.mxu0 %v3485
    %3543 = vmatpush1.bf16.msra.mxu0 %v3484
    %3544 = vmatprep.subr.bf16.mxu0 %v3489
    %3545 = vmatpush1.bf16.msra.mxu0 %v3488
    %3546 = vmatprep.subr.bf16.mxu0 0
    %3547 = vmatpush1.bf16.msra.mxu0 0
    %3548 = vmatprep.subr.bf16.mxu0 0
    %3549 = vmatpush1.bf16.msra.mxu0 0
    %3550 = vmatprep.subr.bf16.mxu0 0
    %3551 = vmatpush1.bf16.msra.mxu0 0
    %3552 = vmatprep.subr.bf16.mxu0 0
    %3553 = vmatpush1.bf16.msra.mxu0 0
    %3554 = vmatprep.subr.bf16.mxu0 0
    %3555 = vmatpush1.bf16.msra.mxu0 0
    %3556 = vmatprep.subr.bf16.mxu0 0
    %3557 = vmatpush1.bf16.msra.mxu0 0
    %3558 = vmatprep.subr.bf16.mxu0 0
    %3559 = vmatpush1.bf16.msra.mxu0 0
    %3560 = vmatprep.subr.bf16.mxu0 0
    %3561 = vmatpush1.bf16.msra.mxu0 0
    %3562 = vmatprep.subr.bf16.mxu0 0
    %3563 = vmatpush1.bf16.msra.mxu0 0
    %3564 = vmatprep.subr.bf16.mxu0 0
    %3565 = vmatpush1.bf16.msra.mxu0 0
    %3566 = vmatprep.subr.bf16.mxu0 0
    %3567 = vmatpush1.bf16.msra.mxu0 0
    %3568 = vmatprep.subr.bf16.mxu0 0
    %3569 = vmatpush1.bf16.msra.mxu0 0
    %3570 = vmatprep.subr.bf16.mxu0 0
    %3571 = vmatpush1.bf16.msra.mxu0 0
    %3572 = vmatprep.subr.bf16.mxu0 0
    %3573 = vmatpush1.bf16.msra.mxu0 0
    %3574 = vmatprep.mubr.bf16.mxu0 0
    %3575 = vmatmul.mubr.bf16.gmra.mrb[0].mxu0 %v3499
    %v3576 = vpop.f32.mrb[0].mxu0
    %v3577 = vadd.f32 %v3452, %v3576
    %v3578 = vpop.f32.mrb[0].mxu0
    %v3579 = vadd.f32 %v3454, %v3578
    %v3580 = vpop.f32.mrb[0].mxu0
    %v3581 = vpop.f32.mrb[0].mxu0
    %3582 = vdwg.mxu0
    %v3583 = vadd.f32 %v3536, %v487
    %v3584 = vadd.f32 %v3538, %v491
    %v3585 = vadd.f32 %v3577, %v495
    %v3586 = vadd.f32 %v3579, %v499
    %v3587 = vxor.u32 %v3583, 2147483648
    %v3588 = vmul.f32 %v3587, 1.442695
    %v3589 = vpow.pop %v3588
    %v3590 = vadd.f32 %v3589, 1.0
    %v3591 = vrcp.pop %v3590
    %v3592 = vmul.f32 1.0, %v3591
    %v3593 = vxor.u32 %v3584, 2147483648
    %v3594 = vmul.f32 %v3593, 1.442695
    %v3595 = vpow.pop %v3594
    %v3596 = vadd.f32 %v3595, 1.0
    %v3597 = vrcp.pop %v3596
    %v3598 = vmul.f32 1.0, %v3597
    %v3599 = vtanh.pop %v3585
    %v3600 = vxor.u32 %v3586, 2147483648
    %v3601 = vmul.f32 %v3600, 1.442695
    %v3602 = vpow.pop %v3601
    %v3603 = vadd.f32 %v3602, 1.0
    %v3604 = vrcp.pop %v3603
    %v3605 = vmul.f32 1.0, %v3604
    %v3606 = vmul.f32 %v3598, %v3168
    %v3607 = vmul.f32 %v3592, %v3599
    %v3608 = vadd.f32 %v3606, %v3607
    %v3609 = vtanh.pop %v3608
    %v3610 = vmul.f32 %v3605, %v3609
    %v3611 = vpack.c.bf16 %v3610, %v3610
    %s3612 = scalar_lea.vmem [#allocation10], 7
    %3613 = vst [vmem:[%s3612] sm:$0x1] %v3611
    %3614 = vst [vmem:[#allocation2] sm:$0x3] %v3610
    %3615 = vst [vmem:[#allocation3] sm:$0x3] %v3608
    // Predicated region
    $region34: #{tpu_custom_call.1} parent=1 // pred_check
      %p3616 = pneg %p64
    $region35: #{tpu_custom_call.1} parent=1 // pred_check_branch
      %3618 = sbr.rel (%p3616) target = $region37
    $region36: #{tpu_custom_call.1} parent=1 // pred_region
      %3619 = vst [vmem:[#allocation11] sm:$0x3] %v3610
      %3620 = vst [vmem:[#allocation13] sm:$0x3] %v3608
    $region37: #{tpu_custom_call.1} parent=1 // pred_fallthru
      _
    // Predicated region
    $region38: #{tpu_custom_call.1} parent=1 // pred_check
      _
    $region39: #{tpu_custom_call.1} parent=1 // pred_check_branch
      %3622 = sbr.rel (0) target = $region41
    $region40: #{tpu_custom_call.1} parent=1 // pred_region
      %s3624 = ssub.s32 128, 128
      %3625 = vsyncadd [#allocation6], %s3624
      %s3626 = sshll.u32 [#allocation10], 4
      %s3627 = int_to_ptr.vmem [resolvable:$true] %s3626
      %3632 = dma.vmem_to_hbm [thread:$0]  %s3627, 128, %s4, [#allocation6], 16, 16, 1
    $region41: #{tpu_custom_call.1} parent=1 // pred_fallthru
      _
    // Predicated region
    $region42: #{tpu_custom_call.1} parent=1 // pred_check
      _
    $region43: #{tpu_custom_call.1} parent=1 // pred_check_branch
      %3634 = sbr.rel (0) target = $region45
    $region44: #{tpu_custom_call.1} parent=1 // pred_region
      %s3636 = ssub.s32 32, 32
      %3637 = vsyncadd [#allocation12], %s3636
      %s3639 = sshll.u32 [#allocation11], 4
      %s3640 = int_to_ptr.vmem [resolvable:$true] %s3639
      %3642 = dma.vmem_to_hbm [thread:$0]  %s3640, 32, %s5, [#allocation12]
    $region45: #{tpu_custom_call.1} parent=1 // pred_fallthru
      _
    // Predicated region
    $region46: #{tpu_custom_call.1} parent=1 // pred_check
      _
    $region47: #{tpu_custom_call.1} parent=1 // pred_check_branch
      %3644 = sbr.rel (0) target = $region49
    $region48: #{tpu_custom_call.1} parent=1 // pred_region
      %s3646 = ssub.s32 32, 32
      %3647 = vsyncadd [#allocation12], %s3646
      %s3649 = sshll.u32 [#allocation13], 4
      %s3650 = int_to_ptr.vmem [resolvable:$true] %s3649
      %3652 = dma.vmem_to_hbm [thread:$0]  %s3650, 32, %s6, [#allocation12]
    $region49: #{tpu_custom_call.1} parent=1 // pred_fallthru
      _
    // Predicated region
    $region50: #{tpu_custom_call.1} parent=1 // pred_check
      _
    $region51: #{tpu_custom_call.1} parent=1 // pred_check_branch
      %3654 = sbr.rel (0) target = $region53
    $region52: #{tpu_custom_call.1} parent=1 // pred_region
      %3655 = dma.done [#allocation6], 128
    $region53: #{tpu_custom_call.1} parent=1 // pred_fallthru
      _
    // Predicated region
    $region54: #{tpu_custom_call.1} parent=1 // pred_check
      _
    $region55: #{tpu_custom_call.1} parent=1 // pred_check_branch
      %3657 = sbr.rel (0) target = $region57
    $region56: #{tpu_custom_call.1} parent=1 // pred_region
      %3658 = dma.done [#allocation12], 32
    $region57: #{tpu_custom_call.1} parent=1 // pred_fallthru
      _
    // Predicated region
    $region58: #{tpu_custom_call.1} parent=1 // pred_check
      _
    $region59: #{tpu_custom_call.1} parent=1 // pred_check_branch
      %3660 = sbr.rel (0) target = $region61
    $region60: #{tpu_custom_call.1} parent=1 // pred_region
      %3661 = dma.done [#allocation12], 32
    $region61: #{tpu_custom_call.1} parent=1 // pred_fallthru
      _
    %3662 = vsyncpa [#allocation5], 1
    %3663 = vsyncpa [#allocation8], 1
    %3664 = vsyncpa [#allocation6], 1
    %3665 = vsyncpa [#allocation12], 1

</llo_original>
